<compile_context>
chip_gen: v7x
topology: tpu7x:2x2x1
jax: 0.10.0
libtpu: 0.0.40
codegen_flags: <defaults>
</compile_context>

<pallas_src>
import math

import jax
import jax.numpy as jnp
from jax import lax
from jax.experimental import pallas as pl
from jax.experimental.pallas import tpu as pltpu


def _round_up(x, m):
    return ((x + m - 1) // m) * m


def _make_lstm_recurrence_kernel(seq_len, seq_len_padded):
    """Builds the recurrence kernel for one (batch_block, time_block) grid cell.

    Refs:
      xp_ref : (TT, BB, 4*Hp) f32   precomputed x @ W_ih^T + b_ih + b_hh
      whh_ref: (Hp, 4*Hp)     bf16  recurrent weights (resident, single buffer)
      y_ref  : (TT, BB, Hp)   f32   per-step hidden outputs
      hn_ref : (1, BB, Hp)    f32   resident h carry / final h
      cn_ref : (1, BB, Hp)    f32   resident c carry / final c
    """
    needs_tail_guard = seq_len_padded != seq_len

    def kernel(xp_ref, whh_ref, y_ref, hn_ref, cn_ref):
        tt = xp_ref.shape[0]        # timesteps per grid step (static)
        hp = whh_ref.shape[0]       # padded hidden size (static)
        t_blk = pl.program_id(1)    # time-block index (last / "arbitrary" axis)

        @pl.when(t_blk == 0)
        def _():
            # hx is None in the module's forward -> zero initial state.
            hn_ref[...] = jnp.zeros_like(hn_ref)
            cn_ref[...] = jnp.zeros_like(cn_ref)

        def step(s, carry):
            del carry
            h_prev = hn_ref[0]                       # (BB, Hp) f32
            c_prev = cn_ref[0]                       # (BB, Hp) f32
            # Only the recurrent matmul sits on the serial critical path:
            # bf16 operands, f32 accumulation on the MXU.
            gates = xp_ref[s] + jnp.dot(
                h_prev.astype(whh_ref.dtype), whh_ref[...],
                preferred_element_type=jnp.float32)  # (BB, 4*Hp)
            # Gate slices land on 128-lane boundaries (Hp is a multiple of 128).
            i_g = jax.nn.sigmoid(gates[:, 0 * hp:1 * hp])
            f_g = jax.nn.sigmoid(gates[:, 1 * hp:2 * hp])
            g_g = jnp.tanh(gates[:, 2 * hp:3 * hp])
            o_g = jax.nn.sigmoid(gates[:, 3 * hp:4 * hp])
            c_new = f_g * c_prev + i_g * g_g
            h_new = o_g * jnp.tanh(c_new)
            if needs_tail_guard:
                # Padded timesteps (t >= T) must not advance the state so that
                # h_n / c_n reflect the true last timestep.
                valid = (t_blk * tt + s) < seq_len
                c_new = jnp.where(valid, c_new, c_prev)
                h_new = jnp.where(valid, h_new, h_prev)
            cn_ref[0] = c_new
            hn_ref[0] = h_new
            y_ref[s] = h_new
            return 0

        lax.fori_loop(0, tt, step, 0, unroll=True)

    return kernel


def lstm_layer_pallas(x, w_ih, w_hh, b_ih, b_hh, *,
                      time_block=8, batch_block=None,
                      matmul_dtype=jnp.bfloat16):
    """One unidirectional LSTM layer (zero initial state).

    x    : (T, B, I) float32
    w_ih : (4H, I), w_hh : (4H, H), b_ih / b_hh : (4H,)   -- PyTorch shapes.
    matmul_dtype: dtype used for MXU matmuls (f32 accumulation either way);
                  jnp.float32 reproduces exact f32 semantics, bfloat16 is fast.
    Returns y (T, B, H), h_n (1, B, H), c_n (1, B, H), all float32.
    """
    T, B, I = x.shape
    four_h, H = w_hh.shape
    assert four_h == 4 * H and w_ih.shape == (4 * H, I)
    assert T >= 1

    f32 = jnp.float32

    # Lane/sublane-aligned padded sizes (H padded per gate).
    Hp = _round_up(H, 128)
    G = 4 * Hp
    Bp = _round_up(B, 8)
    TT = max(1, min(time_block, T))
    Tp = _round_up(T, TT)
    if batch_block is None:
        BB = Bp
    else:
        BB = _round_up(min(batch_block, Bp), 8)
        Bp = _round_up(Bp, BB)
    NB = Bp // BB
    NT = Tp // TT

    # Pad weights per gate so each gate slice lands on a 128-lane boundary and
    # pre-transpose so the kernel / projection do row-major MXU matmuls.
    w_ih4 = jnp.zeros((4, Hp, I), f32).at[:, :H, :].set(
        w_ih.astype(f32).reshape(4, H, I))
    w_hh4 = jnp.zeros((4, Hp, Hp), f32).at[:, :H, :H].set(
        w_hh.astype(f32).reshape(4, H, H))
    wih_t = w_ih4.reshape(G, I).T                          # (I, 4Hp)
    whh_t = w_hh4.reshape(G, Hp).T.astype(matmul_dtype)    # (Hp, 4Hp)
    bias = jnp.zeros((4, Hp), f32).at[:, :H].set(
        (b_ih + b_hh).astype(f32).reshape(4, H)).reshape(1, G)

    # Hoisted input projection: one big (Tp*Bp, I) @ (I, 4Hp) MXU matmul with
    # f32 accumulation, bias folded in.  Independent of t, so it never sits on
    # the serial critical path of the recurrence.
    x_pad = jnp.zeros((Tp, Bp, I), f32).at[:T, :B, :].set(x.astype(f32))
    x_proj = (jnp.dot(x_pad.reshape(Tp * Bp, I).astype(matmul_dtype),
                      wih_t.astype(matmul_dtype),
                      preferred_element_type=f32) + bias).reshape(Tp, Bp, G)

    kernel = _make_lstm_recurrence_kernel(T, Tp)

    # Rough VMEM budget: resident weights + double-buffered x_proj / y chunks
    # + resident carries.  Capped low enough to stay valid on v7x (64 MiB/TC).
    w_item = jnp.dtype(matmul_dtype).itemsize
    needed = (2 * Hp * G * w_item          # W_hh^T (worst case 2 buffers)
              + 2 * TT * BB * G * 4        # x_proj chunks (double-buffered)
              + 2 * TT * BB * Hp * 4       # y chunks (double-buffered)
              + 2 * BB * Hp * 4)           # h/c carries
    vmem_limit = int(min(max(2 * needed, 32 * 1024 * 1024), 96 * 1024 * 1024))

    def build(single_buffered_weights):
        if single_buffered_weights:
            # Constant index map -> keep a single VMEM copy of W_hh^T.
            w_spec = pl.BlockSpec((Hp, G), lambda b, t: (0, 0),
                                  pipeline_mode=pl.Buffered(1))
        else:
            w_spec = pl.BlockSpec((Hp, G), lambda b, t: (0, 0))
        return pl.pallas_call(
            kernel,
            out_shape=(
                jax.ShapeDtypeStruct((Tp, Bp, Hp), f32),
                jax.ShapeDtypeStruct((1, Bp, Hp), f32),
                jax.ShapeDtypeStruct((1, Bp, Hp), f32),
            ),
            grid_spec=pltpu.PrefetchScalarGridSpec(
                num_scalar_prefetch=0,
                grid=(NB, NT),                       # time (serial) axis last
                in_specs=[
                    pl.BlockSpec((TT, BB, G), lambda b, t: (t, b, 0)),  # x_proj
                    w_spec,                                             # W_hh^T
                ],
                out_specs=[
                    pl.BlockSpec((TT, BB, Hp), lambda b, t: (t, b, 0)),  # y
                    pl.BlockSpec((1, BB, Hp), lambda b, t: (0, b, 0)),   # h_n
                    pl.BlockSpec((1, BB, Hp), lambda b, t: (0, b, 0)),   # c_n
                ],
            ),
            compiler_params=pltpu.CompilerParams(
                dimension_semantics=("parallel", "arbitrary"),
                vmem_limit_bytes=vmem_limit),
        )(x_proj, whh_t)

    try:
        y, h_n, c_n = build(single_buffered_weights=True)
    except Exception:
        # Graceful degradation if this Pallas build rejects single-buffer
        # pipeline_mode: fall back to the default (double-buffered) weight spec.
        y, h_n, c_n = build(single_buffered_weights=False)

    return y[:T, :B, :H], h_n[:, :B, :H], c_n[:, :B, :H]


def lstm_forward(x, params, *, time_block=8, batch_block=None,
                 matmul_dtype=jnp.bfloat16):
    """Multi-layer unidirectional LSTM (batch_first=False, bias=True, hx=None).

    params: list of (w_ih, w_hh, b_ih, b_hh) per layer (PyTorch shapes).
    Returns (output, (h_n, c_n)) matching torch.nn.LSTM.forward with hx=None.
    """
    h_list, c_list = [], []
    layer_in = x
    for (w_ih, w_hh, b_ih, b_hh) in params:
        y, h_n, c_n = lstm_layer_pallas(
            layer_in, w_ih, w_hh, b_ih, b_hh,
            time_block=time_block, batch_block=batch_block,
            matmul_dtype=matmul_dtype)
        h_list.append(h_n)
        c_list.append(c_n)
        layer_in = y
    return layer_in, (jnp.concatenate(h_list, axis=0),
                      jnp.concatenate(c_list, axis=0))


def _lstm_reference(x, params, matmul_dtype=jnp.float32):
    """Pure-JAX reference.  matmul_dtype=float32 reproduces the PyTorch f32
    semantics; matmul_dtype=bfloat16 mirrors the kernel's precision policy
    (bf16 matmul operands, f32 accumulation / gates / state)."""
    T, B, _ = x.shape
    layer_in = x.astype(jnp.float32)
    h_outs, c_outs = [], []
    for (w_ih, w_hh, b_ih, b_hh) in params:
        H = w_hh.shape[1]
        I = w_ih.shape[1]
        bias = (b_ih + b_hh).astype(jnp.float32)
        x_proj = (jnp.dot(layer_in.reshape(T * B, I).astype(matmul_dtype),
                          w_ih.T.astype(matmul_dtype),
                          preferred_element_type=jnp.float32)
                  + bias).reshape(T, B, 4 * H)
        whh_t = w_hh.T.astype(matmul_dtype)
        h = jnp.zeros((B, H), jnp.float32)
        c = jnp.zeros((B, H), jnp.float32)
        ys = []
        for t in range(T):
            g = x_proj[t] + jnp.dot(h.astype(matmul_dtype), whh_t,
                                    preferred_element_type=jnp.float32)
            i = jax.nn.sigmoid(g[:, 0 * H:1 * H])
            f = jax.nn.sigmoid(g[:, 1 * H:2 * H])
            gg = jnp.tanh(g[:, 2 * H:3 * H])
            o = jax.nn.sigmoid(g[:, 3 * H:4 * H])
            c = f * c + i * gg
            h = o * jnp.tanh(c)
            ys.append(h)
        layer_in = jnp.stack(ys, axis=0)
        h_outs.append(h[None])
        c_outs.append(c[None])
    return layer_in, (jnp.concatenate(h_outs, 0), jnp.concatenate(c_outs, 0))


if __name__ == "__main__":
    # Small shapes consistent with the module (batch_first=False):
    T, B = 10, 4
    input_size, hidden_size, num_layers = 16, 32, 2

    key = jax.random.PRNGKey(0)
    std = 1.0 / math.sqrt(hidden_size)
    params = []
    layer_in_size = input_size
    for _ in range(num_layers):
        key, k1, k2, k3, k4 = jax.random.split(key, 5)
        w_ih = jax.random.uniform(k1, (4 * hidden_size, layer_in_size),
                                  jnp.float32, -std, std)
        w_hh = jax.random.uniform(k2, (4 * hidden_size, hidden_size),
                                  jnp.float32, -std, std)
        b_ih = jax.random.uniform(k3, (4 * hidden_size,), jnp.float32, -std, std)
        b_hh = jax.random.uniform(k4, (4 * hidden_size,), jnp.float32, -std, std)
        params.append((w_ih, w_hh, b_ih, b_hh))
        layer_in_size = hidden_size

    key, kx = jax.random.split(key)
    x = jax.random.normal(kx, (T, B, input_size), jnp.float32)

    # time_block=4 exercises multiple sequential grid steps + the T-padding
    # guard (T=10 -> padded to 12).
    out, (h_n, c_n) = lstm_forward(x, params, time_block=4)
    jax.block_until_ready((out, h_n, c_n))

    assert out.shape == (T, B, hidden_size)
    assert h_n.shape == (num_layers, B, hidden_size)
    assert c_n.shape == (num_layers, B, hidden_size)

    # 1) Tight check against a reference that mirrors the kernel's precision
    #    policy (bf16 matmul operands, f32 accumulation).
    ref_out, (ref_h, ref_c) = _lstm_reference(x, params,
                                              matmul_dtype=jnp.bfloat16)
    assert jnp.allclose(out, ref_out, atol=1e-2, rtol=1e-2)
    assert jnp.allclose(h_n, ref_h, atol=1e-2, rtol=1e-2)
    assert jnp.allclose(c_n, ref_c, atol=1e-2, rtol=1e-2)

    # 2) Looser check against the full-f32 (PyTorch-semantics) reference:
    #    agreement up to the bf16 weight/activation quantization error.
    f32_out, (f32_h, f32_c) = _lstm_reference(x, params,
                                              matmul_dtype=jnp.float32)
    assert jnp.allclose(out, f32_out, atol=1e-1, rtol=1e-1)
    assert jnp.allclose(h_n, f32_h, atol=1e-1, rtol=1e-1)
    assert jnp.allclose(c_n, f32_c, atol=1e-1, rtol=1e-1)

    print("KERNEL_OK")
</pallas_src>

<mosaic_0001>
module attributes {stable_mosaic.version = 11 : i64} {
  func.func @kernel(%arg0: i32, %arg1: i32, %arg2: memref<4x8x512xf32, #tpu.memory_space<vmem>>, %arg3: memref<128x512xbf16, #tpu.memory_space<vmem>>, %arg4: memref<4x8x128xf32, #tpu.memory_space<vmem>>, %arg5: memref<1x8x128xf32, #tpu.memory_space<vmem>>, %arg6: memref<1x8x128xf32, #tpu.memory_space<vmem>>) attributes {dimension_semantics = [#tpu.dimension_semantics<parallel>, #tpu.dimension_semantics<arbitrary>], iteration_bounds = array<i64: 1, 3>, scalar_prefetch = 0 : i64, scratch_operands = 0 : i64, tpu.core_type = #tpu.core_type<tc>, window_params = [{transform_indices = @transform_0, window_bounds = array<i64: 4, 8, 512>}, {pipeline_mode = #tpu.pipeline_mode<synchronous>, transform_indices = @transform_1, window_bounds = array<i64: 128, 512>}, {transform_indices = @transform_2, window_bounds = array<i64: 4, 8, 128>}, {transform_indices = @transform_3, window_bounds = array<i64: 1, 8, 128>}, {transform_indices = @transform_4, window_bounds = array<i64: 1, 8, 128>}]} {
    %c0_i32 = arith.constant 0 : i32
    %0 = arith.cmpi eq, %arg1, %c0_i32 : i32
    %1 = arith.extui %0 : i1 to i32
    %c0_i32_0 = arith.constant 0 : i32
    %2 = arith.cmpi ne, %1, %c0_i32_0 : i32
    scf.if %2 {
      %cst_95 = arith.constant 0.000000e+00 : f32
      %207 = vector.broadcast %cst_95 : f32 to vector<1x8x128xf32>
      %c0_96 = arith.constant 0 : index
      %c0_97 = arith.constant 0 : index
      %c0_98 = arith.constant 0 : index
      %208 = vector.load %arg5[%c0_96, %c0_97, %c0_98] : memref<1x8x128xf32, #tpu.memory_space<vmem>>, vector<1x8x128xf32>
      tpu.vector_store %arg5[%c0_96, %c0_97, %c0_98], %207 {strides = array<i32>} : memref<1x8x128xf32, #tpu.memory_space<vmem>>, vector<1x8x128xf32>,
      %cst_99 = arith.constant 0.000000e+00 : f32
      %209 = vector.broadcast %cst_99 : f32 to vector<1x8x128xf32>
      %c0_100 = arith.constant 0 : index
      %c0_101 = arith.constant 0 : index
      %c0_102 = arith.constant 0 : index
      %210 = vector.load %arg6[%c0_100, %c0_101, %c0_102] : memref<1x8x128xf32, #tpu.memory_space<vmem>>, vector<1x8x128xf32>
      tpu.vector_store %arg6[%c0_100, %c0_101, %c0_102], %209 {strides = array<i32>} : memref<1x8x128xf32, #tpu.memory_space<vmem>>, vector<1x8x128xf32>,
    } else {
    }
    %c0_i32_1 = arith.constant 0 : i32
    %c0 = arith.constant 0 : index
    %c0_2 = arith.constant 0 : index
    %c0_3 = arith.constant 0 : index
    %3 = vector.load %arg5[%c0, %c0_2, %c0_3] : memref<1x8x128xf32, #tpu.memory_space<vmem>>, vector<1x8x128xf32>
    %4 = vector.shape_cast %3 : vector<1x8x128xf32> to vector<8x128xf32>
    %c0_4 = arith.constant 0 : index
    %c0_5 = arith.constant 0 : index
    %c0_6 = arith.constant 0 : index
    %5 = vector.load %arg6[%c0_4, %c0_5, %c0_6] : memref<1x8x128xf32, #tpu.memory_space<vmem>>, vector<1x8x128xf32>
    %6 = vector.shape_cast %5 : vector<1x8x128xf32> to vector<8x128xf32>
    %7 = arith.index_cast %c0_i32_1 : i32 to index
    %c0_7 = arith.constant 0 : index
    %c0_8 = arith.constant 0 : index
    %8 = vector.load %arg2[%7, %c0_7, %c0_8] : memref<4x8x512xf32, #tpu.memory_space<vmem>>, vector<1x8x512xf32>
    %9 = vector.shape_cast %8 : vector<1x8x512xf32> to vector<8x512xf32>
    %10 = arith.truncf %4 : vector<8x128xf32> to vector<8x128xbf16>
    %c0_9 = arith.constant 0 : index
    %c0_10 = arith.constant 0 : index
    %11 = vector.load %arg3[%c0_9, %c0_10] : memref<128x512xbf16, #tpu.memory_space<vmem>>, vector<128x512xbf16>
    %cst = arith.constant dense<0.000000e+00> : vector<8x512xf32>
    %12 = tpu.matmul %10, %11, %cst {dimension_numbers = #tpu.dot_dimension_numbers<[1], [0], [0], [1], [0, 0, 1, 1], [], []>} : vector<8x128xbf16>, vector<128x512xbf16>, vector<8x512xf32> -> vector<8x512xf32>
    %13 = arith.addf %9, %12 : vector<8x512xf32>
    %14 = vector.extract_strided_slice %13 {offsets = [0, 0], sizes = [8, 128], strides = [1, 1]} : vector<8x512xf32> to vector<8x128xf32>
    %15 = arith.negf %14 : vector<8x128xf32>
    %16 = math.exp %15 : vector<8x128xf32>
    %cst_11 = arith.constant 1.000000e+00 : f32
    %17 = vector.broadcast %cst_11 : f32 to vector<8x128xf32>
    %18 = arith.addf %17, %16 : vector<8x128xf32>
    %19 = arith.divf %17, %18 : vector<8x128xf32>
    %20 = vector.extract_strided_slice %13 {offsets = [0, 128], sizes = [8, 128], strides = [1, 1]} : vector<8x512xf32> to vector<8x128xf32>
    %21 = arith.negf %20 : vector<8x128xf32>
    %22 = math.exp %21 : vector<8x128xf32>
    %cst_12 = arith.constant 1.000000e+00 : f32
    %23 = vector.broadcast %cst_12 : f32 to vector<8x128xf32>
    %24 = arith.addf %23, %22 : vector<8x128xf32>
    %25 = arith.divf %23, %24 : vector<8x128xf32>
    %26 = vector.extract_strided_slice %13 {offsets = [0, 256], sizes = [8, 128], strides = [1, 1]} : vector<8x512xf32> to vector<8x128xf32>
    %27 = math.tanh %26 : vector<8x128xf32>
    %28 = vector.extract_strided_slice %13 {offsets = [0, 384], sizes = [8, 128], strides = [1, 1]} : vector<8x512xf32> to vector<8x128xf32>
    %29 = arith.negf %28 : vector<8x128xf32>
    %30 = math.exp %29 : vector<8x128xf32>
    %cst_13 = arith.constant 1.000000e+00 : f32
    %31 = vector.broadcast %cst_13 : f32 to vector<8x128xf32>
    %32 = arith.addf %31, %30 : vector<8x128xf32>
    %33 = arith.divf %31, %32 : vector<8x128xf32>
    %34 = arith.mulf %25, %6 : vector<8x128xf32>
    %35 = arith.mulf %19, %27 : vector<8x128xf32>
    %36 = arith.addf %34, %35 : vector<8x128xf32>
    %37 = math.tanh %36 : vector<8x128xf32>
    %38 = arith.mulf %33, %37 : vector<8x128xf32>
    %c4_i32 = arith.constant 4 : i32
    %39 = arith.muli %arg1, %c4_i32 : i32
    %40 = arith.addi %39, %c0_i32_1 : i32
    %c10_i32 = arith.constant 10 : i32
    %41 = arith.cmpi slt, %40, %c10_i32 : i32
    %42 = arith.select %41, %36, %6 : vector<8x128xf32>
    %43 = arith.select %41, %38, %4 : vector<8x128xf32>
    %c0_14 = arith.constant 0 : index
    %c0_15 = arith.constant 0 : index
    %c0_16 = arith.constant 0 : index
    %44 = vector.load %arg6[%c0_14, %c0_15, %c0_16] : memref<1x8x128xf32, #tpu.memory_space<vmem>>, vector<1x8x128xf32>
    %45 = vector.shape_cast %44 : vector<1x8x128xf32> to vector<8x128xf32>
    %46 = vector.shape_cast %42 : vector<8x128xf32> to vector<1x8x128xf32>
    tpu.vector_store %arg6[%c0_14, %c0_15, %c0_16], %46 {strides = array<i32>} : memref<1x8x128xf32, #tpu.memory_space<vmem>>, vector<1x8x128xf32>,
    %c0_17 = arith.constant 0 : index
    %c0_18 = arith.constant 0 : index
    %c0_19 = arith.constant 0 : index
    %47 = vector.load %arg5[%c0_17, %c0_18, %c0_19] : memref<1x8x128xf32, #tpu.memory_space<vmem>>, vector<1x8x128xf32>
    %48 = vector.shape_cast %47 : vector<1x8x128xf32> to vector<8x128xf32>
    %49 = vector.shape_cast %43 : vector<8x128xf32> to vector<1x8x128xf32>
    tpu.vector_store %arg5[%c0_17, %c0_18, %c0_19], %49 {strides = array<i32>} : memref<1x8x128xf32, #tpu.memory_space<vmem>>, vector<1x8x128xf32>,
    %50 = arith.index_cast %c0_i32_1 : i32 to index
    %c0_20 = arith.constant 0 : index
    %c0_21 = arith.constant 0 : index
    %51 = vector.load %arg4[%50, %c0_20, %c0_21] : memref<4x8x128xf32, #tpu.memory_space<vmem>>, vector<1x8x128xf32>
    %52 = vector.shape_cast %51 : vector<1x8x128xf32> to vector<8x128xf32>
    %53 = vector.shape_cast %43 : vector<8x128xf32> to vector<1x8x128xf32>
    tpu.vector_store %arg4[%50, %c0_20, %c0_21], %53 {strides = array<i32>} : memref<4x8x128xf32, #tpu.memory_space<vmem>>, vector<1x8x128xf32>,
    %c1_i32 = arith.constant 1 : i32
    %c0_22 = arith.constant 0 : index
    %c0_23 = arith.constant 0 : index
    %c0_24 = arith.constant 0 : index
    %54 = vector.load %arg5[%c0_22, %c0_23, %c0_24] : memref<1x8x128xf32, #tpu.memory_space<vmem>>, vector<1x8x128xf32>
    %55 = vector.shape_cast %54 : vector<1x8x128xf32> to vector<8x128xf32>
    %c0_25 = arith.constant 0 : index
    %c0_26 = arith.constant 0 : index
    %c0_27 = arith.constant 0 : index
    %56 = vector.load %arg6[%c0_25, %c0_26, %c0_27] : memref<1x8x128xf32, #tpu.memory_space<vmem>>, vector<1x8x128xf32>
    %57 = vector.shape_cast %56 : vector<1x8x128xf32> to vector<8x128xf32>
    %58 = arith.index_cast %c1_i32 : i32 to index
    %c0_28 = arith.constant 0 : index
    %c0_29 = arith.constant 0 : index
    %59 = vector.load %arg2[%58, %c0_28, %c0_29] : memref<4x8x512xf32, #tpu.memory_space<vmem>>, vector<1x8x512xf32>
    %60 = vector.shape_cast %59 : vector<1x8x512xf32> to vector<8x512xf32>
    %61 = arith.truncf %55 : vector<8x128xf32> to vector<8x128xbf16>
    %c0_30 = arith.constant 0 : index
    %c0_31 = arith.constant 0 : index
    %62 = vector.load %arg3[%c0_30, %c0_31] : memref<128x512xbf16, #tpu.memory_space<vmem>>, vector<128x512xbf16>
    %cst_32 = arith.constant dense<0.000000e+00> : vector<8x512xf32>
    %63 = tpu.matmul %61, %62, %cst_32 {dimension_numbers = #tpu.dot_dimension_numbers<[1], [0], [0], [1], [0, 0, 1, 1], [], []>} : vector<8x128xbf16>, vector<128x512xbf16>, vector<8x512xf32> -> vector<8x512xf32>
    %64 = arith.addf %60, %63 : vector<8x512xf32>
    %65 = vector.extract_strided_slice %64 {offsets = [0, 0], sizes = [8, 128], strides = [1, 1]} : vector<8x512xf32> to vector<8x128xf32>
    %66 = arith.negf %65 : vector<8x128xf32>
    %67 = math.exp %66 : vector<8x128xf32>
    %cst_33 = arith.constant 1.000000e+00 : f32
    %68 = vector.broadcast %cst_33 : f32 to vector<8x128xf32>
    %69 = arith.addf %68, %67 : vector<8x128xf32>
    %70 = arith.divf %68, %69 : vector<8x128xf32>
    %71 = vector.extract_strided_slice %64 {offsets = [0, 128], sizes = [8, 128], strides = [1, 1]} : vector<8x512xf32> to vector<8x128xf32>
    %72 = arith.negf %71 : vector<8x128xf32>
    %73 = math.exp %72 : vector<8x128xf32>
    %cst_34 = arith.constant 1.000000e+00 : f32
    %74 = vector.broadcast %cst_34 : f32 to vector<8x128xf32>
    %75 = arith.addf %74, %73 : vector<8x128xf32>
    %76 = arith.divf %74, %75 : vector<8x128xf32>
    %77 = vector.extract_strided_slice %64 {offsets = [0, 256], sizes = [8, 128], strides = [1, 1]} : vector<8x512xf32> to vector<8x128xf32>
    %78 = math.tanh %77 : vector<8x128xf32>
    %79 = vector.extract_strided_slice %64 {offsets = [0, 384], sizes = [8, 128], strides = [1, 1]} : vector<8x512xf32> to vector<8x128xf32>
    %80 = arith.negf %79 : vector<8x128xf32>
    %81 = math.exp %80 : vector<8x128xf32>
    %cst_35 = arith.constant 1.000000e+00 : f32
    %82 = vector.broadcast %cst_35 : f32 to vector<8x128xf32>
    %83 = arith.addf %82, %81 : vector<8x128xf32>
    %84 = arith.divf %82, %83 : vector<8x128xf32>
    %85 = arith.mulf %76, %57 : vector<8x128xf32>
    %86 = arith.mulf %70, %78 : vector<8x128xf32>
    %87 = arith.addf %85, %86 : vector<8x128xf32>
    %88 = math.tanh %87 : vector<8x128xf32>
    %89 = arith.mulf %84, %88 : vector<8x128xf32>
    %c4_i32_36 = arith.constant 4 : i32
    %90 = arith.muli %arg1, %c4_i32_36 : i32
    %91 = arith.addi %90, %c1_i32 : i32
    %c10_i32_37 = arith.constant 10 : i32
    %92 = arith.cmpi slt, %91, %c10_i32_37 : i32
    %93 = arith.select %92, %87, %57 : vector<8x128xf32>
    %94 = arith.select %92, %89, %55 : vector<8x128xf32>
    %c0_38 = arith.constant 0 : index
    %c0_39 = arith.constant 0 : index
    %c0_40 = arith.constant 0 : index
    %95 = vector.load %arg6[%c0_38, %c0_39, %c0_40] : memref<1x8x128xf32, #tpu.memory_space<vmem>>, vector<1x8x128xf32>
    %96 = vector.shape_cast %95 : vector<1x8x128xf32> to vector<8x128xf32>
    %97 = vector.shape_cast %93 : vector<8x128xf32> to vector<1x8x128xf32>
    tpu.vector_store %arg6[%c0_38, %c0_39, %c0_40], %97 {strides = array<i32>} : memref<1x8x128xf32, #tpu.memory_space<vmem>>, vector<1x8x128xf32>,
    %c0_41 = arith.constant 0 : index
    %c0_42 = arith.constant 0 : index
    %c0_43 = arith.constant 0 : index
    %98 = vector.load %arg5[%c0_41, %c0_42, %c0_43] : memref<1x8x128xf32, #tpu.memory_space<vmem>>, vector<1x8x128xf32>
    %99 = vector.shape_cast %98 : vector<1x8x128xf32> to vector<8x128xf32>
    %100 = vector.shape_cast %94 : vector<8x128xf32> to vector<1x8x128xf32>
    tpu.vector_store %arg5[%c0_41, %c0_42, %c0_43], %100 {strides = array<i32>} : memref<1x8x128xf32, #tpu.memory_space<vmem>>, vector<1x8x128xf32>,
    %101 = arith.index_cast %c1_i32 : i32 to index
    %c0_44 = arith.constant 0 : index
    %c0_45 = arith.constant 0 : index
    %102 = vector.load %arg4[%101, %c0_44, %c0_45] : memref<4x8x128xf32, #tpu.memory_space<vmem>>, vector<1x8x128xf32>
    %103 = vector.shape_cast %102 : vector<1x8x128xf32> to vector<8x128xf32>
    %104 = vector.shape_cast %94 : vector<8x128xf32> to vector<1x8x128xf32>
    tpu.vector_store %arg4[%101, %c0_44, %c0_45], %104 {strides = array<i32>} : memref<4x8x128xf32, #tpu.memory_space<vmem>>, vector<1x8x128xf32>,
    %c2_i32 = arith.constant 2 : i32
    %c0_46 = arith.constant 0 : index
    %c0_47 = arith.constant 0 : index
    %c0_48 = arith.constant 0 : index
    %105 = vector.load %arg5[%c0_46, %c0_47, %c0_48] : memref<1x8x128xf32, #tpu.memory_space<vmem>>, vector<1x8x128xf32>
    %106 = vector.shape_cast %105 : vector<1x8x128xf32> to vector<8x128xf32>
    %c0_49 = arith.constant 0 : index
    %c0_50 = arith.constant 0 : index
    %c0_51 = arith.constant 0 : index
    %107 = vector.load %arg6[%c0_49, %c0_50, %c0_51] : memref<1x8x128xf32, #tpu.memory_space<vmem>>, vector<1x8x128xf32>
    %108 = vector.shape_cast %107 : vector<1x8x128xf32> to vector<8x128xf32>
    %109 = arith.index_cast %c2_i32 : i32 to index
    %c0_52 = arith.constant 0 : index
    %c0_53 = arith.constant 0 : index
    %110 = vector.load %arg2[%109, %c0_52, %c0_53] : memref<4x8x512xf32, #tpu.memory_space<vmem>>, vector<1x8x512xf32>
    %111 = vector.shape_cast %110 : vector<1x8x512xf32> to vector<8x512xf32>
    %112 = arith.truncf %106 : vector<8x128xf32> to vector<8x128xbf16>
    %c0_54 = arith.constant 0 : index
    %c0_55 = arith.constant 0 : index
    %113 = vector.load %arg3[%c0_54, %c0_55] : memref<128x512xbf16, #tpu.memory_space<vmem>>, vector<128x512xbf16>
    %cst_56 = arith.constant dense<0.000000e+00> : vector<8x512xf32>
    %114 = tpu.matmul %112, %113, %cst_56 {dimension_numbers = #tpu.dot_dimension_numbers<[1], [0], [0], [1], [0, 0, 1, 1], [], []>} : vector<8x128xbf16>, vector<128x512xbf16>, vector<8x512xf32> -> vector<8x512xf32>
    %115 = arith.addf %111, %114 : vector<8x512xf32>
    %116 = vector.extract_strided_slice %115 {offsets = [0, 0], sizes = [8, 128], strides = [1, 1]} : vector<8x512xf32> to vector<8x128xf32>
    %117 = arith.negf %116 : vector<8x128xf32>
    %118 = math.exp %117 : vector<8x128xf32>
    %cst_57 = arith.constant 1.000000e+00 : f32
    %119 = vector.broadcast %cst_57 : f32 to vector<8x128xf32>
    %120 = arith.addf %119, %118 : vector<8x128xf32>
    %121 = arith.divf %119, %120 : vector<8x128xf32>
    %122 = vector.extract_strided_slice %115 {offsets = [0, 128], sizes = [8, 128], strides = [1, 1]} : vector<8x512xf32> to vector<8x128xf32>
    %123 = arith.negf %122 : vector<8x128xf32>
    %124 = math.exp %123 : vector<8x128xf32>
    %cst_58 = arith.constant 1.000000e+00 : f32
    %125 = vector.broadcast %cst_58 : f32 to vector<8x128xf32>
    %126 = arith.addf %125, %124 : vector<8x128xf32>
    %127 = arith.divf %125, %126 : vector<8x128xf32>
    %128 = vector.extract_strided_slice %115 {offsets = [0, 256], sizes = [8, 128], strides = [1, 1]} : vector<8x512xf32> to vector<8x128xf32>
    %129 = math.tanh %128 : vector<8x128xf32>
    %130 = vector.extract_strided_slice %115 {offsets = [0, 384], sizes = [8, 128], strides = [1, 1]} : vector<8x512xf32> to vector<8x128xf32>
    %131 = arith.negf %130 : vector<8x128xf32>
    %132 = math.exp %131 : vector<8x128xf32>
    %cst_59 = arith.constant 1.000000e+00 : f32
    %133 = vector.broadcast %cst_59 : f32 to vector<8x128xf32>
    %134 = arith.addf %133, %132 : vector<8x128xf32>
    %135 = arith.divf %133, %134 : vector<8x128xf32>
    %136 = arith.mulf %127, %108 : vector<8x128xf32>
    %137 = arith.mulf %121, %129 : vector<8x128xf32>
    %138 = arith.addf %136, %137 : vector<8x128xf32>
    %139 = math.tanh %138 : vector<8x128xf32>
    %140 = arith.mulf %135, %139 : vector<8x128xf32>
    %c4_i32_60 = arith.constant 4 : i32
    %141 = arith.muli %arg1, %c4_i32_60 : i32
    %142 = arith.addi %141, %c2_i32 : i32
    %c10_i32_61 = arith.constant 10 : i32
    %143 = arith.cmpi slt, %142, %c10_i32_61 : i32
    %144 = arith.select %143, %138, %108 : vector<8x128xf32>
    %145 = arith.select %143, %140, %106 : vector<8x128xf32>
    %c0_62 = arith.constant 0 : index
    %c0_63 = arith.constant 0 : index
    %c0_64 = arith.constant 0 : index
    %146 = vector.load %arg6[%c0_62, %c0_63, %c0_64] : memref<1x8x128xf32, #tpu.memory_space<vmem>>, vector<1x8x128xf32>
    %147 = vector.shape_cast %146 : vector<1x8x128xf32> to vector<8x128xf32>
    %148 = vector.shape_cast %144 : vector<8x128xf32> to vector<1x8x128xf32>
    tpu.vector_store %arg6[%c0_62, %c0_63, %c0_64], %148 {strides = array<i32>} : memref<1x8x128xf32, #tpu.memory_space<vmem>>, vector<1x8x128xf32>,
    %c0_65 = arith.constant 0 : index
    %c0_66 = arith.constant 0 : index
    %c0_67 = arith.constant 0 : index
    %149 = vector.load %arg5[%c0_65, %c0_66, %c0_67] : memref<1x8x128xf32, #tpu.memory_space<vmem>>, vector<1x8x128xf32>
    %150 = vector.shape_cast %149 : vector<1x8x128xf32> to vector<8x128xf32>
    %151 = vector.shape_cast %145 : vector<8x128xf32> to vector<1x8x128xf32>
    tpu.vector_store %arg5[%c0_65, %c0_66, %c0_67], %151 {strides = array<i32>} : memref<1x8x128xf32, #tpu.memory_space<vmem>>, vector<1x8x128xf32>,
    %152 = arith.index_cast %c2_i32 : i32 to index
    %c0_68 = arith.constant 0 : index
    %c0_69 = arith.constant 0 : index
    %153 = vector.load %arg4[%152, %c0_68, %c0_69] : memref<4x8x128xf32, #tpu.memory_space<vmem>>, vector<1x8x128xf32>
    %154 = vector.shape_cast %153 : vector<1x8x128xf32> to vector<8x128xf32>
    %155 = vector.shape_cast %145 : vector<8x128xf32> to vector<1x8x128xf32>
    tpu.vector_store %arg4[%152, %c0_68, %c0_69], %155 {strides = array<i32>} : memref<4x8x128xf32, #tpu.memory_space<vmem>>, vector<1x8x128xf32>,
    %c3_i32 = arith.constant 3 : i32
    %c0_70 = arith.constant 0 : index
    %c0_71 = arith.constant 0 : index
    %c0_72 = arith.constant 0 : index
    %156 = vector.load %arg5[%c0_70, %c0_71, %c0_72] : memref<1x8x128xf32, #tpu.memory_space<vmem>>, vector<1x8x128xf32>
    %157 = vector.shape_cast %156 : vector<1x8x128xf32> to vector<8x128xf32>
    %c0_73 = arith.constant 0 : index
    %c0_74 = arith.constant 0 : index
    %c0_75 = arith.constant 0 : index
    %158 = vector.load %arg6[%c0_73, %c0_74, %c0_75] : memref<1x8x128xf32, #tpu.memory_space<vmem>>, vector<1x8x128xf32>
    %159 = vector.shape_cast %158 : vector<1x8x128xf32> to vector<8x128xf32>
    %160 = arith.index_cast %c3_i32 : i32 to index
    %c0_76 = arith.constant 0 : index
    %c0_77 = arith.constant 0 : index
    %161 = vector.load %arg2[%160, %c0_76, %c0_77] : memref<4x8x512xf32, #tpu.memory_space<vmem>>, vector<1x8x512xf32>
    %162 = vector.shape_cast %161 : vector<1x8x512xf32> to vector<8x512xf32>
    %163 = arith.truncf %157 : vector<8x128xf32> to vector<8x128xbf16>
    %c0_78 = arith.constant 0 : index
    %c0_79 = arith.constant 0 : index
    %164 = vector.load %arg3[%c0_78, %c0_79] : memref<128x512xbf16, #tpu.memory_space<vmem>>, vector<128x512xbf16>
    %cst_80 = arith.constant dense<0.000000e+00> : vector<8x512xf32>
    %165 = tpu.matmul %163, %164, %cst_80 {dimension_numbers = #tpu.dot_dimension_numbers<[1], [0], [0], [1], [0, 0, 1, 1], [], []>} : vector<8x128xbf16>, vector<128x512xbf16>, vector<8x512xf32> -> vector<8x512xf32>
    %166 = arith.addf %162, %165 : vector<8x512xf32>
    %167 = vector.extract_strided_slice %166 {offsets = [0, 0], sizes = [8, 128], strides = [1, 1]} : vector<8x512xf32> to vector<8x128xf32>
    %168 = arith.negf %167 : vector<8x128xf32>
    %169 = math.exp %168 : vector<8x128xf32>
    %cst_81 = arith.constant 1.000000e+00 : f32
    %170 = vector.broadcast %cst_81 : f32 to vector<8x128xf32>
    %171 = arith.addf %170, %169 : vector<8x128xf32>
    %172 = arith.divf %170, %171 : vector<8x128xf32>
    %173 = vector.extract_strided_slice %166 {offsets = [0, 128], sizes = [8, 128], strides = [1, 1]} : vector<8x512xf32> to vector<8x128xf32>
    %174 = arith.negf %173 : vector<8x128xf32>
    %175 = math.exp %174 : vector<8x128xf32>
    %cst_82 = arith.constant 1.000000e+00 : f32
    %176 = vector.broadcast %cst_82 : f32 to vector<8x128xf32>
    %177 = arith.addf %176, %175 : vector<8x128xf32>
    %178 = arith.divf %176, %177 : vector<8x128xf32>
    %179 = vector.extract_strided_slice %166 {offsets = [0, 256], sizes = [8, 128], strides = [1, 1]} : vector<8x512xf32> to vector<8x128xf32>
    %180 = math.tanh %179 : vector<8x128xf32>
    %181 = vector.extract_strided_slice %166 {offsets = [0, 384], sizes = [8, 128], strides = [1, 1]} : vector<8x512xf32> to vector<8x128xf32>
    %182 = arith.negf %181 : vector<8x128xf32>
    %183 = math.exp %182 : vector<8x128xf32>
    %cst_83 = arith.constant 1.000000e+00 : f32
    %184 = vector.broadcast %cst_83 : f32 to vector<8x128xf32>
    %185 = arith.addf %184, %183 : vector<8x128xf32>
    %186 = arith.divf %184, %185 : vector<8x128xf32>
    %187 = arith.mulf %178, %159 : vector<8x128xf32>
    %188 = arith.mulf %172, %180 : vector<8x128xf32>
    %189 = arith.addf %187, %188 : vector<8x128xf32>
    %190 = math.tanh %189 : vector<8x128xf32>
    %191 = arith.mulf %186, %190 : vector<8x128xf32>
    %c4_i32_84 = arith.constant 4 : i32
    %192 = arith.muli %arg1, %c4_i32_84 : i32
    %193 = arith.addi %192, %c3_i32 : i32
    %c10_i32_85 = arith.constant 10 : i32
    %194 = arith.cmpi slt, %193, %c10_i32_85 : i32
    %195 = arith.select %194, %189, %159 : vector<8x128xf32>
    %196 = arith.select %194, %191, %157 : vector<8x128xf32>
    %c0_86 = arith.constant 0 : index
    %c0_87 = arith.constant 0 : index
    %c0_88 = arith.constant 0 : index
    %197 = vector.load %arg6[%c0_86, %c0_87, %c0_88] : memref<1x8x128xf32, #tpu.memory_space<vmem>>, vector<1x8x128xf32>
    %198 = vector.shape_cast %197 : vector<1x8x128xf32> to vector<8x128xf32>
    %199 = vector.shape_cast %195 : vector<8x128xf32> to vector<1x8x128xf32>
    tpu.vector_store %arg6[%c0_86, %c0_87, %c0_88], %199 {strides = array<i32>} : memref<1x8x128xf32, #tpu.memory_space<vmem>>, vector<1x8x128xf32>,
    %c0_89 = arith.constant 0 : index
    %c0_90 = arith.constant 0 : index
    %c0_91 = arith.constant 0 : index
    %200 = vector.load %arg5[%c0_89, %c0_90, %c0_91] : memref<1x8x128xf32, #tpu.memory_space<vmem>>, vector<1x8x128xf32>
    %201 = vector.shape_cast %200 : vector<1x8x128xf32> to vector<8x128xf32>
    %202 = vector.shape_cast %196 : vector<8x128xf32> to vector<1x8x128xf32>
    tpu.vector_store %arg5[%c0_89, %c0_90, %c0_91], %202 {strides = array<i32>} : memref<1x8x128xf32, #tpu.memory_space<vmem>>, vector<1x8x128xf32>,
    %203 = arith.index_cast %c3_i32 : i32 to index
    %c0_92 = arith.constant 0 : index
    %c0_93 = arith.constant 0 : index
    %204 = vector.load %arg4[%203, %c0_92, %c0_93] : memref<4x8x128xf32, #tpu.memory_space<vmem>>, vector<1x8x128xf32>
    %205 = vector.shape_cast %204 : vector<1x8x128xf32> to vector<8x128xf32>
    %206 = vector.shape_cast %196 : vector<8x128xf32> to vector<1x8x128xf32>
    tpu.vector_store %arg4[%203, %c0_92, %c0_93], %206 {strides = array<i32>} : memref<4x8x128xf32, #tpu.memory_space<vmem>>, vector<1x8x128xf32>,
    %c4_i32_94 = arith.constant 4 : i32
    return
  }
  func.func @transform_0(%arg0: i32, %arg1: i32) -> (i32, i32, i32) {
    %c0_i32 = arith.constant 0 : i32
    %c0_i32_0 = arith.constant 0 : i32
    return %arg1, %arg0, %c0_i32 : i32, i32, i32
  }
  func.func @transform_1(%arg0: i32, %arg1: i32) -> (i32, i32) {
    %c0_i32 = arith.constant 0 : i32
    %c0_i32_0 = arith.constant 0 : i32
    %c0_i32_1 = arith.constant 0 : i32
    return %c0_i32, %c0_i32_0 : i32, i32
  }
  func.func @transform_2(%arg0: i32, %arg1: i32) -> (i32, i32, i32) {
    %c0_i32 = arith.constant 0 : i32
    %c0_i32_0 = arith.constant 0 : i32
    return %arg1, %arg0, %c0_i32 : i32, i32, i32
  }
  func.func @transform_3(%arg0: i32, %arg1: i32) -> (i32, i32, i32) {
    %c0_i32 = arith.constant 0 : i32
    %c0_i32_0 = arith.constant 0 : i32
    %c0_i32_1 = arith.constant 0 : i32
    return %c0_i32, %arg0, %c0_i32_0 : i32, i32, i32
  }
  func.func @transform_4(%arg0: i32, %arg1: i32) -> (i32, i32, i32) {
    %c0_i32 = arith.constant 0 : i32
    %c0_i32_0 = arith.constant 0 : i32
    %c0_i32_1 = arith.constant 0 : i32
    return %c0_i32, %arg0, %c0_i32_0 : i32, i32, i32
  }
}

module attributes {stable_mosaic.version = 11 : i64} {
  func.func @kernel(%arg0: i32, %arg1: i32, %arg2: memref<4x8x512xf32, #tpu.memory_space<vmem>>, %arg3: memref<128x512xbf16, #tpu.memory_space<vmem>>, %arg4: memref<4x8x128xf32, #tpu.memory_space<vmem>>, %arg5: memref<1x8x128xf32, #tpu.memory_space<vmem>>, %arg6: memref<1x8x128xf32, #tpu.memory_space<vmem>>) attributes {dimension_semantics = [#tpu.dimension_semantics<parallel>, #tpu.dimension_semantics<arbitrary>], iteration_bounds = array<i64: 1, 3>, scalar_prefetch = 0 : i64, scratch_operands = 0 : i64, tpu.core_type = #tpu.core_type<tc>, window_params = [{transform_indices = @transform_0, window_bounds = array<i64: 4, 8, 512>}, {pipeline_mode = #tpu.pipeline_mode<synchronous>, transform_indices = @transform_1, window_bounds = array<i64: 128, 512>}, {transform_indices = @transform_2, window_bounds = array<i64: 4, 8, 128>}, {transform_indices = @transform_3, window_bounds = array<i64: 1, 8, 128>}, {transform_indices = @transform_4, window_bounds = array<i64: 1, 8, 128>}]} {
    %c0_i32 = arith.constant 0 : i32
    %0 = arith.cmpi eq, %arg1, %c0_i32 : i32
    %1 = arith.extui %0 : i1 to i32
    %c0_i32_0 = arith.constant 0 : i32
    %2 = arith.cmpi ne, %1, %c0_i32_0 : i32
    scf.if %2 {
      %cst_95 = arith.constant 0.000000e+00 : f32
      %207 = vector.broadcast %cst_95 : f32 to vector<1x8x128xf32>
      %c0_96 = arith.constant 0 : index
      %c0_97 = arith.constant 0 : index
      %c0_98 = arith.constant 0 : index
      %208 = vector.load %arg5[%c0_96, %c0_97, %c0_98] : memref<1x8x128xf32, #tpu.memory_space<vmem>>, vector<1x8x128xf32>
      tpu.vector_store %arg5[%c0_96, %c0_97, %c0_98], %207 {strides = array<i32>} : memref<1x8x128xf32, #tpu.memory_space<vmem>>, vector<1x8x128xf32>,
      %cst_99 = arith.constant 0.000000e+00 : f32
      %209 = vector.broadcast %cst_99 : f32 to vector<1x8x128xf32>
      %c0_100 = arith.constant 0 : index
      %c0_101 = arith.constant 0 : index
      %c0_102 = arith.constant 0 : index
      %210 = vector.load %arg6[%c0_100, %c0_101, %c0_102] : memref<1x8x128xf32, #tpu.memory_space<vmem>>, vector<1x8x128xf32>
      tpu.vector_store %arg6[%c0_100, %c0_101, %c0_102], %209 {strides = array<i32>} : memref<1x8x128xf32, #tpu.memory_space<vmem>>, vector<1x8x128xf32>,
    } else {
    }
    %c0_i32_1 = arith.constant 0 : i32
    %c0 = arith.constant 0 : index
    %c0_2 = arith.constant 0 : index
    %c0_3 = arith.constant 0 : index
    %3 = vector.load %arg5[%c0, %c0_2, %c0_3] : memref<1x8x128xf32, #tpu.memory_space<vmem>>, vector<1x8x128xf32>
    %4 = vector.shape_cast %3 : vector<1x8x128xf32> to vector<8x128xf32>
    %c0_4 = arith.constant 0 : index
    %c0_5 = arith.constant 0 : index
    %c0_6 = arith.constant 0 : index
    %5 = vector.load %arg6[%c0_4, %c0_5, %c0_6] : memref<1x8x128xf32, #tpu.memory_space<vmem>>, vector<1x8x128xf32>
    %6 = vector.shape_cast %5 : vector<1x8x128xf32> to vector<8x128xf32>
    %7 = arith.index_cast %c0_i32_1 : i32 to index
    %c0_7 = arith.constant 0 : index
    %c0_8 = arith.constant 0 : index
    %8 = vector.load %arg2[%7, %c0_7, %c0_8] : memref<4x8x512xf32, #tpu.memory_space<vmem>>, vector<1x8x512xf32>
    %9 = vector.shape_cast %8 : vector<1x8x512xf32> to vector<8x512xf32>
    %10 = arith.truncf %4 : vector<8x128xf32> to vector<8x128xbf16>
    %c0_9 = arith.constant 0 : index
    %c0_10 = arith.constant 0 : index
    %11 = vector.load %arg3[%c0_9, %c0_10] : memref<128x512xbf16, #tpu.memory_space<vmem>>, vector<128x512xbf16>
    %cst = arith.constant dense<0.000000e+00> : vector<8x512xf32>
    %12 = tpu.matmul %10, %11, %cst {dimension_numbers = #tpu.dot_dimension_numbers<[1], [0], [0], [1], [0, 0, 1, 1], [], []>} : vector<8x128xbf16>, vector<128x512xbf16>, vector<8x512xf32> -> vector<8x512xf32>
    %13 = arith.addf %9, %12 : vector<8x512xf32>
    %14 = vector.extract_strided_slice %13 {offsets = [0, 0], sizes = [8, 128], strides = [1, 1]} : vector<8x512xf32> to vector<8x128xf32>
    %15 = arith.negf %14 : vector<8x128xf32>
    %16 = math.exp %15 : vector<8x128xf32>
    %cst_11 = arith.constant 1.000000e+00 : f32
    %17 = vector.broadcast %cst_11 : f32 to vector<8x128xf32>
    %18 = arith.addf %17, %16 : vector<8x128xf32>
    %19 = arith.divf %17, %18 : vector<8x128xf32>
    %20 = vector.extract_strided_slice %13 {offsets = [0, 128], sizes = [8, 128], strides = [1, 1]} : vector<8x512xf32> to vector<8x128xf32>
    %21 = arith.negf %20 : vector<8x128xf32>
    %22 = math.exp %21 : vector<8x128xf32>
    %cst_12 = arith.constant 1.000000e+00 : f32
    %23 = vector.broadcast %cst_12 : f32 to vector<8x128xf32>
    %24 = arith.addf %23, %22 : vector<8x128xf32>
    %25 = arith.divf %23, %24 : vector<8x128xf32>
    %26 = vector.extract_strided_slice %13 {offsets = [0, 256], sizes = [8, 128], strides = [1, 1]} : vector<8x512xf32> to vector<8x128xf32>
    %27 = math.tanh %26 : vector<8x128xf32>
    %28 = vector.extract_strided_slice %13 {offsets = [0, 384], sizes = [8, 128], strides = [1, 1]} : vector<8x512xf32> to vector<8x128xf32>
    %29 = arith.negf %28 : vector<8x128xf32>
    %30 = math.exp %29 : vector<8x128xf32>
    %cst_13 = arith.constant 1.000000e+00 : f32
    %31 = vector.broadcast %cst_13 : f32 to vector<8x128xf32>
    %32 = arith.addf %31, %30 : vector<8x128xf32>
    %33 = arith.divf %31, %32 : vector<8x128xf32>
    %34 = arith.mulf %25, %6 : vector<8x128xf32>
    %35 = arith.mulf %19, %27 : vector<8x128xf32>
    %36 = arith.addf %34, %35 : vector<8x128xf32>
    %37 = math.tanh %36 : vector<8x128xf32>
    %38 = arith.mulf %33, %37 : vector<8x128xf32>
    %c4_i32 = arith.constant 4 : i32
    %39 = arith.muli %arg1, %c4_i32 : i32
    %40 = arith.addi %39, %c0_i32_1 : i32
    %c10_i32 = arith.constant 10 : i32
    %41 = arith.cmpi slt, %40, %c10_i32 : i32
    %42 = arith.select %41, %36, %6 : vector<8x128xf32>
    %43 = arith.select %41, %38, %4 : vector<8x128xf32>
    %c0_14 = arith.constant 0 : index
    %c0_15 = arith.constant 0 : index
    %c0_16 = arith.constant 0 : index
    %44 = vector.load %arg6[%c0_14, %c0_15, %c0_16] : memref<1x8x128xf32, #tpu.memory_space<vmem>>, vector<1x8x128xf32>
    %45 = vector.shape_cast %44 : vector<1x8x128xf32> to vector<8x128xf32>
    %46 = vector.shape_cast %42 : vector<8x128xf32> to vector<1x8x128xf32>
    tpu.vector_store %arg6[%c0_14, %c0_15, %c0_16], %46 {strides = array<i32>} : memref<1x8x128xf32, #tpu.memory_space<vmem>>, vector<1x8x128xf32>,
    %c0_17 = arith.constant 0 : index
    %c0_18 = arith.constant 0 : index
    %c0_19 = arith.constant 0 : index
    %47 = vector.load %arg5[%c0_17, %c0_18, %c0_19] : memref<1x8x128xf32, #tpu.memory_space<vmem>>, vector<1x8x128xf32>
    %48 = vector.shape_cast %47 : vector<1x8x128xf32> to vector<8x128xf32>
    %49 = vector.shape_cast %43 : vector<8x128xf32> to vector<1x8x128xf32>
    tpu.vector_store %arg5[%c0_17, %c0_18, %c0_19], %49 {strides = array<i32>} : memref<1x8x128xf32, #tpu.memory_space<vmem>>, vector<1x8x128xf32>,
    %50 = arith.index_cast %c0_i32_1 : i32 to index
    %c0_20 = arith.constant 0 : index
    %c0_21 = arith.constant 0 : index
    %51 = vector.load %arg4[%50, %c0_20, %c0_21] : memref<4x8x128xf32, #tpu.memory_space<vmem>>, vector<1x8x128xf32>
    %52 = vector.shape_cast %51 : vector<1x8x128xf32> to vector<8x128xf32>
    %53 = vector.shape_cast %43 : vector<8x128xf32> to vector<1x8x128xf32>
    tpu.vector_store %arg4[%50, %c0_20, %c0_21], %53 {strides = array<i32>} : memref<4x8x128xf32, #tpu.memory_space<vmem>>, vector<1x8x128xf32>,
    %c1_i32 = arith.constant 1 : i32
    %c0_22 = arith.constant 0 : index
    %c0_23 = arith.constant 0 : index
    %c0_24 = arith.constant 0 : index
    %54 = vector.load %arg5[%c0_22, %c0_23, %c0_24] : memref<1x8x128xf32, #tpu.memory_space<vmem>>, vector<1x8x128xf32>
    %55 = vector.shape_cast %54 : vector<1x8x128xf32> to vector<8x128xf32>
    %c0_25 = arith.constant 0 : index
    %c0_26 = arith.constant 0 : index
    %c0_27 = arith.constant 0 : index
    %56 = vector.load %arg6[%c0_25, %c0_26, %c0_27] : memref<1x8x128xf32, #tpu.memory_space<vmem>>, vector<1x8x128xf32>
    %57 = vector.shape_cast %56 : vector<1x8x128xf32> to vector<8x128xf32>
    %58 = arith.index_cast %c1_i32 : i32 to index
    %c0_28 = arith.constant 0 : index
    %c0_29 = arith.constant 0 : index
    %59 = vector.load %arg2[%58, %c0_28, %c0_29] : memref<4x8x512xf32, #tpu.memory_space<vmem>>, vector<1x8x512xf32>
    %60 = vector.shape_cast %59 : vector<1x8x512xf32> to vector<8x512xf32>
    %61 = arith.truncf %55 : vector<8x128xf32> to vector<8x128xbf16>
    %c0_30 = arith.constant 0 : index
    %c0_31 = arith.constant 0 : index
    %62 = vector.load %arg3[%c0_30, %c0_31] : memref<128x512xbf16, #tpu.memory_space<vmem>>, vector<128x512xbf16>
    %cst_32 = arith.constant dense<0.000000e+00> : vector<8x512xf32>
    %63 = tpu.matmul %61, %62, %cst_32 {dimension_numbers = #tpu.dot_dimension_numbers<[1], [0], [0], [1], [0, 0, 1, 1], [], []>} : vector<8x128xbf16>, vector<128x512xbf16>, vector<8x512xf32> -> vector<8x512xf32>
    %64 = arith.addf %60, %63 : vector<8x512xf32>
    %65 = vector.extract_strided_slice %64 {offsets = [0, 0], sizes = [8, 128], strides = [1, 1]} : vector<8x512xf32> to vector<8x128xf32>
    %66 = arith.negf %65 : vector<8x128xf32>
    %67 = math.exp %66 : vector<8x128xf32>
    %cst_33 = arith.constant 1.000000e+00 : f32
    %68 = vector.broadcast %cst_33 : f32 to vector<8x128xf32>
    %69 = arith.addf %68, %67 : vector<8x128xf32>
    %70 = arith.divf %68, %69 : vector<8x128xf32>
    %71 = vector.extract_strided_slice %64 {offsets = [0, 128], sizes = [8, 128], strides = [1, 1]} : vector<8x512xf32> to vector<8x128xf32>
    %72 = arith.negf %71 : vector<8x128xf32>
    %73 = math.exp %72 : vector<8x128xf32>
    %cst_34 = arith.constant 1.000000e+00 : f32
    %74 = vector.broadcast %cst_34 : f32 to vector<8x128xf32>
    %75 = arith.addf %74, %73 : vector<8x128xf32>
    %76 = arith.divf %74, %75 : vector<8x128xf32>
    %77 = vector.extract_strided_slice %64 {offsets = [0, 256], sizes = [8, 128], strides = [1, 1]} : vector<8x512xf32> to vector<8x128xf32>
    %78 = math.tanh %77 : vector<8x128xf32>
    %79 = vector.extract_strided_slice %64 {offsets = [0, 384], sizes = [8, 128], strides = [1, 1]} : vector<8x512xf32> to vector<8x128xf32>
    %80 = arith.negf %79 : vector<8x128xf32>
    %81 = math.exp %80 : vector<8x128xf32>
    %cst_35 = arith.constant 1.000000e+00 : f32
    %82 = vector.broadcast %cst_35 : f32 to vector<8x128xf32>
    %83 = arith.addf %82, %81 : vector<8x128xf32>
    %84 = arith.divf %82, %83 : vector<8x128xf32>
    %85 = arith.mulf %76, %57 : vector<8x128xf32>
    %86 = arith.mulf %70, %78 : vector<8x128xf32>
    %87 = arith.addf %85, %86 : vector<8x128xf32>
    %88 = math.tanh %87 : vector<8x128xf32>
    %89 = arith.mulf %84, %88 : vector<8x128xf32>
    %c4_i32_36 = arith.constant 4 : i32
    %90 = arith.muli %arg1, %c4_i32_36 : i32
    %91 = arith.addi %90, %c1_i32 : i32
    %c10_i32_37 = arith.constant 10 : i32
    %92 = arith.cmpi slt, %91, %c10_i32_37 : i32
    %93 = arith.select %92, %87, %57 : vector<8x128xf32>
    %94 = arith.select %92, %89, %55 : vector<8x128xf32>
    %c0_38 = arith.constant 0 : index
    %c0_39 = arith.constant 0 : index
    %c0_40 = arith.constant 0 : index
    %95 = vector.load %arg6[%c0_38, %c0_39, %c0_40] : memref<1x8x128xf32, #tpu.memory_space<vmem>>, vector<1x8x128xf32>
    %96 = vector.shape_cast %95 : vector<1x8x128xf32> to vector<8x128xf32>
    %97 = vector.shape_cast %93 : vector<8x128xf32> to vector<1x8x128xf32>
    tpu.vector_store %arg6[%c0_38, %c0_39, %c0_40], %97 {strides = array<i32>} : memref<1x8x128xf32, #tpu.memory_space<vmem>>, vector<1x8x128xf32>,
    %c0_41 = arith.constant 0 : index
    %c0_42 = arith.constant 0 : index
    %c0_43 = arith.constant 0 : index
    %98 = vector.load %arg5[%c0_41, %c0_42, %c0_43] : memref<1x8x128xf32, #tpu.memory_space<vmem>>, vector<1x8x128xf32>
    %99 = vector.shape_cast %98 : vector<1x8x128xf32> to vector<8x128xf32>
    %100 = vector.shape_cast %94 : vector<8x128xf32> to vector<1x8x128xf32>
    tpu.vector_store %arg5[%c0_41, %c0_42, %c0_43], %100 {strides = array<i32>} : memref<1x8x128xf32, #tpu.memory_space<vmem>>, vector<1x8x128xf32>,
    %101 = arith.index_cast %c1_i32 : i32 to index
    %c0_44 = arith.constant 0 : index
    %c0_45 = arith.constant 0 : index
    %102 = vector.load %arg4[%101, %c0_44, %c0_45] : memref<4x8x128xf32, #tpu.memory_space<vmem>>, vector<1x8x128xf32>
    %103 = vector.shape_cast %102 : vector<1x8x128xf32> to vector<8x128xf32>
    %104 = vector.shape_cast %94 : vector<8x128xf32> to vector<1x8x128xf32>
    tpu.vector_store %arg4[%101, %c0_44, %c0_45], %104 {strides = array<i32>} : memref<4x8x128xf32, #tpu.memory_space<vmem>>, vector<1x8x128xf32>,
    %c2_i32 = arith.constant 2 : i32
    %c0_46 = arith.constant 0 : index
    %c0_47 = arith.constant 0 : index
    %c0_48 = arith.constant 0 : index
    %105 = vector.load %arg5[%c0_46, %c0_47, %c0_48] : memref<1x8x128xf32, #tpu.memory_space<vmem>>, vector<1x8x128xf32>
    %106 = vector.shape_cast %105 : vector<1x8x128xf32> to vector<8x128xf32>
    %c0_49 = arith.constant 0 : index
    %c0_50 = arith.constant 0 : index
    %c0_51 = arith.constant 0 : index
    %107 = vector.load %arg6[%c0_49, %c0_50, %c0_51] : memref<1x8x128xf32, #tpu.memory_space<vmem>>, vector<1x8x128xf32>
    %108 = vector.shape_cast %107 : vector<1x8x128xf32> to vector<8x128xf32>
    %109 = arith.index_cast %c2_i32 : i32 to index
    %c0_52 = arith.constant 0 : index
    %c0_53 = arith.constant 0 : index
    %110 = vector.load %arg2[%109, %c0_52, %c0_53] : memref<4x8x512xf32, #tpu.memory_space<vmem>>, vector<1x8x512xf32>
    %111 = vector.shape_cast %110 : vector<1x8x512xf32> to vector<8x512xf32>
    %112 = arith.truncf %106 : vector<8x128xf32> to vector<8x128xbf16>
    %c0_54 = arith.constant 0 : index
    %c0_55 = arith.constant 0 : index
    %113 = vector.load %arg3[%c0_54, %c0_55] : memref<128x512xbf16, #tpu.memory_space<vmem>>, vector<128x512xbf16>
    %cst_56 = arith.constant dense<0.000000e+00> : vector<8x512xf32>
    %114 = tpu.matmul %112, %113, %cst_56 {dimension_numbers = #tpu.dot_dimension_numbers<[1], [0], [0], [1], [0, 0, 1, 1], [], []>} : vector<8x128xbf16>, vector<128x512xbf16>, vector<8x512xf32> -> vector<8x512xf32>
    %115 = arith.addf %111, %114 : vector<8x512xf32>
    %116 = vector.extract_strided_slice %115 {offsets = [0, 0], sizes = [8, 128], strides = [1, 1]} : vector<8x512xf32> to vector<8x128xf32>
    %117 = arith.negf %116 : vector<8x128xf32>
    %118 = math.exp %117 : vector<8x128xf32>
    %cst_57 = arith.constant 1.000000e+00 : f32
    %119 = vector.broadcast %cst_57 : f32 to vector<8x128xf32>
    %120 = arith.addf %119, %118 : vector<8x128xf32>
    %121 = arith.divf %119, %120 : vector<8x128xf32>
    %122 = vector.extract_strided_slice %115 {offsets = [0, 128], sizes = [8, 128], strides = [1, 1]} : vector<8x512xf32> to vector<8x128xf32>
    %123 = arith.negf %122 : vector<8x128xf32>
    %124 = math.exp %123 : vector<8x128xf32>
    %cst_58 = arith.constant 1.000000e+00 : f32
    %125 = vector.broadcast %cst_58 : f32 to vector<8x128xf32>
    %126 = arith.addf %125, %124 : vector<8x128xf32>
    %127 = arith.divf %125, %126 : vector<8x128xf32>
    %128 = vector.extract_strided_slice %115 {offsets = [0, 256], sizes = [8, 128], strides = [1, 1]} : vector<8x512xf32> to vector<8x128xf32>
    %129 = math.tanh %128 : vector<8x128xf32>
    %130 = vector.extract_strided_slice %115 {offsets = [0, 384], sizes = [8, 128], strides = [1, 1]} : vector<8x512xf32> to vector<8x128xf32>
    %131 = arith.negf %130 : vector<8x128xf32>
    %132 = math.exp %131 : vector<8x128xf32>
    %cst_59 = arith.constant 1.000000e+00 : f32
    %133 = vector.broadcast %cst_59 : f32 to vector<8x128xf32>
    %134 = arith.addf %133, %132 : vector<8x128xf32>
    %135 = arith.divf %133, %134 : vector<8x128xf32>
    %136 = arith.mulf %127, %108 : vector<8x128xf32>
    %137 = arith.mulf %121, %129 : vector<8x128xf32>
    %138 = arith.addf %136, %137 : vector<8x128xf32>
    %139 = math.tanh %138 : vector<8x128xf32>
    %140 = arith.mulf %135, %139 : vector<8x128xf32>
    %c4_i32_60 = arith.constant 4 : i32
    %141 = arith.muli %arg1, %c4_i32_60 : i32
    %142 = arith.addi %141, %c2_i32 : i32
    %c10_i32_61 = arith.constant 10 : i32
    %143 = arith.cmpi slt, %142, %c10_i32_61 : i32
    %144 = arith.select %143, %138, %108 : vector<8x128xf32>
    %145 = arith.select %143, %140, %106 : vector<8x128xf32>
    %c0_62 = arith.constant 0 : index
    %c0_63 = arith.constant 0 : index
    %c0_64 = arith.constant 0 : index
    %146 = vector.load %arg6[%c0_62, %c0_63, %c0_64] : memref<1x8x128xf32, #tpu.memory_space<vmem>>, vector<1x8x128xf32>
    %147 = vector.shape_cast %146 : vector<1x8x128xf32> to vector<8x128xf32>
    %148 = vector.shape_cast %144 : vector<8x128xf32> to vector<1x8x128xf32>
    tpu.vector_store %arg6[%c0_62, %c0_63, %c0_64], %148 {strides = array<i32>} : memref<1x8x128xf32, #tpu.memory_space<vmem>>, vector<1x8x128xf32>,
    %c0_65 = arith.constant 0 : index
    %c0_66 = arith.constant 0 : index
    %c0_67 = arith.constant 0 : index
    %149 = vector.load %arg5[%c0_65, %c0_66, %c0_67] : memref<1x8x128xf32, #tpu.memory_space<vmem>>, vector<1x8x128xf32>
    %150 = vector.shape_cast %149 : vector<1x8x128xf32> to vector<8x128xf32>
    %151 = vector.shape_cast %145 : vector<8x128xf32> to vector<1x8x128xf32>
    tpu.vector_store %arg5[%c0_65, %c0_66, %c0_67], %151 {strides = array<i32>} : memref<1x8x128xf32, #tpu.memory_space<vmem>>, vector<1x8x128xf32>,
    %152 = arith.index_cast %c2_i32 : i32 to index
    %c0_68 = arith.constant 0 : index
    %c0_69 = arith.constant 0 : index
    %153 = vector.load %arg4[%152, %c0_68, %c0_69] : memref<4x8x128xf32, #tpu.memory_space<vmem>>, vector<1x8x128xf32>
    %154 = vector.shape_cast %153 : vector<1x8x128xf32> to vector<8x128xf32>
    %155 = vector.shape_cast %145 : vector<8x128xf32> to vector<1x8x128xf32>
    tpu.vector_store %arg4[%152, %c0_68, %c0_69], %155 {strides = array<i32>} : memref<4x8x128xf32, #tpu.memory_space<vmem>>, vector<1x8x128xf32>,
    %c3_i32 = arith.constant 3 : i32
    %c0_70 = arith.constant 0 : index
    %c0_71 = arith.constant 0 : index
    %c0_72 = arith.constant 0 : index
    %156 = vector.load %arg5[%c0_70, %c0_71, %c0_72] : memref<1x8x128xf32, #tpu.memory_space<vmem>>, vector<1x8x128xf32>
    %157 = vector.shape_cast %156 : vector<1x8x128xf32> to vector<8x128xf32>
    %c0_73 = arith.constant 0 : index
    %c0_74 = arith.constant 0 : index
    %c0_75 = arith.constant 0 : index
    %158 = vector.load %arg6[%c0_73, %c0_74, %c0_75] : memref<1x8x128xf32, #tpu.memory_space<vmem>>, vector<1x8x128xf32>
    %159 = vector.shape_cast %158 : vector<1x8x128xf32> to vector<8x128xf32>
    %160 = arith.index_cast %c3_i32 : i32 to index
    %c0_76 = arith.constant 0 : index
    %c0_77 = arith.constant 0 : index
    %161 = vector.load %arg2[%160, %c0_76, %c0_77] : memref<4x8x512xf32, #tpu.memory_space<vmem>>, vector<1x8x512xf32>
    %162 = vector.shape_cast %161 : vector<1x8x512xf32> to vector<8x512xf32>
    %163 = arith.truncf %157 : vector<8x128xf32> to vector<8x128xbf16>
    %c0_78 = arith.constant 0 : index
    %c0_79 = arith.constant 0 : index
    %164 = vector.load %arg3[%c0_78, %c0_79] : memref<128x512xbf16, #tpu.memory_space<vmem>>, vector<128x512xbf16>
    %cst_80 = arith.constant dense<0.000000e+00> : vector<8x512xf32>
    %165 = tpu.matmul %163, %164, %cst_80 {dimension_numbers = #tpu.dot_dimension_numbers<[1], [0], [0], [1], [0, 0, 1, 1], [], []>} : vector<8x128xbf16>, vector<128x512xbf16>, vector<8x512xf32> -> vector<8x512xf32>
    %166 = arith.addf %162, %165 : vector<8x512xf32>
    %167 = vector.extract_strided_slice %166 {offsets = [0, 0], sizes = [8, 128], strides = [1, 1]} : vector<8x512xf32> to vector<8x128xf32>
    %168 = arith.negf %167 : vector<8x128xf32>
    %169 = math.exp %168 : vector<8x128xf32>
    %cst_81 = arith.constant 1.000000e+00 : f32
    %170 = vector.broadcast %cst_81 : f32 to vector<8x128xf32>
    %171 = arith.addf %170, %169 : vector<8x128xf32>
    %172 = arith.divf %170, %171 : vector<8x128xf32>
    %173 = vector.extract_strided_slice %166 {offsets = [0, 128], sizes = [8, 128], strides = [1, 1]} : vector<8x512xf32> to vector<8x128xf32>
    %174 = arith.negf %173 : vector<8x128xf32>
    %175 = math.exp %174 : vector<8x128xf32>
    %cst_82 = arith.constant 1.000000e+00 : f32
    %176 = vector.broadcast %cst_82 : f32 to vector<8x128xf32>
    %177 = arith.addf %176, %175 : vector<8x128xf32>
    %178 = arith.divf %176, %177 : vector<8x128xf32>
    %179 = vector.extract_strided_slice %166 {offsets = [0, 256], sizes = [8, 128], strides = [1, 1]} : vector<8x512xf32> to vector<8x128xf32>
    %180 = math.tanh %179 : vector<8x128xf32>
    %181 = vector.extract_strided_slice %166 {offsets = [0, 384], sizes = [8, 128], strides = [1, 1]} : vector<8x512xf32> to vector<8x128xf32>
    %182 = arith.negf %181 : vector<8x128xf32>
    %183 = math.exp %182 : vector<8x128xf32>
    %cst_83 = arith.constant 1.000000e+00 : f32
    %184 = vector.broadcast %cst_83 : f32 to vector<8x128xf32>
    %185 = arith.addf %184, %183 : vector<8x128xf32>
    %186 = arith.divf %184, %185 : vector<8x128xf32>
    %187 = arith.mulf %178, %159 : vector<8x128xf32>
    %188 = arith.mulf %172, %180 : vector<8x128xf32>
    %189 = arith.addf %187, %188 : vector<8x128xf32>
    %190 = math.tanh %189 : vector<8x128xf32>
    %191 = arith.mulf %186, %190 : vector<8x128xf32>
    %c4_i32_84 = arith.constant 4 : i32
    %192 = arith.muli %arg1, %c4_i32_84 : i32
    %193 = arith.addi %192, %c3_i32 : i32
    %c10_i32_85 = arith.constant 10 : i32
    %194 = arith.cmpi slt, %193, %c10_i32_85 : i32
    %195 = arith.select %194, %189, %159 : vector<8x128xf32>
    %196 = arith.select %194, %191, %157 : vector<8x128xf32>
    %c0_86 = arith.constant 0 : index
    %c0_87 = arith.constant 0 : index
    %c0_88 = arith.constant 0 : index
    %197 = vector.load %arg6[%c0_86, %c0_87, %c0_88] : memref<1x8x128xf32, #tpu.memory_space<vmem>>, vector<1x8x128xf32>
    %198 = vector.shape_cast %197 : vector<1x8x128xf32> to vector<8x128xf32>
    %199 = vector.shape_cast %195 : vector<8x128xf32> to vector<1x8x128xf32>
    tpu.vector_store %arg6[%c0_86, %c0_87, %c0_88], %199 {strides = array<i32>} : memref<1x8x128xf32, #tpu.memory_space<vmem>>, vector<1x8x128xf32>,
    %c0_89 = arith.constant 0 : index
    %c0_90 = arith.constant 0 : index
    %c0_91 = arith.constant 0 : index
    %200 = vector.load %arg5[%c0_89, %c0_90, %c0_91] : memref<1x8x128xf32, #tpu.memory_space<vmem>>, vector<1x8x128xf32>
    %201 = vector.shape_cast %200 : vector<1x8x128xf32> to vector<8x128xf32>
    %202 = vector.shape_cast %196 : vector<8x128xf32> to vector<1x8x128xf32>
    tpu.vector_store %arg5[%c0_89, %c0_90, %c0_91], %202 {strides = array<i32>} : memref<1x8x128xf32, #tpu.memory_space<vmem>>, vector<1x8x128xf32>,
    %203 = arith.index_cast %c3_i32 : i32 to index
    %c0_92 = arith.constant 0 : index
    %c0_93 = arith.constant 0 : index
    %204 = vector.load %arg4[%203, %c0_92, %c0_93] : memref<4x8x128xf32, #tpu.memory_space<vmem>>, vector<1x8x128xf32>
    %205 = vector.shape_cast %204 : vector<1x8x128xf32> to vector<8x128xf32>
    %206 = vector.shape_cast %196 : vector<8x128xf32> to vector<1x8x128xf32>
    tpu.vector_store %arg4[%203, %c0_92, %c0_93], %206 {strides = array<i32>} : memref<4x8x128xf32, #tpu.memory_space<vmem>>, vector<1x8x128xf32>,
    %c4_i32_94 = arith.constant 4 : i32
    return
  }
  func.func @transform_0(%arg0: i32, %arg1: i32) -> (i32, i32, i32) {
    %c0_i32 = arith.constant 0 : i32
    %c0_i32_0 = arith.constant 0 : i32
    return %arg1, %arg0, %c0_i32 : i32, i32, i32
  }
  func.func @transform_1(%arg0: i32, %arg1: i32) -> (i32, i32) {
    %c0_i32 = arith.constant 0 : i32
    %c0_i32_0 = arith.constant 0 : i32
    %c0_i32_1 = arith.constant 0 : i32
    return %c0_i32, %c0_i32_0 : i32, i32
  }
  func.func @transform_2(%arg0: i32, %arg1: i32) -> (i32, i32, i32) {
    %c0_i32 = arith.constant 0 : i32
    %c0_i32_0 = arith.constant 0 : i32
    return %arg1, %arg0, %c0_i32 : i32, i32, i32
  }
  func.func @transform_3(%arg0: i32, %arg1: i32) -> (i32, i32, i32) {
    %c0_i32 = arith.constant 0 : i32
    %c0_i32_0 = arith.constant 0 : i32
    %c0_i32_1 = arith.constant 0 : i32
    return %c0_i32, %arg0, %c0_i32_0 : i32, i32, i32
  }
  func.func @transform_4(%arg0: i32, %arg1: i32) -> (i32, i32, i32) {
    %c0_i32 = arith.constant 0 : i32
    %c0_i32_0 = arith.constant 0 : i32
    %c0_i32_1 = arith.constant 0 : i32
    return %c0_i32, %arg0, %c0_i32_0 : i32, i32, i32
  }
}

</mosaic_0001>

<llo_original>
// kernel: tpu_custom_call.1
$region0: #{tpu_custom_call.1}
  #allocation0 [shape = 'u32[]', space=smem, size = 0x4, offset = 0x4, fixed_abs, tag = 'smem constant byte address 0x4 - core index']
  #allocation1 [shape = 'u32[144,128]{1,0:T(1,128)}', space=vmem, size = 0x12000, scoped, tag = 'internal scratch']
  %s0 = inlined_call_operand.hbm [shape: f32[12,8,512], index: 0, kind: input, shape index: {}]
  %s1 = inlined_call_operand.hbm [shape: bf16[128,512], index: 1, kind: input, shape index: {}]
  %s2 = inlined_call_operand.hbm [shape: f32[12,8,128], index: 2, kind: output, shape index: {0}]
  %s3 = inlined_call_operand.hbm [shape: f32[1,8,128], index: 3, kind: output, shape index: {1}]
  %s4 = inlined_call_operand.hbm [shape: f32[1,8,128], index: 4, kind: output, shape index: {2}]
  %5 = xla_tuple %s2, %s3, %s4
  %s6 = sld [smem:[#allocation0]]
  $region69: #{tpu_custom_call.1} parent=0
    _
  %s8 = ssub.s32 1, %s6
  %s9 = scalar_select 0, %s8, %s6
  $region1: #{tpu_custom_call.1} parent=0
    #allocation2 [shape = 'u8[131072]{0}', space=vmem, size = 0x20000, scoped, tag = 'input window, operand 0']
    #allocation3 [shape = 's32[2]{0}', space=sflag, size = 0x8, scoped, tag = 'scoped memory for tpu_custom_call.1']
    #allocation4 [shape = 's32[2]{0}', space=sflag, size = 0x8, scoped, tag = 'scoped memory for tpu_custom_call.1']
    #allocation5 [shape = 'u8[131072]{0}', space=vmem, size = 0x20000, scoped, tag = 'input window, operand 1, single buffered']
    #allocation6 [shape = 's32[1]{0}', space=sflag, size = 0x4, scoped, tag = 'scoped memory for tpu_custom_call.1']
    #allocation7 [shape = 'u8[32768]{0}', space=vmem, size = 0x8000, scoped, tag = 'output window, operand 0']
    #allocation8 [shape = 'u8[4096]{0}', space=vmem, size = 0x1000, scoped, tag = 'output window, operand 1, single buffered']
    #allocation9 [shape = 's32[1]{0}', space=sflag, size = 0x4, scoped, tag = 'scoped memory for tpu_custom_call.1']
    #allocation10 [shape = 'u8[4096]{0}', space=vmem, size = 0x1000, scoped, tag = 'output window, operand 2, single buffered']
    %10 = vsyncpa [#allocation3], 0
    %s11 = scalar_lea.sflag [#allocation3], 1
    %12 = vsyncpa %s11, 0
    %13 = vsyncpa [#allocation6], 0
    %14 = vsyncpa [#allocation4], 0
    %s15 = scalar_lea.sflag [#allocation4], 1
    %16 = vsyncpa %s15, 0
    %17 = vsyncpa [#allocation9], 0
    loop: start=0, step=1, limit=5
    $region2: #{tpu_custom_call.1} parent=1 // loop_pre_header
      _
    $region3: #{tpu_custom_call.1} parent=1 // loop_header
      %s19 = sphi 0, %s23
      %p20 = scmp.ge.s32.totalorder %s19, 5
      %s26 = sphi 0, %s38
      %s27 = sphi 0, %s34
      %s28 = sphi 0, %s26
      %s29 = sphi 0, %s27
      %s30 = sphi 0, %s28
      %s31 = sphi 0, %s29
      %s43 = sphi 0, %s45
      %s46 = sphi 0, %s43
      %s47 = sphi 0, %s46
      %s63 = sphi 0, %s47
      %s67 = sphi 0, %s67
      %s69 = sphi 0, %s67
      %s70 = sphi 0, %s69
      %s84 = sphi 0, %s70
      %s92 = sphi 0, %s94
      %s95 = sphi 0, %s92
      %s96 = sphi 0, %s95
      %s112 = sphi 0, %s96
      %s118 = sphi 0, %s120
      %s121 = sphi 0, %s118
      %s122 = sphi 0, %s121
      %s138 = sphi 0, %s122
      %s144 = sphi 0, %s146
      %s147 = sphi 0, %s144
      %s148 = sphi 0, %s147
      %s164 = sphi 0, %s148
    $region4: #{tpu_custom_call.1} parent=1 // loop_header_branch
      %22 = sbr.rel (%p20) target = $region8
    $region5: #{tpu_custom_call.1} parent=1 // loop_body
      %s24 = ssub.s32 %s19, 1
      %s25 = ssub.s32 %s19, 2
      %s32 = sadd.s32 1, %s27
      %p33 = scmp.ge.s32.totalorder %s32, 3
      %s34 = scalar_select %p33, 0, %s32
      %s35 = sadd.s32 1, %s26
      %s36 = scalar_select %p33, %s35, %s26
      %p37 = scmp.ge.s32.totalorder %s36, 1
      %s38 = scalar_select %p37, 0, %s36
      %s39 = ssub.s32 %s27, %s34
      %s40 = ssub.s32 %s26, %s38
      %s41 = sor.u32 %s39, %s40
      %p42 = scmp.eq.s32.totalorder %s41, 0
      %s44 = sadd.s32 %s43, 1
      %s45 = scalar_select %p42, %s43, %s44
      %p48 = pneg %p42
      %p49 = scmp.eq.s32.totalorder %s19, 2
      %p50 = por %p48, %p49
      %p51 = scmp.ne.s32.totalorder %s43, %s46
      %p52 = scmp.eq.s32.totalorder %s19, 0
      %p53 = por %p51, %p52
      %p54 = scmp.ne.s32.totalorder %s43, %s46
      %p55 = scmp.eq.s32.totalorder %s24, 2
      %p56 = por %p54, %p55
      %p57 = scmp.ne.s32.totalorder %s46, %s47
      %p58 = scmp.eq.s32.totalorder %s24, 0
      %p59 = por %p57, %p58
      %p60 = scmp.ne.s32.totalorder %s46, %s47
      %p61 = scmp.eq.s32.totalorder %s25, 2
      %p62 = por %p60, %p61
      %p64 = scmp.ne.s32.totalorder %s47, %s63
      %p65 = scmp.eq.s32.totalorder %s25, 0
      %p66 = por %p64, %p65
      %s68 = sadd.s32 %s67, 1
      %p71 = scmp.eq.s32.totalorder %s19, 2
      %p72 = scmp.ne.s32.totalorder %s67, %s69
      %p73 = scmp.eq.s32.totalorder %s19, 0
      %p74 = por %p72, %p73
      %p75 = scmp.ne.s32.totalorder %s67, %s69
      %p76 = scmp.eq.s32.totalorder %s24, 2
      %p77 = por %p75, %p76
      %p78 = scmp.ne.s32.totalorder %s69, %s70
      %p79 = scmp.eq.s32.totalorder %s24, 0
      %p80 = por %p78, %p79
      %p81 = scmp.ne.s32.totalorder %s69, %s70
      %p82 = scmp.eq.s32.totalorder %s25, 2
      %p83 = por %p81, %p82
      %p85 = scmp.ne.s32.totalorder %s70, %s84
      %p86 = scmp.eq.s32.totalorder %s25, 0
      %p87 = por %p85, %p86
      %s88 = ssub.s32 %s27, %s34
      %s89 = ssub.s32 %s26, %s38
      %s90 = sor.u32 %s88, %s89
      %p91 = scmp.eq.s32.totalorder %s90, 0
      %s93 = sadd.s32 %s92, 1
      %s94 = scalar_select %p91, %s92, %s93
      %p97 = pneg %p91
      %p98 = scmp.eq.s32.totalorder %s19, 2
      %p99 = por %p97, %p98
      %p100 = scmp.ne.s32.totalorder %s92, %s95
      %p101 = scmp.eq.s32.totalorder %s19, 0
      %p102 = por %p100, %p101
      %p103 = scmp.ne.s32.totalorder %s92, %s95
      %p104 = scmp.eq.s32.totalorder %s24, 2
      %p105 = por %p103, %p104
      %p106 = scmp.ne.s32.totalorder %s95, %s96
      %p107 = scmp.eq.s32.totalorder %s24, 0
      %p108 = por %p106, %p107
      %p109 = scmp.ne.s32.totalorder %s95, %s96
      %p110 = scmp.eq.s32.totalorder %s25, 2
      %p111 = por %p109, %p110
      %p113 = scmp.ne.s32.totalorder %s96, %s112
      %p114 = scmp.eq.s32.totalorder %s25, 0
      %p115 = por %p113, %p114
      %s116 = ssub.s32 %s26, %s38
      %p117 = scmp.eq.s32.totalorder %s116, 0
      %s119 = sadd.s32 %s118, 1
      %s120 = scalar_select %p117, %s118, %s119
      %p123 = pneg %p117
      %p124 = scmp.eq.s32.totalorder %s19, 2
      %p125 = por %p123, %p124
      %p126 = scmp.ne.s32.totalorder %s118, %s121
      %p127 = scmp.eq.s32.totalorder %s19, 0
      %p128 = por %p126, %p127
      %p129 = scmp.ne.s32.totalorder %s118, %s121
      %p130 = scmp.eq.s32.totalorder %s24, 2
      %p131 = por %p129, %p130
      %p132 = scmp.ne.s32.totalorder %s121, %s122
      %p133 = scmp.eq.s32.totalorder %s24, 0
      %p134 = por %p132, %p133
      %p135 = scmp.ne.s32.totalorder %s121, %s122
      %p136 = scmp.eq.s32.totalorder %s25, 2
      %p137 = por %p135, %p136
      %p139 = scmp.ne.s32.totalorder %s122, %s138
      %p140 = scmp.eq.s32.totalorder %s25, 0
      %p141 = por %p139, %p140
      %s142 = ssub.s32 %s26, %s38
      %p143 = scmp.eq.s32.totalorder %s142, 0
      %s145 = sadd.s32 %s144, 1
      %s146 = scalar_select %p143, %s144, %s145
      %p149 = pneg %p143
      %p150 = scmp.eq.s32.totalorder %s19, 2
      %p151 = por %p149, %p150
      %p152 = scmp.ne.s32.totalorder %s144, %s147
      %p153 = scmp.eq.s32.totalorder %s19, 0
      %p154 = por %p152, %p153
      %p155 = scmp.ne.s32.totalorder %s144, %s147
      %p156 = scmp.eq.s32.totalorder %s24, 2
      %p157 = por %p155, %p156
      %p158 = scmp.ne.s32.totalorder %s147, %s148
      %p159 = scmp.eq.s32.totalorder %s24, 0
      %p160 = por %p158, %p159
      %p161 = scmp.ne.s32.totalorder %s147, %s148
      %p162 = scmp.eq.s32.totalorder %s25, 2
      %p163 = por %p161, %p162
      %p165 = scmp.ne.s32.totalorder %s148, %s164
      %p166 = scmp.eq.s32.totalorder %s25, 0
      %p167 = por %p165, %p166
      %p168 = scmp.le.s32.totalorder 1, %s19
      %p169 = scmp.lt.s32.totalorder %s19, 4
      %p170 = pnand %p168, %p169
      %p171 = pneg %p170
      // Predicated region
      $region9: #{tpu_custom_call.1} parent=5 // pred_check
        _
      $region10: #{tpu_custom_call.1} parent=5 // pred_check_branch
        %173 = sbr.rel (%p170) target = $region12
      $region11: #{tpu_custom_call.1} parent=5 // pred_region
        %s174 = ssub.s32 %s19, 1
        // Predicated region
        $region13: #{tpu_custom_call.1} parent=11 // pred_check
          %p175 = pneg %p80
        $region14: #{tpu_custom_call.1} parent=11 // pred_check_branch
          %177 = sbr.rel (%p175) target = $region16
        $region15: #{tpu_custom_call.1} parent=11 // pred_region
          %s179 = ssub.s32 4096, 4096
          %180 = vsyncadd [#allocation6], %s179
          %s181 = sshll.u32 [#allocation5], 4
          %s182 = int_to_ptr.vmem [resolvable:$true] %s181
          %187 = dma.hbm_to_vmem [thread:$0]  %s1, 4096, %s182, [#allocation6], 256, 256, 16
        $region16: #{tpu_custom_call.1} parent=11 // pred_fallthru
          _
      $region12: #{tpu_custom_call.1} parent=5 // pred_fallthru
        _
      %p188 = scmp.lt.s32.totalorder %s19, 3
      // Predicated region
      $region17: #{tpu_custom_call.1} parent=5 // pred_check
        %p189 = pneg %p188
      $region18: #{tpu_custom_call.1} parent=5 // pred_check_branch
        %191 = sbr.rel (%p189) target = $region20
      $region19: #{tpu_custom_call.1} parent=5 // pred_region
        // Predicated region
        $region21: #{tpu_custom_call.1} parent=19 // pred_check
          %p192 = pneg %p53
        $region22: #{tpu_custom_call.1} parent=19 // pred_check_branch
          %194 = sbr.rel (%p192) target = $region24
        $region23: #{tpu_custom_call.1} parent=19 // pred_region
          %s195 = sand.u32 %s43, 1
          %s196 = scalar_lea.sflag [#allocation3], %s195
          %s197 = sand.u32 %s43, 1
          %s198 = smul.addr %s197, 128
          %s199 = scalar_lea.vmem [#allocation2], %s198
          %s200 = smul.u32 4, %s27
          %s202 = ssub.s32 2048, 2048
          %203 = vsyncadd %s196, %s202
          %s204 = smul.addr %s26, 4
          %s205 = smul.addr %s200, 4
          %s206 = sadd.s32 %s204, %s205
          %s207 = smul.addr %s206, 128
          %s208 = scalar_lea.hbm %s0, %s207
          %s209 = sshll.u32 %s199, 4
          %s210 = int_to_ptr.vmem [resolvable:$true] %s209
          %215 = dma.hbm_to_vmem [thread:$0]  %s208, 2048, %s210, %s196, 512, 512, 32
        $region24: #{tpu_custom_call.1} parent=19 // pred_fallthru
          _
      $region20: #{tpu_custom_call.1} parent=5 // pred_fallthru
        _
      %p216 = scmp.le.s32.totalorder 1, %s19
      %p217 = scmp.lt.s32.totalorder %s19, 4
      %p218 = pnand %p216, %p217
      %p219 = pneg %p218
      // Predicated region
      $region25: #{tpu_custom_call.1} parent=5 // pred_check
        _
      $region26: #{tpu_custom_call.1} parent=5 // pred_check_branch
        %221 = sbr.rel (%p218) target = $region28
      $region27: #{tpu_custom_call.1} parent=5 // pred_region
        %s222 = ssub.s32 %s19, 1
        %s223 = sand.u32 %s46, 1
        %s224 = scalar_lea.sflag [#allocation3], %s223
        %s225 = sand.u32 %s46, 1
        %s226 = smul.addr %s225, 128
        %s227 = scalar_lea.vmem [#allocation2], %s226
        // Predicated region
        $region29: #{tpu_custom_call.1} parent=27 // pred_check
          %p228 = pneg %p59
        $region30: #{tpu_custom_call.1} parent=27 // pred_check_branch
          %230 = sbr.rel (%p228) target = $region32
        $region31: #{tpu_custom_call.1} parent=27 // pred_region
          %231 = dma.done %s224, 2048
        $region32: #{tpu_custom_call.1} parent=27 // pred_fallthru
          _
        // Predicated region
        $region33: #{tpu_custom_call.1} parent=27 // pred_check
          %p232 = pneg %p80
        $region34: #{tpu_custom_call.1} parent=27 // pred_check_branch
          %234 = sbr.rel (%p232) target = $region36
        $region35: #{tpu_custom_call.1} parent=27 // pred_region
          %235 = dma.done [#allocation6], 4096
        $region36: #{tpu_custom_call.1} parent=27 // pred_fallthru
          _
        %s236 = sand.u32 %s46, 1
        %s237 = scalar_lea.sflag [#allocation3], %s236
        %s238 = sand.u32 %s46, 1
        %s239 = smul.addr %s238, 128
        %s240 = scalar_lea.vmem [#allocation2], %s239
        %p241 = pneg %p59
        %p242 = pneg %p56
        %p243 = pneg %p80
        %p244 = pneg %p77
        %p245 = pneg %p108
        %p246 = pneg %p105
        %s247 = sand.u32 %s95, 1
        %s248 = scalar_lea.sflag [#allocation4], %s247
        %s249 = sand.u32 %s95, 1
        %s250 = smul.addr %s249, 32
        %s251 = scalar_lea.vmem [#allocation7], %s250
        %p252 = pneg %p134
        %p253 = pneg %p131
        %p254 = pneg %p160
        %p255 = pneg %p157
        %s256 = smul.u32 4, %s29
        %s257 = smul.u32 4, %s29
        %p259 = scmp.eq.s32.totalorder %s29, 0
        // Predicated region
        $region37: #{tpu_custom_call.1} parent=27 // pred_check
          %p260 = pneg %p259
        $region38: #{tpu_custom_call.1} parent=27 // pred_check_branch
          %262 = sbr.rel (%p260) target = $region40
        $region39: #{tpu_custom_call.1} parent=27 // pred_region
          %263 = vst [vmem:[#allocation8] sm:$0xff] 0.0
          %264 = vst [vmem:[#allocation10] sm:$0xff] 0.0
        $region40: #{tpu_custom_call.1} parent=27 // pred_fallthru
          _
        %v265 = vld [vmem:[#allocation8] sm:$0xff]
        %v266 = vld [vmem:[#allocation10] sm:$0xff]
        %v267 = vld [vmem:[%s227] sm:$0xff]
        %v268 = vld [vmem:[%s227 + $0x8] sm:$0xff]
        %v269 = vld [vmem:[%s227 + $0x10] sm:$0xff]
        %v270 = vld [vmem:[%s227 + $0x18] sm:$0xff]
        %v271 = vpack.c.bf16 %v265, %v265
        %v272 = vld [vmem:[#allocation5] sm:$0xff]
        %v273 = vld [vmem:[#allocation5 + $0x8] sm:$0xff]
        %v274 = vld [vmem:[#allocation5 + $0x10] sm:$0xff]
        %v275 = vld [vmem:[#allocation5 + $0x18] sm:$0xff]
        %v276 = vld [vmem:[#allocation5 + $0x20] sm:$0xff]
        %v277 = vld [vmem:[#allocation5 + $0x28] sm:$0xff]
        %v278 = vld [vmem:[#allocation5 + $0x30] sm:$0xff]
        %v279 = vld [vmem:[#allocation5 + $0x38] sm:$0xff]
        %v280 = vld [vmem:[#allocation5 + $0x40] sm:$0xff]
        %v281 = vld [vmem:[#allocation5 + $0x48] sm:$0xff]
        %v282 = vld [vmem:[#allocation5 + $0x50] sm:$0xff]
        %v283 = vld [vmem:[#allocation5 + $0x58] sm:$0xff]
        %v284 = vld [vmem:[#allocation5 + $0x60] sm:$0xff]
        %v285 = vld [vmem:[#allocation5 + $0x68] sm:$0xff]
        %v286 = vld [vmem:[#allocation5 + $0x70] sm:$0xff]
        %v287 = vld [vmem:[#allocation5 + $0x78] sm:$0xff]
        %v288 = vld [vmem:[#allocation5 + $0x80] sm:$0xff]
        %v289 = vld [vmem:[#allocation5 + $0x88] sm:$0xff]
        %v290 = vld [vmem:[#allocation5 + $0x90] sm:$0xff]
        %v291 = vld [vmem:[#allocation5 + $0x98] sm:$0xff]
        %v292 = vld [vmem:[#allocation5 + $0xa0] sm:$0xff]
        %v293 = vld [vmem:[#allocation5 + $0xa8] sm:$0xff]
        %v294 = vld [vmem:[#allocation5 + $0xb0] sm:$0xff]
        %v295 = vld [vmem:[#allocation5 + $0xb8] sm:$0xff]
        %v296 = vld [vmem:[#allocation5 + $0xc0] sm:$0xff]
        %v297 = vld [vmem:[#allocation5 + $0xc8] sm:$0xff]
        %v298 = vld [vmem:[#allocation5 + $0xd0] sm:$0xff]
        %v299 = vld [vmem:[#allocation5 + $0xd8] sm:$0xff]
        %v300 = vld [vmem:[#allocation5 + $0xe0] sm:$0xff]
        %v301 = vld [vmem:[#allocation5 + $0xe8] sm:$0xff]
        %v302 = vld [vmem:[#allocation5 + $0xf0] sm:$0xff]
        %v303 = vld [vmem:[#allocation5 + $0xf8] sm:$0xff]
        %v336 = vunpack.c.l.b16 %v272
        %v337 = vunpack.c.h.b16 %v272
        %v338 = vunpack.c.l.b16 %v273
        %v339 = vunpack.c.h.b16 %v273
        %v340 = vunpack.c.l.b16 %v274
        %v341 = vunpack.c.h.b16 %v274
        %v342 = vunpack.c.l.b16 %v275
        %v343 = vunpack.c.h.b16 %v275
        %v344 = vunpack.c.l.b16 %v276
        %v345 = vunpack.c.h.b16 %v276
        %v346 = vunpack.c.l.b16 %v277
        %v347 = vunpack.c.h.b16 %v277
        %v348 = vunpack.c.l.b16 %v278
        %v349 = vunpack.c.h.b16 %v278
        %v350 = vunpack.c.l.b16 %v279
        %v351 = vunpack.c.h.b16 %v279
        %v352 = vunpack.c.l.b16 %v280
        %v353 = vunpack.c.h.b16 %v280
        %v354 = vunpack.c.l.b16 %v281
        %v355 = vunpack.c.h.b16 %v281
        %v356 = vunpack.c.l.b16 %v282
        %v357 = vunpack.c.h.b16 %v282
        %v358 = vunpack.c.l.b16 %v283
        %v359 = vunpack.c.h.b16 %v283
        %v360 = vunpack.c.l.b16 %v284
        %v361 = vunpack.c.h.b16 %v284
        %v362 = vunpack.c.l.b16 %v285
        %v363 = vunpack.c.h.b16 %v285
        %v364 = vunpack.c.l.b16 %v286
        %v365 = vunpack.c.h.b16 %v286
        %v366 = vunpack.c.l.b16 %v287
        %v367 = vunpack.c.h.b16 %v287
        %v368 = vunpack.c.l.b16 %v288
        %v369 = vunpack.c.h.b16 %v288
        %v370 = vunpack.c.l.b16 %v289
        %v371 = vunpack.c.h.b16 %v289
        %v372 = vunpack.c.l.b16 %v290
        %v373 = vunpack.c.h.b16 %v290
        %v374 = vunpack.c.l.b16 %v291
        %v375 = vunpack.c.h.b16 %v291
        %v376 = vunpack.c.l.b16 %v292
        %v377 = vunpack.c.h.b16 %v292
        %v378 = vunpack.c.l.b16 %v293
        %v379 = vunpack.c.h.b16 %v293
        %v380 = vunpack.c.l.b16 %v294
        %v381 = vunpack.c.h.b16 %v294
        %v382 = vunpack.c.l.b16 %v295
        %v383 = vunpack.c.h.b16 %v295
        %v384 = vunpack.c.l.b16 %v296
        %v385 = vunpack.c.h.b16 %v296
        %v386 = vunpack.c.l.b16 %v297
        %v387 = vunpack.c.h.b16 %v297
        %v388 = vunpack.c.l.b16 %v298
        %v389 = vunpack.c.h.b16 %v298
        %v390 = vunpack.c.l.b16 %v299
        %v391 = vunpack.c.h.b16 %v299
        %v392 = vunpack.c.l.b16 %v300
        %v393 = vunpack.c.h.b16 %v300
        %v394 = vunpack.c.l.b16 %v301
        %v395 = vunpack.c.h.b16 %v301
        %v396 = vunpack.c.l.b16 %v302
        %v397 = vunpack.c.h.b16 %v302
        %v398 = vunpack.c.l.b16 %v303
        %v399 = vunpack.c.h.b16 %v303
        %v400 = vpack.c.b16 %v340, %v336
        %v401 = vpack.c.b16 %v341, %v337
        %v402 = vpack.c.b16 %v342, %v338
        %v403 = vpack.c.b16 %v343, %v339
        %v404 = vpack.c.b16 %v348, %v344
        %v405 = vpack.c.b16 %v349, %v345
        %v406 = vpack.c.b16 %v350, %v346
        %v407 = vpack.c.b16 %v351, %v347
        %v408 = vpack.c.b16 %v356, %v352
        %v409 = vpack.c.b16 %v357, %v353
        %v410 = vpack.c.b16 %v358, %v354
        %v411 = vpack.c.b16 %v359, %v355
        %v412 = vpack.c.b16 %v364, %v360
        %v413 = vpack.c.b16 %v365, %v361
        %v414 = vpack.c.b16 %v366, %v362
        %v415 = vpack.c.b16 %v367, %v363
        %v416 = vpack.c.b16 %v372, %v368
        %v417 = vpack.c.b16 %v373, %v369
        %v418 = vpack.c.b16 %v374, %v370
        %v419 = vpack.c.b16 %v375, %v371
        %v420 = vpack.c.b16 %v380, %v376
        %v421 = vpack.c.b16 %v381, %v377
        %v422 = vpack.c.b16 %v382, %v378
        %v423 = vpack.c.b16 %v383, %v379
        %v424 = vpack.c.b16 %v388, %v384
        %v425 = vpack.c.b16 %v389, %v385
        %v426 = vpack.c.b16 %v390, %v386
        %v427 = vpack.c.b16 %v391, %v387
        %v428 = vpack.c.b16 %v396, %v392
        %v429 = vpack.c.b16 %v397, %v393
        %v430 = vpack.c.b16 %v398, %v394
        %v431 = vpack.c.b16 %v399, %v395
        %464 = vmatprep.subr.bf16.mxu0 %v401
        %465 = vmatpush1.bf16.msra.mxu0 %v400
        %466 = vmatprep.subr.bf16.mxu0 %v405
        %467 = vmatpush1.bf16.msra.mxu0 %v404
        %468 = vmatprep.subr.bf16.mxu0 %v409
        %469 = vmatpush1.bf16.msra.mxu0 %v408
        %470 = vmatprep.subr.bf16.mxu0 %v413
        %471 = vmatpush1.bf16.msra.mxu0 %v412
        %472 = vmatprep.subr.bf16.mxu0 %v417
        %473 = vmatpush1.bf16.msra.mxu0 %v416
        %474 = vmatprep.subr.bf16.mxu0 %v421
        %475 = vmatpush1.bf16.msra.mxu0 %v420
        %476 = vmatprep.subr.bf16.mxu0 %v425
        %477 = vmatpush1.bf16.msra.mxu0 %v424
        %478 = vmatprep.subr.bf16.mxu0 %v429
        %479 = vmatpush1.bf16.msra.mxu0 %v428
        %480 = vmatprep.subr.bf16.mxu0 0
        %481 = vmatpush1.bf16.msra.mxu0 0
        %482 = vmatprep.subr.bf16.mxu0 0
        %483 = vmatpush1.bf16.msra.mxu0 0
        %484 = vmatprep.subr.bf16.mxu0 0
        %485 = vmatpush1.bf16.msra.mxu0 0
        %486 = vmatprep.subr.bf16.mxu0 0
        %487 = vmatpush1.bf16.msra.mxu0 0
        %488 = vmatprep.subr.bf16.mxu0 0
        %489 = vmatpush1.bf16.msra.mxu0 0
        %490 = vmatprep.subr.bf16.mxu0 0
        %491 = vmatpush1.bf16.msra.mxu0 0
        %492 = vmatprep.subr.bf16.mxu0 0
        %493 = vmatpush1.bf16.msra.mxu0 0
        %494 = vmatprep.subr.bf16.mxu0 0
        %495 = vmatpush1.bf16.msra.mxu0 0
        %496 = vmatprep.mubr.bf16.mxu0 0
        %497 = vmatmul.mubr.bf16.gmra.mrb[0].mxu0 %v271
        %v498 = vpop.f32.mrb[0].mxu0
        %v499 = vadd.f32 0.0, %v498
        %v500 = vpop.f32.mrb[0].mxu0
        %v501 = vadd.f32 0.0, %v500
        %v502 = vpop.f32.mrb[0].mxu0
        %v503 = vpop.f32.mrb[0].mxu0
        %504 = vdwg.mxu0
        %505 = vmatprep.subr.bf16.mxu0 %v403
        %506 = vmatpush1.bf16.msra.mxu0 %v402
        %507 = vmatprep.subr.bf16.mxu0 %v407
        %508 = vmatpush1.bf16.msra.mxu0 %v406
        %509 = vmatprep.subr.bf16.mxu0 %v411
        %510 = vmatpush1.bf16.msra.mxu0 %v410
        %511 = vmatprep.subr.bf16.mxu0 %v415
        %512 = vmatpush1.bf16.msra.mxu0 %v414
        %513 = vmatprep.subr.bf16.mxu0 %v419
        %514 = vmatpush1.bf16.msra.mxu0 %v418
        %515 = vmatprep.subr.bf16.mxu0 %v423
        %516 = vmatpush1.bf16.msra.mxu0 %v422
        %517 = vmatprep.subr.bf16.mxu0 %v427
        %518 = vmatpush1.bf16.msra.mxu0 %v426
        %519 = vmatprep.subr.bf16.mxu0 %v431
        %520 = vmatpush1.bf16.msra.mxu0 %v430
        %521 = vmatprep.subr.bf16.mxu0 0
        %522 = vmatpush1.bf16.msra.mxu0 0
        %523 = vmatprep.subr.bf16.mxu0 0
        %524 = vmatpush1.bf16.msra.mxu0 0
        %525 = vmatprep.subr.bf16.mxu0 0
        %526 = vmatpush1.bf16.msra.mxu0 0
        %527 = vmatprep.subr.bf16.mxu0 0
        %528 = vmatpush1.bf16.msra.mxu0 0
        %529 = vmatprep.subr.bf16.mxu0 0
        %530 = vmatpush1.bf16.msra.mxu0 0
        %531 = vmatprep.subr.bf16.mxu0 0
        %532 = vmatpush1.bf16.msra.mxu0 0
        %533 = vmatprep.subr.bf16.mxu0 0
        %534 = vmatpush1.bf16.msra.mxu0 0
        %535 = vmatprep.subr.bf16.mxu0 0
        %536 = vmatpush1.bf16.msra.mxu0 0
        %537 = vmatprep.mubr.bf16.mxu0 0
        %538 = vmatmul.mubr.bf16.gmra.mrb[0].mxu0 %v271
        %v539 = vpop.f32.mrb[0].mxu0
        %v540 = vadd.f32 0.0, %v539
        %v541 = vpop.f32.mrb[0].mxu0
        %v542 = vadd.f32 0.0, %v541
        %v543 = vpop.f32.mrb[0].mxu0
        %v544 = vpop.f32.mrb[0].mxu0
        %545 = vdwg.mxu0
        %v546 = vadd.f32 %v267, %v499
        %v547 = vadd.f32 %v268, %v501
        %v548 = vadd.f32 %v269, %v540
        %v549 = vadd.f32 %v270, %v542
        %v550 = vxor.u32 %v546, 2147483648
        %v551 = vmul.f32 %v550, 1.442695
        %v552 = vpow.pop %v551
        %v553 = vadd.f32 %v552, 1.0
        %v554 = vrcp.pop %v553
        %v555 = vmul.f32 1.0, %v554
        %v556 = vxor.u32 %v547, 2147483648
        %v557 = vmul.f32 %v556, 1.442695
        %v558 = vpow.pop %v557
        %v559 = vadd.f32 %v558, 1.0
        %v560 = vrcp.pop %v559
        %v561 = vmul.f32 1.0, %v560
        %v562 = vtanh.pop %v548
        %v563 = vxor.u32 %v549, 2147483648
        %v564 = vmul.f32 %v563, 1.442695
        %v565 = vpow.pop %v564
        %v566 = vadd.f32 %v565, 1.0
        %v567 = vrcp.pop %v566
        %v568 = vmul.f32 1.0, %v567
        %v569 = vmul.f32 %v561, %v266
        %v570 = vmul.f32 %v555, %v562
        %v571 = vadd.f32 %v569, %v570
        %v572 = vtanh.pop %v571
        %v573 = vmul.f32 %v568, %v572
        %s574 = smul.u32 %s29, 4
        %p575 = scmp.lt.s32.totalorder %s574, 10
        %s576 = scalar_select %p575, 1, 0
        %v577 = vstv %s576
        %vm578 = vcmp.eq.s32.totalorder %v577, 1
        %v579 = vsel %vm578, %v571, %v266
        %v580 = vsel %vm578, %v573, %v265
        %581 = vst [vmem:[#allocation10] sm:$0xff] %v579
        %582 = vst [vmem:[#allocation8] sm:$0xff] %v580
        %583 = vst [vmem:[%s251] sm:$0xff] %v580
        %v584 = vld [vmem:[#allocation8] sm:$0xff]
        %v585 = vld [vmem:[#allocation10] sm:$0xff]
        %s586 = scalar_lea.vmem %s227, 32 [#allocation2]
        %v587 = vld [vmem:[%s586] sm:$0xff]
        %v588 = vld [vmem:[%s586 + $0x8] sm:$0xff]
        %v589 = vld [vmem:[%s586 + $0x10] sm:$0xff]
        %v590 = vld [vmem:[%s586 + $0x18] sm:$0xff]
        %v591 = vpack.c.bf16 %v584, %v584
        %v592 = vld [vmem:[#allocation5] sm:$0xff]
        %v593 = vld [vmem:[#allocation5 + $0x8] sm:$0xff]
        %v594 = vld [vmem:[#allocation5 + $0x10] sm:$0xff]
        %v595 = vld [vmem:[#allocation5 + $0x18] sm:$0xff]
        %v596 = vld [vmem:[#allocation5 + $0x20] sm:$0xff]
        %v597 = vld [vmem:[#allocation5 + $0x28] sm:$0xff]
        %v598 = vld [vmem:[#allocation5 + $0x30] sm:$0xff]
        %v599 = vld [vmem:[#allocation5 + $0x38] sm:$0xff]
        %v600 = vld [vmem:[#allocation5 + $0x40] sm:$0xff]
        %v601 = vld [vmem:[#allocation5 + $0x48] sm:$0xff]
        %v602 = vld [vmem:[#allocation5 + $0x50] sm:$0xff]
        %v603 = vld [vmem:[#allocation5 + $0x58] sm:$0xff]
        %v604 = vld [vmem:[#allocation5 + $0x60] sm:$0xff]
        %v605 = vld [vmem:[#allocation5 + $0x68] sm:$0xff]
        %v606 = vld [vmem:[#allocation5 + $0x70] sm:$0xff]
        %v607 = vld [vmem:[#allocation5 + $0x78] sm:$0xff]
        %v608 = vld [vmem:[#allocation5 + $0x80] sm:$0xff]
        %v609 = vld [vmem:[#allocation5 + $0x88] sm:$0xff]
        %v610 = vld [vmem:[#allocation5 + $0x90] sm:$0xff]
        %v611 = vld [vmem:[#allocation5 + $0x98] sm:$0xff]
        %v612 = vld [vmem:[#allocation5 + $0xa0] sm:$0xff]
        %v613 = vld [vmem:[#allocation5 + $0xa8] sm:$0xff]
        %v614 = vld [vmem:[#allocation5 + $0xb0] sm:$0xff]
        %v615 = vld [vmem:[#allocation5 + $0xb8] sm:$0xff]
        %v616 = vld [vmem:[#allocation5 + $0xc0] sm:$0xff]
        %v617 = vld [vmem:[#allocation5 + $0xc8] sm:$0xff]
        %v618 = vld [vmem:[#allocation5 + $0xd0] sm:$0xff]
        %v619 = vld [vmem:[#allocation5 + $0xd8] sm:$0xff]
        %v620 = vld [vmem:[#allocation5 + $0xe0] sm:$0xff]
        %v621 = vld [vmem:[#allocation5 + $0xe8] sm:$0xff]
        %v622 = vld [vmem:[#allocation5 + $0xf0] sm:$0xff]
        %v623 = vld [vmem:[#allocation5 + $0xf8] sm:$0xff]
        %v656 = vunpack.c.l.b16 %v592
        %v657 = vunpack.c.h.b16 %v592
        %v658 = vunpack.c.l.b16 %v593
        %v659 = vunpack.c.h.b16 %v593
        %v660 = vunpack.c.l.b16 %v594
        %v661 = vunpack.c.h.b16 %v594
        %v662 = vunpack.c.l.b16 %v595
        %v663 = vunpack.c.h.b16 %v595
        %v664 = vunpack.c.l.b16 %v596
        %v665 = vunpack.c.h.b16 %v596
        %v666 = vunpack.c.l.b16 %v597
        %v667 = vunpack.c.h.b16 %v597
        %v668 = vunpack.c.l.b16 %v598
        %v669 = vunpack.c.h.b16 %v598
        %v670 = vunpack.c.l.b16 %v599
        %v671 = vunpack.c.h.b16 %v599
        %v672 = vunpack.c.l.b16 %v600
        %v673 = vunpack.c.h.b16 %v600
        %v674 = vunpack.c.l.b16 %v601
        %v675 = vunpack.c.h.b16 %v601
        %v676 = vunpack.c.l.b16 %v602
        %v677 = vunpack.c.h.b16 %v602
        %v678 = vunpack.c.l.b16 %v603
        %v679 = vunpack.c.h.b16 %v603
        %v680 = vunpack.c.l.b16 %v604
        %v681 = vunpack.c.h.b16 %v604
        %v682 = vunpack.c.l.b16 %v605
        %v683 = vunpack.c.h.b16 %v605
        %v684 = vunpack.c.l.b16 %v606
        %v685 = vunpack.c.h.b16 %v606
        %v686 = vunpack.c.l.b16 %v607
        %v687 = vunpack.c.h.b16 %v607
        %v688 = vunpack.c.l.b16 %v608
        %v689 = vunpack.c.h.b16 %v608
        %v690 = vunpack.c.l.b16 %v609
        %v691 = vunpack.c.h.b16 %v609
        %v692 = vunpack.c.l.b16 %v610
        %v693 = vunpack.c.h.b16 %v610
        %v694 = vunpack.c.l.b16 %v611
        %v695 = vunpack.c.h.b16 %v611
        %v696 = vunpack.c.l.b16 %v612
        %v697 = vunpack.c.h.b16 %v612
        %v698 = vunpack.c.l.b16 %v613
        %v699 = vunpack.c.h.b16 %v613
        %v700 = vunpack.c.l.b16 %v614
        %v701 = vunpack.c.h.b16 %v614
        %v702 = vunpack.c.l.b16 %v615
        %v703 = vunpack.c.h.b16 %v615
        %v704 = vunpack.c.l.b16 %v616
        %v705 = vunpack.c.h.b16 %v616
        %v706 = vunpack.c.l.b16 %v617
        %v707 = vunpack.c.h.b16 %v617
        %v708 = vunpack.c.l.b16 %v618
        %v709 = vunpack.c.h.b16 %v618
        %v710 = vunpack.c.l.b16 %v619
        %v711 = vunpack.c.h.b16 %v619
        %v712 = vunpack.c.l.b16 %v620
        %v713 = vunpack.c.h.b16 %v620
        %v714 = vunpack.c.l.b16 %v621
        %v715 = vunpack.c.h.b16 %v621
        %v716 = vunpack.c.l.b16 %v622
        %v717 = vunpack.c.h.b16 %v622
        %v718 = vunpack.c.l.b16 %v623
        %v719 = vunpack.c.h.b16 %v623
        %v720 = vpack.c.b16 %v660, %v656
        %v721 = vpack.c.b16 %v661, %v657
        %v722 = vpack.c.b16 %v662, %v658
        %v723 = vpack.c.b16 %v663, %v659
        %v724 = vpack.c.b16 %v668, %v664
        %v725 = vpack.c.b16 %v669, %v665
        %v726 = vpack.c.b16 %v670, %v666
        %v727 = vpack.c.b16 %v671, %v667
        %v728 = vpack.c.b16 %v676, %v672
        %v729 = vpack.c.b16 %v677, %v673
        %v730 = vpack.c.b16 %v678, %v674
        %v731 = vpack.c.b16 %v679, %v675
        %v732 = vpack.c.b16 %v684, %v680
        %v733 = vpack.c.b16 %v685, %v681
        %v734 = vpack.c.b16 %v686, %v682
        %v735 = vpack.c.b16 %v687, %v683
        %v736 = vpack.c.b16 %v692, %v688
        %v737 = vpack.c.b16 %v693, %v689
        %v738 = vpack.c.b16 %v694, %v690
        %v739 = vpack.c.b16 %v695, %v691
        %v740 = vpack.c.b16 %v700, %v696
        %v741 = vpack.c.b16 %v701, %v697
        %v742 = vpack.c.b16 %v702, %v698
        %v743 = vpack.c.b16 %v703, %v699
        %v744 = vpack.c.b16 %v708, %v704
        %v745 = vpack.c.b16 %v709, %v705
        %v746 = vpack.c.b16 %v710, %v706
        %v747 = vpack.c.b16 %v711, %v707
        %v748 = vpack.c.b16 %v716, %v712
        %v749 = vpack.c.b16 %v717, %v713
        %v750 = vpack.c.b16 %v718, %v714
        %v751 = vpack.c.b16 %v719, %v715
        %784 = vmatprep.subr.bf16.mxu0 %v721
        %785 = vmatpush1.bf16.msra.mxu0 %v720
        %786 = vmatprep.subr.bf16.mxu0 %v725
        %787 = vmatpush1.bf16.msra.mxu0 %v724
        %788 = vmatprep.subr.bf16.mxu0 %v729
        %789 = vmatpush1.bf16.msra.mxu0 %v728
        %790 = vmatprep.subr.bf16.mxu0 %v733
        %791 = vmatpush1.bf16.msra.mxu0 %v732
        %792 = vmatprep.subr.bf16.mxu0 %v737
        %793 = vmatpush1.bf16.msra.mxu0 %v736
        %794 = vmatprep.subr.bf16.mxu0 %v741
        %795 = vmatpush1.bf16.msra.mxu0 %v740
        %796 = vmatprep.subr.bf16.mxu0 %v745
        %797 = vmatpush1.bf16.msra.mxu0 %v744
        %798 = vmatprep.subr.bf16.mxu0 %v749
        %799 = vmatpush1.bf16.msra.mxu0 %v748
        %800 = vmatprep.subr.bf16.mxu0 0
        %801 = vmatpush1.bf16.msra.mxu0 0
        %802 = vmatprep.subr.bf16.mxu0 0
        %803 = vmatpush1.bf16.msra.mxu0 0
        %804 = vmatprep.subr.bf16.mxu0 0
        %805 = vmatpush1.bf16.msra.mxu0 0
        %806 = vmatprep.subr.bf16.mxu0 0
        %807 = vmatpush1.bf16.msra.mxu0 0
        %808 = vmatprep.subr.bf16.mxu0 0
        %809 = vmatpush1.bf16.msra.mxu0 0
        %810 = vmatprep.subr.bf16.mxu0 0
        %811 = vmatpush1.bf16.msra.mxu0 0
        %812 = vmatprep.subr.bf16.mxu0 0
        %813 = vmatpush1.bf16.msra.mxu0 0
        %814 = vmatprep.subr.bf16.mxu0 0
        %815 = vmatpush1.bf16.msra.mxu0 0
        %816 = vmatprep.mubr.bf16.mxu0 0
        %817 = vmatmul.mubr.bf16.gmra.mrb[0].mxu0 %v591
        %v818 = vpop.f32.mrb[0].mxu0
        %v819 = vadd.f32 0.0, %v818
        %v820 = vpop.f32.mrb[0].mxu0
        %v821 = vadd.f32 0.0, %v820
        %v822 = vpop.f32.mrb[0].mxu0
        %v823 = vpop.f32.mrb[0].mxu0
        %824 = vdwg.mxu0
        %825 = vmatprep.subr.bf16.mxu0 %v723
        %826 = vmatpush1.bf16.msra.mxu0 %v722
        %827 = vmatprep.subr.bf16.mxu0 %v727
        %828 = vmatpush1.bf16.msra.mxu0 %v726
        %829 = vmatprep.subr.bf16.mxu0 %v731
        %830 = vmatpush1.bf16.msra.mxu0 %v730
        %831 = vmatprep.subr.bf16.mxu0 %v735
        %832 = vmatpush1.bf16.msra.mxu0 %v734
        %833 = vmatprep.subr.bf16.mxu0 %v739
        %834 = vmatpush1.bf16.msra.mxu0 %v738
        %835 = vmatprep.subr.bf16.mxu0 %v743
        %836 = vmatpush1.bf16.msra.mxu0 %v742
        %837 = vmatprep.subr.bf16.mxu0 %v747
        %838 = vmatpush1.bf16.msra.mxu0 %v746
        %839 = vmatprep.subr.bf16.mxu0 %v751
        %840 = vmatpush1.bf16.msra.mxu0 %v750
        %841 = vmatprep.subr.bf16.mxu0 0
        %842 = vmatpush1.bf16.msra.mxu0 0
        %843 = vmatprep.subr.bf16.mxu0 0
        %844 = vmatpush1.bf16.msra.mxu0 0
        %845 = vmatprep.subr.bf16.mxu0 0
        %846 = vmatpush1.bf16.msra.mxu0 0
        %847 = vmatprep.subr.bf16.mxu0 0
        %848 = vmatpush1.bf16.msra.mxu0 0
        %849 = vmatprep.subr.bf16.mxu0 0
        %850 = vmatpush1.bf16.msra.mxu0 0
        %851 = vmatprep.subr.bf16.mxu0 0
        %852 = vmatpush1.bf16.msra.mxu0 0
        %853 = vmatprep.subr.bf16.mxu0 0
        %854 = vmatpush1.bf16.msra.mxu0 0
        %855 = vmatprep.subr.bf16.mxu0 0
        %856 = vmatpush1.bf16.msra.mxu0 0
        %857 = vmatprep.mubr.bf16.mxu0 0
        %858 = vmatmul.mubr.bf16.gmra.mrb[0].mxu0 %v591
        %v859 = vpop.f32.mrb[0].mxu0
        %v860 = vadd.f32 0.0, %v859
        %v861 = vpop.f32.mrb[0].mxu0
        %v862 = vadd.f32 0.0, %v861
        %v863 = vpop.f32.mrb[0].mxu0
        %v864 = vpop.f32.mrb[0].mxu0
        %865 = vdwg.mxu0
        %v866 = vadd.f32 %v587, %v819
        %v867 = vadd.f32 %v588, %v821
        %v868 = vadd.f32 %v589, %v860
        %v869 = vadd.f32 %v590, %v862
        %v870 = vxor.u32 %v866, 2147483648
        %v871 = vmul.f32 %v870, 1.442695
        %v872 = vpow.pop %v871
        %v873 = vadd.f32 %v872, 1.0
        %v874 = vrcp.pop %v873
        %v875 = vmul.f32 1.0, %v874
        %v876 = vxor.u32 %v867, 2147483648
        %v877 = vmul.f32 %v876, 1.442695
        %v878 = vpow.pop %v877
        %v879 = vadd.f32 %v878, 1.0
        %v880 = vrcp.pop %v879
        %v881 = vmul.f32 1.0, %v880
        %v882 = vtanh.pop %v868
        %v883 = vxor.u32 %v869, 2147483648
        %v884 = vmul.f32 %v883, 1.442695
        %v885 = vpow.pop %v884
        %v886 = vadd.f32 %v885, 1.0
        %v887 = vrcp.pop %v886
        %v888 = vmul.f32 1.0, %v887
        %v889 = vmul.f32 %v881, %v585
        %v890 = vmul.f32 %v875, %v882
        %v891 = vadd.f32 %v889, %v890
        %v892 = vtanh.pop %v891
        %v893 = vmul.f32 %v888, %v892
        %s894 = sadd.s32 %s574, 1
        %p895 = scmp.lt.s32.totalorder %s894, 10
        %s896 = scalar_select %p895, 1, 0
        %v897 = vstv %s896
        %vm898 = vcmp.eq.s32.totalorder %v897, 1
        %v899 = vsel %vm898, %v891, %v585
        %v900 = vsel %vm898, %v893, %v584
        %901 = vst [vmem:[#allocation10] sm:$0xff] %v899
        %902 = vst [vmem:[#allocation8] sm:$0xff] %v900
        %s903 = scalar_lea.vmem %s251, 8 [#allocation7]
        %904 = vst [vmem:[%s903] sm:$0xff] %v900
        %v905 = vld [vmem:[#allocation8] sm:$0xff]
        %v906 = vld [vmem:[#allocation10] sm:$0xff]
        %s907 = scalar_lea.vmem %s227, 64 [#allocation2]
        %v908 = vld [vmem:[%s907] sm:$0xff]
        %v909 = vld [vmem:[%s907 + $0x8] sm:$0xff]
        %v910 = vld [vmem:[%s907 + $0x10] sm:$0xff]
        %v911 = vld [vmem:[%s907 + $0x18] sm:$0xff]
        %v912 = vpack.c.bf16 %v905, %v905
        %v913 = vld [vmem:[#allocation5] sm:$0xff]
        %v914 = vld [vmem:[#allocation5 + $0x8] sm:$0xff]
        %v915 = vld [vmem:[#allocation5 + $0x10] sm:$0xff]
        %v916 = vld [vmem:[#allocation5 + $0x18] sm:$0xff]
        %v917 = vld [vmem:[#allocation5 + $0x20] sm:$0xff]
        %v918 = vld [vmem:[#allocation5 + $0x28] sm:$0xff]
        %v919 = vld [vmem:[#allocation5 + $0x30] sm:$0xff]
        %v920 = vld [vmem:[#allocation5 + $0x38] sm:$0xff]
        %v921 = vld [vmem:[#allocation5 + $0x40] sm:$0xff]
        %v922 = vld [vmem:[#allocation5 + $0x48] sm:$0xff]
        %v923 = vld [vmem:[#allocation5 + $0x50] sm:$0xff]
        %v924 = vld [vmem:[#allocation5 + $0x58] sm:$0xff]
        %v925 = vld [vmem:[#allocation5 + $0x60] sm:$0xff]
        %v926 = vld [vmem:[#allocation5 + $0x68] sm:$0xff]
        %v927 = vld [vmem:[#allocation5 + $0x70] sm:$0xff]
        %v928 = vld [vmem:[#allocation5 + $0x78] sm:$0xff]
        %v929 = vld [vmem:[#allocation5 + $0x80] sm:$0xff]
        %v930 = vld [vmem:[#allocation5 + $0x88] sm:$0xff]
        %v931 = vld [vmem:[#allocation5 + $0x90] sm:$0xff]
        %v932 = vld [vmem:[#allocation5 + $0x98] sm:$0xff]
        %v933 = vld [vmem:[#allocation5 + $0xa0] sm:$0xff]
        %v934 = vld [vmem:[#allocation5 + $0xa8] sm:$0xff]
        %v935 = vld [vmem:[#allocation5 + $0xb0] sm:$0xff]
        %v936 = vld [vmem:[#allocation5 + $0xb8] sm:$0xff]
        %v937 = vld [vmem:[#allocation5 + $0xc0] sm:$0xff]
        %v938 = vld [vmem:[#allocation5 + $0xc8] sm:$0xff]
        %v939 = vld [vmem:[#allocation5 + $0xd0] sm:$0xff]
        %v940 = vld [vmem:[#allocation5 + $0xd8] sm:$0xff]
        %v941 = vld [vmem:[#allocation5 + $0xe0] sm:$0xff]
        %v942 = vld [vmem:[#allocation5 + $0xe8] sm:$0xff]
        %v943 = vld [vmem:[#allocation5 + $0xf0] sm:$0xff]
        %v944 = vld [vmem:[#allocation5 + $0xf8] sm:$0xff]
        %v977 = vunpack.c.l.b16 %v913
        %v978 = vunpack.c.h.b16 %v913
        %v979 = vunpack.c.l.b16 %v914
        %v980 = vunpack.c.h.b16 %v914
        %v981 = vunpack.c.l.b16 %v915
        %v982 = vunpack.c.h.b16 %v915
        %v983 = vunpack.c.l.b16 %v916
        %v984 = vunpack.c.h.b16 %v916
        %v985 = vunpack.c.l.b16 %v917
        %v986 = vunpack.c.h.b16 %v917
        %v987 = vunpack.c.l.b16 %v918
        %v988 = vunpack.c.h.b16 %v918
        %v989 = vunpack.c.l.b16 %v919
        %v990 = vunpack.c.h.b16 %v919
        %v991 = vunpack.c.l.b16 %v920
        %v992 = vunpack.c.h.b16 %v920
        %v993 = vunpack.c.l.b16 %v921
        %v994 = vunpack.c.h.b16 %v921
        %v995 = vunpack.c.l.b16 %v922
        %v996 = vunpack.c.h.b16 %v922
        %v997 = vunpack.c.l.b16 %v923
        %v998 = vunpack.c.h.b16 %v923
        %v999 = vunpack.c.l.b16 %v924
        %v1000 = vunpack.c.h.b16 %v924
        %v1001 = vunpack.c.l.b16 %v925
        %v1002 = vunpack.c.h.b16 %v925
        %v1003 = vunpack.c.l.b16 %v926
        %v1004 = vunpack.c.h.b16 %v926
        %v1005 = vunpack.c.l.b16 %v927
        %v1006 = vunpack.c.h.b16 %v927
        %v1007 = vunpack.c.l.b16 %v928
        %v1008 = vunpack.c.h.b16 %v928
        %v1009 = vunpack.c.l.b16 %v929
        %v1010 = vunpack.c.h.b16 %v929
        %v1011 = vunpack.c.l.b16 %v930
        %v1012 = vunpack.c.h.b16 %v930
        %v1013 = vunpack.c.l.b16 %v931
        %v1014 = vunpack.c.h.b16 %v931
        %v1015 = vunpack.c.l.b16 %v932
        %v1016 = vunpack.c.h.b16 %v932
        %v1017 = vunpack.c.l.b16 %v933
        %v1018 = vunpack.c.h.b16 %v933
        %v1019 = vunpack.c.l.b16 %v934
        %v1020 = vunpack.c.h.b16 %v934
        %v1021 = vunpack.c.l.b16 %v935
        %v1022 = vunpack.c.h.b16 %v935
        %v1023 = vunpack.c.l.b16 %v936
        %v1024 = vunpack.c.h.b16 %v936
        %v1025 = vunpack.c.l.b16 %v937
        %v1026 = vunpack.c.h.b16 %v937
        %v1027 = vunpack.c.l.b16 %v938
        %v1028 = vunpack.c.h.b16 %v938
        %v1029 = vunpack.c.l.b16 %v939
        %v1030 = vunpack.c.h.b16 %v939
        %v1031 = vunpack.c.l.b16 %v940
        %v1032 = vunpack.c.h.b16 %v940
        %v1033 = vunpack.c.l.b16 %v941
        %v1034 = vunpack.c.h.b16 %v941
        %v1035 = vunpack.c.l.b16 %v942
        %v1036 = vunpack.c.h.b16 %v942
        %v1037 = vunpack.c.l.b16 %v943
        %v1038 = vunpack.c.h.b16 %v943
        %v1039 = vunpack.c.l.b16 %v944
        %v1040 = vunpack.c.h.b16 %v944
        %v1041 = vpack.c.b16 %v981, %v977
        %v1042 = vpack.c.b16 %v982, %v978
        %v1043 = vpack.c.b16 %v983, %v979
        %v1044 = vpack.c.b16 %v984, %v980
        %v1045 = vpack.c.b16 %v989, %v985
        %v1046 = vpack.c.b16 %v990, %v986
        %v1047 = vpack.c.b16 %v991, %v987
        %v1048 = vpack.c.b16 %v992, %v988
        %v1049 = vpack.c.b16 %v997, %v993
        %v1050 = vpack.c.b16 %v998, %v994
        %v1051 = vpack.c.b16 %v999, %v995
        %v1052 = vpack.c.b16 %v1000, %v996
        %v1053 = vpack.c.b16 %v1005, %v1001
        %v1054 = vpack.c.b16 %v1006, %v1002
        %v1055 = vpack.c.b16 %v1007, %v1003
        %v1056 = vpack.c.b16 %v1008, %v1004
        %v1057 = vpack.c.b16 %v1013, %v1009
        %v1058 = vpack.c.b16 %v1014, %v1010
        %v1059 = vpack.c.b16 %v1015, %v1011
        %v1060 = vpack.c.b16 %v1016, %v1012
        %v1061 = vpack.c.b16 %v1021, %v1017
        %v1062 = vpack.c.b16 %v1022, %v1018
        %v1063 = vpack.c.b16 %v1023, %v1019
        %v1064 = vpack.c.b16 %v1024, %v1020
        %v1065 = vpack.c.b16 %v1029, %v1025
        %v1066 = vpack.c.b16 %v1030, %v1026
        %v1067 = vpack.c.b16 %v1031, %v1027
        %v1068 = vpack.c.b16 %v1032, %v1028
        %v1069 = vpack.c.b16 %v1037, %v1033
        %v1070 = vpack.c.b16 %v1038, %v1034
        %v1071 = vpack.c.b16 %v1039, %v1035
        %v1072 = vpack.c.b16 %v1040, %v1036
        %1105 = vmatprep.subr.bf16.mxu0 %v1042
        %1106 = vmatpush1.bf16.msra.mxu0 %v1041
        %1107 = vmatprep.subr.bf16.mxu0 %v1046
        %1108 = vmatpush1.bf16.msra.mxu0 %v1045
        %1109 = vmatprep.subr.bf16.mxu0 %v1050
        %1110 = vmatpush1.bf16.msra.mxu0 %v1049
        %1111 = vmatprep.subr.bf16.mxu0 %v1054
        %1112 = vmatpush1.bf16.msra.mxu0 %v1053
        %1113 = vmatprep.subr.bf16.mxu0 %v1058
        %1114 = vmatpush1.bf16.msra.mxu0 %v1057
        %1115 = vmatprep.subr.bf16.mxu0 %v1062
        %1116 = vmatpush1.bf16.msra.mxu0 %v1061
        %1117 = vmatprep.subr.bf16.mxu0 %v1066
        %1118 = vmatpush1.bf16.msra.mxu0 %v1065
        %1119 = vmatprep.subr.bf16.mxu0 %v1070
        %1120 = vmatpush1.bf16.msra.mxu0 %v1069
        %1121 = vmatprep.subr.bf16.mxu0 0
        %1122 = vmatpush1.bf16.msra.mxu0 0
        %1123 = vmatprep.subr.bf16.mxu0 0
        %1124 = vmatpush1.bf16.msra.mxu0 0
        %1125 = vmatprep.subr.bf16.mxu0 0
        %1126 = vmatpush1.bf16.msra.mxu0 0
        %1127 = vmatprep.subr.bf16.mxu0 0
        %1128 = vmatpush1.bf16.msra.mxu0 0
        %1129 = vmatprep.subr.bf16.mxu0 0
        %1130 = vmatpush1.bf16.msra.mxu0 0
        %1131 = vmatprep.subr.bf16.mxu0 0
        %1132 = vmatpush1.bf16.msra.mxu0 0
        %1133 = vmatprep.subr.bf16.mxu0 0
        %1134 = vmatpush1.bf16.msra.mxu0 0
        %1135 = vmatprep.subr.bf16.mxu0 0
        %1136 = vmatpush1.bf16.msra.mxu0 0
        %1137 = vmatprep.mubr.bf16.mxu0 0
        %1138 = vmatmul.mubr.bf16.gmra.mrb[0].mxu0 %v912
        %v1139 = vpop.f32.mrb[0].mxu0
        %v1140 = vadd.f32 0.0, %v1139
        %v1141 = vpop.f32.mrb[0].mxu0
        %v1142 = vadd.f32 0.0, %v1141
        %v1143 = vpop.f32.mrb[0].mxu0
        %v1144 = vpop.f32.mrb[0].mxu0
        %1145 = vdwg.mxu0
        %1146 = vmatprep.subr.bf16.mxu0 %v1044
        %1147 = vmatpush1.bf16.msra.mxu0 %v1043
        %1148 = vmatprep.subr.bf16.mxu0 %v1048
        %1149 = vmatpush1.bf16.msra.mxu0 %v1047
        %1150 = vmatprep.subr.bf16.mxu0 %v1052
        %1151 = vmatpush1.bf16.msra.mxu0 %v1051
        %1152 = vmatprep.subr.bf16.mxu0 %v1056
        %1153 = vmatpush1.bf16.msra.mxu0 %v1055
        %1154 = vmatprep.subr.bf16.mxu0 %v1060
        %1155 = vmatpush1.bf16.msra.mxu0 %v1059
        %1156 = vmatprep.subr.bf16.mxu0 %v1064
        %1157 = vmatpush1.bf16.msra.mxu0 %v1063
        %1158 = vmatprep.subr.bf16.mxu0 %v1068
        %1159 = vmatpush1.bf16.msra.mxu0 %v1067
        %1160 = vmatprep.subr.bf16.mxu0 %v1072
        %1161 = vmatpush1.bf16.msra.mxu0 %v1071
        %1162 = vmatprep.subr.bf16.mxu0 0
        %1163 = vmatpush1.bf16.msra.mxu0 0
        %1164 = vmatprep.subr.bf16.mxu0 0
        %1165 = vmatpush1.bf16.msra.mxu0 0
        %1166 = vmatprep.subr.bf16.mxu0 0
        %1167 = vmatpush1.bf16.msra.mxu0 0
        %1168 = vmatprep.subr.bf16.mxu0 0
        %1169 = vmatpush1.bf16.msra.mxu0 0
        %1170 = vmatprep.subr.bf16.mxu0 0
        %1171 = vmatpush1.bf16.msra.mxu0 0
        %1172 = vmatprep.subr.bf16.mxu0 0
        %1173 = vmatpush1.bf16.msra.mxu0 0
        %1174 = vmatprep.subr.bf16.mxu0 0
        %1175 = vmatpush1.bf16.msra.mxu0 0
        %1176 = vmatprep.subr.bf16.mxu0 0
        %1177 = vmatpush1.bf16.msra.mxu0 0
        %1178 = vmatprep.mubr.bf16.mxu0 0
        %1179 = vmatmul.mubr.bf16.gmra.mrb[0].mxu0 %v912
        %v1180 = vpop.f32.mrb[0].mxu0
        %v1181 = vadd.f32 0.0, %v1180
        %v1182 = vpop.f32.mrb[0].mxu0
        %v1183 = vadd.f32 0.0, %v1182
        %v1184 = vpop.f32.mrb[0].mxu0
        %v1185 = vpop.f32.mrb[0].mxu0
        %1186 = vdwg.mxu0
        %v1187 = vadd.f32 %v908, %v1140
        %v1188 = vadd.f32 %v909, %v1142
        %v1189 = vadd.f32 %v910, %v1181
        %v1190 = vadd.f32 %v911, %v1183
        %v1191 = vxor.u32 %v1187, 2147483648
        %v1192 = vmul.f32 %v1191, 1.442695
        %v1193 = vpow.pop %v1192
        %v1194 = vadd.f32 %v1193, 1.0
        %v1195 = vrcp.pop %v1194
        %v1196 = vmul.f32 1.0, %v1195
        %v1197 = vxor.u32 %v1188, 2147483648
        %v1198 = vmul.f32 %v1197, 1.442695
        %v1199 = vpow.pop %v1198
        %v1200 = vadd.f32 %v1199, 1.0
        %v1201 = vrcp.pop %v1200
        %v1202 = vmul.f32 1.0, %v1201
        %v1203 = vtanh.pop %v1189
        %v1204 = vxor.u32 %v1190, 2147483648
        %v1205 = vmul.f32 %v1204, 1.442695
        %v1206 = vpow.pop %v1205
        %v1207 = vadd.f32 %v1206, 1.0
        %v1208 = vrcp.pop %v1207
        %v1209 = vmul.f32 1.0, %v1208
        %v1210 = vmul.f32 %v1202, %v906
        %v1211 = vmul.f32 %v1196, %v1203
        %v1212 = vadd.f32 %v1210, %v1211
        %v1213 = vtanh.pop %v1212
        %v1214 = vmul.f32 %v1209, %v1213
        %s1215 = sadd.s32 %s574, 2
        %p1216 = scmp.lt.s32.totalorder %s1215, 10
        %s1217 = scalar_select %p1216, 1, 0
        %v1218 = vstv %s1217
        %vm1219 = vcmp.eq.s32.totalorder %v1218, 1
        %v1220 = vsel %vm1219, %v1212, %v906
        %v1221 = vsel %vm1219, %v1214, %v905
        %1222 = vst [vmem:[#allocation10] sm:$0xff] %v1220
        %1223 = vst [vmem:[#allocation8] sm:$0xff] %v1221
        %s1224 = scalar_lea.vmem %s251, 16 [#allocation7]
        %1225 = vst [vmem:[%s1224] sm:$0xff] %v1221
        %v1226 = vld [vmem:[#allocation8] sm:$0xff]
        %v1227 = vld [vmem:[#allocation10] sm:$0xff]
        %s1228 = scalar_lea.vmem %s227, 96 [#allocation2]
        %v1229 = vld [vmem:[%s1228] sm:$0xff]
        %v1230 = vld [vmem:[%s1228 + $0x8] sm:$0xff]
        %v1231 = vld [vmem:[%s1228 + $0x10] sm:$0xff]
        %v1232 = vld [vmem:[%s1228 + $0x18] sm:$0xff]
        %v1233 = vpack.c.bf16 %v1226, %v1226
        %v1234 = vld [vmem:[#allocation5] sm:$0xff]
        %v1235 = vld [vmem:[#allocation5 + $0x8] sm:$0xff]
        %v1236 = vld [vmem:[#allocation5 + $0x10] sm:$0xff]
        %v1237 = vld [vmem:[#allocation5 + $0x18] sm:$0xff]
        %v1238 = vld [vmem:[#allocation5 + $0x20] sm:$0xff]
        %v1239 = vld [vmem:[#allocation5 + $0x28] sm:$0xff]
        %v1240 = vld [vmem:[#allocation5 + $0x30] sm:$0xff]
        %v1241 = vld [vmem:[#allocation5 + $0x38] sm:$0xff]
        %v1242 = vld [vmem:[#allocation5 + $0x40] sm:$0xff]
        %v1243 = vld [vmem:[#allocation5 + $0x48] sm:$0xff]
        %v1244 = vld [vmem:[#allocation5 + $0x50] sm:$0xff]
        %v1245 = vld [vmem:[#allocation5 + $0x58] sm:$0xff]
        %v1246 = vld [vmem:[#allocation5 + $0x60] sm:$0xff]
        %v1247 = vld [vmem:[#allocation5 + $0x68] sm:$0xff]
        %v1248 = vld [vmem:[#allocation5 + $0x70] sm:$0xff]
        %v1249 = vld [vmem:[#allocation5 + $0x78] sm:$0xff]
        %v1250 = vld [vmem:[#allocation5 + $0x80] sm:$0xff]
        %v1251 = vld [vmem:[#allocation5 + $0x88] sm:$0xff]
        %v1252 = vld [vmem:[#allocation5 + $0x90] sm:$0xff]
        %v1253 = vld [vmem:[#allocation5 + $0x98] sm:$0xff]
        %v1254 = vld [vmem:[#allocation5 + $0xa0] sm:$0xff]
        %v1255 = vld [vmem:[#allocation5 + $0xa8] sm:$0xff]
        %v1256 = vld [vmem:[#allocation5 + $0xb0] sm:$0xff]
        %v1257 = vld [vmem:[#allocation5 + $0xb8] sm:$0xff]
        %v1258 = vld [vmem:[#allocation5 + $0xc0] sm:$0xff]
        %v1259 = vld [vmem:[#allocation5 + $0xc8] sm:$0xff]
        %v1260 = vld [vmem:[#allocation5 + $0xd0] sm:$0xff]
        %v1261 = vld [vmem:[#allocation5 + $0xd8] sm:$0xff]
        %v1262 = vld [vmem:[#allocation5 + $0xe0] sm:$0xff]
        %v1263 = vld [vmem:[#allocation5 + $0xe8] sm:$0xff]
        %v1264 = vld [vmem:[#allocation5 + $0xf0] sm:$0xff]
        %v1265 = vld [vmem:[#allocation5 + $0xf8] sm:$0xff]
        %v1298 = vunpack.c.l.b16 %v1234
        %v1299 = vunpack.c.h.b16 %v1234
        %v1300 = vunpack.c.l.b16 %v1235
        %v1301 = vunpack.c.h.b16 %v1235
        %v1302 = vunpack.c.l.b16 %v1236
        %v1303 = vunpack.c.h.b16 %v1236
        %v1304 = vunpack.c.l.b16 %v1237
        %v1305 = vunpack.c.h.b16 %v1237
        %v1306 = vunpack.c.l.b16 %v1238
        %v1307 = vunpack.c.h.b16 %v1238
        %v1308 = vunpack.c.l.b16 %v1239
        %v1309 = vunpack.c.h.b16 %v1239
        %v1310 = vunpack.c.l.b16 %v1240
        %v1311 = vunpack.c.h.b16 %v1240
        %v1312 = vunpack.c.l.b16 %v1241
        %v1313 = vunpack.c.h.b16 %v1241
        %v1314 = vunpack.c.l.b16 %v1242
        %v1315 = vunpack.c.h.b16 %v1242
        %v1316 = vunpack.c.l.b16 %v1243
        %v1317 = vunpack.c.h.b16 %v1243
        %v1318 = vunpack.c.l.b16 %v1244
        %v1319 = vunpack.c.h.b16 %v1244
        %v1320 = vunpack.c.l.b16 %v1245
        %v1321 = vunpack.c.h.b16 %v1245
        %v1322 = vunpack.c.l.b16 %v1246
        %v1323 = vunpack.c.h.b16 %v1246
        %v1324 = vunpack.c.l.b16 %v1247
        %v1325 = vunpack.c.h.b16 %v1247
        %v1326 = vunpack.c.l.b16 %v1248
        %v1327 = vunpack.c.h.b16 %v1248
        %v1328 = vunpack.c.l.b16 %v1249
        %v1329 = vunpack.c.h.b16 %v1249
        %v1330 = vunpack.c.l.b16 %v1250
        %v1331 = vunpack.c.h.b16 %v1250
        %v1332 = vunpack.c.l.b16 %v1251
        %v1333 = vunpack.c.h.b16 %v1251
        %v1334 = vunpack.c.l.b16 %v1252
        %v1335 = vunpack.c.h.b16 %v1252
        %v1336 = vunpack.c.l.b16 %v1253
        %v1337 = vunpack.c.h.b16 %v1253
        %v1338 = vunpack.c.l.b16 %v1254
        %v1339 = vunpack.c.h.b16 %v1254
        %v1340 = vunpack.c.l.b16 %v1255
        %v1341 = vunpack.c.h.b16 %v1255
        %v1342 = vunpack.c.l.b16 %v1256
        %v1343 = vunpack.c.h.b16 %v1256
        %v1344 = vunpack.c.l.b16 %v1257
        %v1345 = vunpack.c.h.b16 %v1257
        %v1346 = vunpack.c.l.b16 %v1258
        %v1347 = vunpack.c.h.b16 %v1258
        %v1348 = vunpack.c.l.b16 %v1259
        %v1349 = vunpack.c.h.b16 %v1259
        %v1350 = vunpack.c.l.b16 %v1260
        %v1351 = vunpack.c.h.b16 %v1260
        %v1352 = vunpack.c.l.b16 %v1261
        %v1353 = vunpack.c.h.b16 %v1261
        %v1354 = vunpack.c.l.b16 %v1262
        %v1355 = vunpack.c.h.b16 %v1262
        %v1356 = vunpack.c.l.b16 %v1263
        %v1357 = vunpack.c.h.b16 %v1263
        %v1358 = vunpack.c.l.b16 %v1264
        %v1359 = vunpack.c.h.b16 %v1264
        %v1360 = vunpack.c.l.b16 %v1265
        %v1361 = vunpack.c.h.b16 %v1265
        %v1362 = vpack.c.b16 %v1302, %v1298
        %v1363 = vpack.c.b16 %v1303, %v1299
        %v1364 = vpack.c.b16 %v1304, %v1300
        %v1365 = vpack.c.b16 %v1305, %v1301
        %v1366 = vpack.c.b16 %v1310, %v1306
        %v1367 = vpack.c.b16 %v1311, %v1307
        %v1368 = vpack.c.b16 %v1312, %v1308
        %v1369 = vpack.c.b16 %v1313, %v1309
        %v1370 = vpack.c.b16 %v1318, %v1314
        %v1371 = vpack.c.b16 %v1319, %v1315
        %v1372 = vpack.c.b16 %v1320, %v1316
        %v1373 = vpack.c.b16 %v1321, %v1317
        %v1374 = vpack.c.b16 %v1326, %v1322
        %v1375 = vpack.c.b16 %v1327, %v1323
        %v1376 = vpack.c.b16 %v1328, %v1324
        %v1377 = vpack.c.b16 %v1329, %v1325
        %v1378 = vpack.c.b16 %v1334, %v1330
        %v1379 = vpack.c.b16 %v1335, %v1331
        %v1380 = vpack.c.b16 %v1336, %v1332
        %v1381 = vpack.c.b16 %v1337, %v1333
        %v1382 = vpack.c.b16 %v1342, %v1338
        %v1383 = vpack.c.b16 %v1343, %v1339
        %v1384 = vpack.c.b16 %v1344, %v1340
        %v1385 = vpack.c.b16 %v1345, %v1341
        %v1386 = vpack.c.b16 %v1350, %v1346
        %v1387 = vpack.c.b16 %v1351, %v1347
        %v1388 = vpack.c.b16 %v1352, %v1348
        %v1389 = vpack.c.b16 %v1353, %v1349
        %v1390 = vpack.c.b16 %v1358, %v1354
        %v1391 = vpack.c.b16 %v1359, %v1355
        %v1392 = vpack.c.b16 %v1360, %v1356
        %v1393 = vpack.c.b16 %v1361, %v1357
        %1426 = vmatprep.subr.bf16.mxu0 %v1363
        %1427 = vmatpush1.bf16.msra.mxu0 %v1362
        %1428 = vmatprep.subr.bf16.mxu0 %v1367
        %1429 = vmatpush1.bf16.msra.mxu0 %v1366
        %1430 = vmatprep.subr.bf16.mxu0 %v1371
        %1431 = vmatpush1.bf16.msra.mxu0 %v1370
        %1432 = vmatprep.subr.bf16.mxu0 %v1375
        %1433 = vmatpush1.bf16.msra.mxu0 %v1374
        %1434 = vmatprep.subr.bf16.mxu0 %v1379
        %1435 = vmatpush1.bf16.msra.mxu0 %v1378
        %1436 = vmatprep.subr.bf16.mxu0 %v1383
        %1437 = vmatpush1.bf16.msra.mxu0 %v1382
        %1438 = vmatprep.subr.bf16.mxu0 %v1387
        %1439 = vmatpush1.bf16.msra.mxu0 %v1386
        %1440 = vmatprep.subr.bf16.mxu0 %v1391
        %1441 = vmatpush1.bf16.msra.mxu0 %v1390
        %1442 = vmatprep.subr.bf16.mxu0 0
        %1443 = vmatpush1.bf16.msra.mxu0 0
        %1444 = vmatprep.subr.bf16.mxu0 0
        %1445 = vmatpush1.bf16.msra.mxu0 0
        %1446 = vmatprep.subr.bf16.mxu0 0
        %1447 = vmatpush1.bf16.msra.mxu0 0
        %1448 = vmatprep.subr.bf16.mxu0 0
        %1449 = vmatpush1.bf16.msra.mxu0 0
        %1450 = vmatprep.subr.bf16.mxu0 0
        %1451 = vmatpush1.bf16.msra.mxu0 0
        %1452 = vmatprep.subr.bf16.mxu0 0
        %1453 = vmatpush1.bf16.msra.mxu0 0
        %1454 = vmatprep.subr.bf16.mxu0 0
        %1455 = vmatpush1.bf16.msra.mxu0 0
        %1456 = vmatprep.subr.bf16.mxu0 0
        %1457 = vmatpush1.bf16.msra.mxu0 0
        %1458 = vmatprep.mubr.bf16.mxu0 0
        %1459 = vmatmul.mubr.bf16.gmra.mrb[0].mxu0 %v1233
        %v1460 = vpop.f32.mrb[0].mxu0
        %v1461 = vadd.f32 0.0, %v1460
        %v1462 = vpop.f32.mrb[0].mxu0
        %v1463 = vadd.f32 0.0, %v1462
        %v1464 = vpop.f32.mrb[0].mxu0
        %v1465 = vpop.f32.mrb[0].mxu0
        %1466 = vdwg.mxu0
        %1467 = vmatprep.subr.bf16.mxu0 %v1365
        %1468 = vmatpush1.bf16.msra.mxu0 %v1364
        %1469 = vmatprep.subr.bf16.mxu0 %v1369
        %1470 = vmatpush1.bf16.msra.mxu0 %v1368
        %1471 = vmatprep.subr.bf16.mxu0 %v1373
        %1472 = vmatpush1.bf16.msra.mxu0 %v1372
        %1473 = vmatprep.subr.bf16.mxu0 %v1377
        %1474 = vmatpush1.bf16.msra.mxu0 %v1376
        %1475 = vmatprep.subr.bf16.mxu0 %v1381
        %1476 = vmatpush1.bf16.msra.mxu0 %v1380
        %1477 = vmatprep.subr.bf16.mxu0 %v1385
        %1478 = vmatpush1.bf16.msra.mxu0 %v1384
        %1479 = vmatprep.subr.bf16.mxu0 %v1389
        %1480 = vmatpush1.bf16.msra.mxu0 %v1388
        %1481 = vmatprep.subr.bf16.mxu0 %v1393
        %1482 = vmatpush1.bf16.msra.mxu0 %v1392
        %1483 = vmatprep.subr.bf16.mxu0 0
        %1484 = vmatpush1.bf16.msra.mxu0 0
        %1485 = vmatprep.subr.bf16.mxu0 0
        %1486 = vmatpush1.bf16.msra.mxu0 0
        %1487 = vmatprep.subr.bf16.mxu0 0
        %1488 = vmatpush1.bf16.msra.mxu0 0
        %1489 = vmatprep.subr.bf16.mxu0 0
        %1490 = vmatpush1.bf16.msra.mxu0 0
        %1491 = vmatprep.subr.bf16.mxu0 0
        %1492 = vmatpush1.bf16.msra.mxu0 0
        %1493 = vmatprep.subr.bf16.mxu0 0
        %1494 = vmatpush1.bf16.msra.mxu0 0
        %1495 = vmatprep.subr.bf16.mxu0 0
        %1496 = vmatpush1.bf16.msra.mxu0 0
        %1497 = vmatprep.subr.bf16.mxu0 0
        %1498 = vmatpush1.bf16.msra.mxu0 0
        %1499 = vmatprep.mubr.bf16.mxu0 0
        %1500 = vmatmul.mubr.bf16.gmra.mrb[0].mxu0 %v1233
        %v1501 = vpop.f32.mrb[0].mxu0
        %v1502 = vadd.f32 0.0, %v1501
        %v1503 = vpop.f32.mrb[0].mxu0
        %v1504 = vadd.f32 0.0, %v1503
        %v1505 = vpop.f32.mrb[0].mxu0
        %v1506 = vpop.f32.mrb[0].mxu0
        %1507 = vdwg.mxu0
        %v1508 = vadd.f32 %v1229, %v1461
        %v1509 = vadd.f32 %v1230, %v1463
        %v1510 = vadd.f32 %v1231, %v1502
        %v1511 = vadd.f32 %v1232, %v1504
        %v1512 = vxor.u32 %v1508, 2147483648
        %v1513 = vmul.f32 %v1512, 1.442695
        %v1514 = vpow.pop %v1513
        %v1515 = vadd.f32 %v1514, 1.0
        %v1516 = vrcp.pop %v1515
        %v1517 = vmul.f32 1.0, %v1516
        %v1518 = vxor.u32 %v1509, 2147483648
        %v1519 = vmul.f32 %v1518, 1.442695
        %v1520 = vpow.pop %v1519
        %v1521 = vadd.f32 %v1520, 1.0
        %v1522 = vrcp.pop %v1521
        %v1523 = vmul.f32 1.0, %v1522
        %v1524 = vtanh.pop %v1510
        %v1525 = vxor.u32 %v1511, 2147483648
        %v1526 = vmul.f32 %v1525, 1.442695
        %v1527 = vpow.pop %v1526
        %v1528 = vadd.f32 %v1527, 1.0
        %v1529 = vrcp.pop %v1528
        %v1530 = vmul.f32 1.0, %v1529
        %v1531 = vmul.f32 %v1523, %v1227
        %v1532 = vmul.f32 %v1517, %v1524
        %v1533 = vadd.f32 %v1531, %v1532
        %v1534 = vtanh.pop %v1533
        %v1535 = vmul.f32 %v1530, %v1534
        %s1536 = sadd.s32 %s574, 3
        %p1537 = scmp.lt.s32.totalorder %s1536, 10
        %s1538 = scalar_select %p1537, 1, 0
        %v1539 = vstv %s1538
        %vm1540 = vcmp.eq.s32.totalorder %v1539, 1
        %v1541 = vsel %vm1540, %v1533, %v1227
        %v1542 = vsel %vm1540, %v1535, %v1226
        %1543 = vst [vmem:[#allocation10] sm:$0xff] %v1541
        %1544 = vst [vmem:[#allocation8] sm:$0xff] %v1542
        %s1545 = scalar_lea.vmem %s251, 24 [#allocation7]
        %1546 = vst [vmem:[%s1545] sm:$0xff] %v1542
        %s1547 = sand.u32 %s95, 1
        %s1548 = scalar_lea.sflag [#allocation4], %s1547
        %s1549 = sand.u32 %s95, 1
        %s1550 = smul.addr %s1549, 32
        %s1551 = scalar_lea.vmem [#allocation7], %s1550
        // Predicated region
        $region41: #{tpu_custom_call.1} parent=27 // pred_check
          %p1552 = pneg %p105
        $region42: #{tpu_custom_call.1} parent=27 // pred_check_branch
          %1554 = sbr.rel (%p1552) target = $region44
        $region43: #{tpu_custom_call.1} parent=27 // pred_region
          %s1555 = smul.u32 4, %s29
          %s1557 = ssub.s32 512, 512
          %1558 = vsyncadd %s1548, %s1557
          %s1559 = sadd.s32 %s28, %s1555
          %s1560 = smul.addr %s1559, 128
          %s1561 = scalar_lea.hbm %s2, %s1560
          %s1562 = sshll.u32 %s1551, 4
          %s1563 = int_to_ptr.vmem [resolvable:$true] %s1562
          %1568 = dma.vmem_to_hbm [thread:$0]  %s1563, 512, %s1561, %s1548, 128, 128, 8
        $region44: #{tpu_custom_call.1} parent=27 // pred_fallthru
          _
        // Predicated region
        $region45: #{tpu_custom_call.1} parent=27 // pred_check
          %p1569 = pneg %p131
        $region46: #{tpu_custom_call.1} parent=27 // pred_check_branch
          %1571 = sbr.rel (%p1569) target = $region48
        $region47: #{tpu_custom_call.1} parent=27 // pred_region
          %s1573 = ssub.s32 128, 128
          %1574 = vsyncadd [#allocation9], %s1573
          %s1575 = smul.addr %s28, 128
          %s1576 = scalar_lea.hbm %s3, %s1575
          %s1578 = sshll.u32 [#allocation8], 4
          %s1579 = int_to_ptr.vmem [resolvable:$true] %s1578
          %1581 = dma.vmem_to_hbm [thread:$0]  %s1579, 128, %s1576, [#allocation9]
        $region48: #{tpu_custom_call.1} parent=27 // pred_fallthru
          _
        // Predicated region
        $region49: #{tpu_custom_call.1} parent=27 // pred_check
          %p1582 = pneg %p157
        $region50: #{tpu_custom_call.1} parent=27 // pred_check_branch
          %1584 = sbr.rel (%p1582) target = $region52
        $region51: #{tpu_custom_call.1} parent=27 // pred_region
          %s1586 = ssub.s32 128, 128
          %1587 = vsyncadd [#allocation9], %s1586
          %s1588 = smul.addr %s28, 128
          %s1589 = scalar_lea.hbm %s4, %s1588
          %s1591 = sshll.u32 [#allocation10], 4
          %s1592 = int_to_ptr.vmem [resolvable:$true] %s1591
          %1594 = dma.vmem_to_hbm [thread:$0]  %s1592, 128, %s1589, [#allocation9]
        $region52: #{tpu_custom_call.1} parent=27 // pred_fallthru
          _
        // Predicated region
        $region53: #{tpu_custom_call.1} parent=27 // pred_check
          %p1595 = pneg %p131
        $region54: #{tpu_custom_call.1} parent=27 // pred_check_branch
          %1597 = sbr.rel (%p1595) target = $region56
        $region55: #{tpu_custom_call.1} parent=27 // pred_region
          %1598 = dma.done [#allocation9], 128
        $region56: #{tpu_custom_call.1} parent=27 // pred_fallthru
          _
        // Predicated region
        $region57: #{tpu_custom_call.1} parent=27 // pred_check
          %p1599 = pneg %p157
        $region58: #{tpu_custom_call.1} parent=27 // pred_check_branch
          %1601 = sbr.rel (%p1599) target = $region60
        $region59: #{tpu_custom_call.1} parent=27 // pred_region
          %1602 = dma.done [#allocation9], 128
        $region60: #{tpu_custom_call.1} parent=27 // pred_fallthru
          _
      $region28: #{tpu_custom_call.1} parent=5 // pred_fallthru
        _
      %p1603 = scmp.le.s32.totalorder 2, %s19
      // Predicated region
      $region61: #{tpu_custom_call.1} parent=5 // pred_check
        %p1604 = pneg %p1603
      $region62: #{tpu_custom_call.1} parent=5 // pred_check_branch
        %1606 = sbr.rel (%p1604) target = $region64
      $region63: #{tpu_custom_call.1} parent=5 // pred_region
        %s1607 = ssub.s32 %s19, 2
        // Predicated region
        $region65: #{tpu_custom_call.1} parent=63 // pred_check
          %p1608 = pneg %p111
        $region66: #{tpu_custom_call.1} parent=63 // pred_check_branch
          %1610 = sbr.rel (%p1608) target = $region68
        $region67: #{tpu_custom_call.1} parent=63 // pred_region
          %s1611 = sand.u32 %s96, 1
          %s1612 = scalar_lea.sflag [#allocation4], %s1611
          %s1613 = sand.u32 %s96, 1
          %s1614 = smul.addr %s1613, 32
          %s1615 = scalar_lea.vmem [#allocation7], %s1614
          %1616 = dma.done %s1612, 512
        $region68: #{tpu_custom_call.1} parent=63 // pred_fallthru
          _
      $region64: #{tpu_custom_call.1} parent=5 // pred_fallthru
        _
    $region6: #{tpu_custom_call.1} parent=1 // loop_footer
      %s23 = sadd.s32 1, %s19
    $region7: #{tpu_custom_call.1} parent=1 // loop_footer_branch
      %18 = sbr.rel target = $region3
    $region8: #{tpu_custom_call.1} parent=1 // loop_exit
      _
    %1617 = vsyncpa [#allocation3], 1
    %s1618 = scalar_lea.sflag [#allocation3], 1
    %1619 = vsyncpa %s1618, 1
    %1620 = vsyncpa [#allocation6], 1
    %1621 = vsyncpa [#allocation4], 1
    %s1622 = scalar_lea.sflag [#allocation4], 1
    %1623 = vsyncpa %s1622, 1
    %1624 = vsyncpa [#allocation9], 1

// kernel: tpu_custom_call.1
$region0: #{tpu_custom_call.1}
  #allocation0 [shape = 'u32[]', space=smem, size = 0x4, offset = 0x4, fixed_abs, tag = 'smem constant byte address 0x4 - core index']
  #allocation1 [shape = 'u32[144,128]{1,0:T(1,128)}', space=vmem, size = 0x12000, scoped, tag = 'internal scratch']
  %s0 = inlined_call_operand.hbm [shape: f32[12,8,512], index: 0, kind: input, shape index: {}]
  %s1 = inlined_call_operand.hbm [shape: bf16[128,512], index: 1, kind: input, shape index: {}]
  %s2 = inlined_call_operand.hbm [shape: f32[12,8,128], index: 2, kind: output, shape index: {0}]
  %s3 = inlined_call_operand.hbm [shape: f32[1,8,128], index: 3, kind: output, shape index: {1}]
  %s4 = inlined_call_operand.hbm [shape: f32[1,8,128], index: 4, kind: output, shape index: {2}]
  %5 = xla_tuple %s2, %s3, %s4
  %s6 = sld [smem:[#allocation0]]
  $region69: #{tpu_custom_call.1} parent=0
    _
  %s8 = ssub.s32 1, %s6
  %s9 = scalar_select 0, %s8, %s6
  $region1: #{tpu_custom_call.1} parent=0
    #allocation2 [shape = 'u8[131072]{0}', space=vmem, size = 0x20000, scoped, tag = 'input window, operand 0']
    #allocation3 [shape = 's32[2]{0}', space=sflag, size = 0x8, scoped, tag = 'scoped memory for tpu_custom_call.1']
    #allocation4 [shape = 's32[2]{0}', space=sflag, size = 0x8, scoped, tag = 'scoped memory for tpu_custom_call.1']
    #allocation5 [shape = 'u8[131072]{0}', space=vmem, size = 0x20000, scoped, tag = 'input window, operand 1, single buffered']
    #allocation6 [shape = 's32[1]{0}', space=sflag, size = 0x4, scoped, tag = 'scoped memory for tpu_custom_call.1']
    #allocation7 [shape = 'u8[32768]{0}', space=vmem, size = 0x8000, scoped, tag = 'output window, operand 0']
    #allocation8 [shape = 'u8[4096]{0}', space=vmem, size = 0x1000, scoped, tag = 'output window, operand 1, single buffered']
    #allocation9 [shape = 's32[1]{0}', space=sflag, size = 0x4, scoped, tag = 'scoped memory for tpu_custom_call.1']
    #allocation10 [shape = 'u8[4096]{0}', space=vmem, size = 0x1000, scoped, tag = 'output window, operand 2, single buffered']
    %10 = vsyncpa [#allocation3], 0
    %s11 = scalar_lea.sflag [#allocation3], 1
    %12 = vsyncpa %s11, 0
    %13 = vsyncpa [#allocation6], 0
    %14 = vsyncpa [#allocation4], 0
    %s15 = scalar_lea.sflag [#allocation4], 1
    %16 = vsyncpa %s15, 0
    %17 = vsyncpa [#allocation9], 0
    loop: start=0, step=1, limit=5
    $region2: #{tpu_custom_call.1} parent=1 // loop_pre_header
      _
    $region3: #{tpu_custom_call.1} parent=1 // loop_header
      %s19 = sphi 0, %s23
      %p20 = scmp.ge.s32.totalorder %s19, 5
      %s26 = sphi 0, %s38
      %s27 = sphi 0, %s34
      %s28 = sphi 0, %s26
      %s29 = sphi 0, %s27
      %s30 = sphi 0, %s28
      %s31 = sphi 0, %s29
      %s43 = sphi 0, %s45
      %s46 = sphi 0, %s43
      %s47 = sphi 0, %s46
      %s63 = sphi 0, %s47
      %s67 = sphi 0, %s67
      %s69 = sphi 0, %s67
      %s70 = sphi 0, %s69
      %s84 = sphi 0, %s70
      %s92 = sphi 0, %s94
      %s95 = sphi 0, %s92
      %s96 = sphi 0, %s95
      %s112 = sphi 0, %s96
      %s118 = sphi 0, %s120
      %s121 = sphi 0, %s118
      %s122 = sphi 0, %s121
      %s138 = sphi 0, %s122
      %s144 = sphi 0, %s146
      %s147 = sphi 0, %s144
      %s148 = sphi 0, %s147
      %s164 = sphi 0, %s148
    $region4: #{tpu_custom_call.1} parent=1 // loop_header_branch
      %22 = sbr.rel (%p20) target = $region8
    $region5: #{tpu_custom_call.1} parent=1 // loop_body
      %s24 = ssub.s32 %s19, 1
      %s25 = ssub.s32 %s19, 2
      %s32 = sadd.s32 1, %s27
      %p33 = scmp.ge.s32.totalorder %s32, 3
      %s34 = scalar_select %p33, 0, %s32
      %s35 = sadd.s32 1, %s26
      %s36 = scalar_select %p33, %s35, %s26
      %p37 = scmp.ge.s32.totalorder %s36, 1
      %s38 = scalar_select %p37, 0, %s36
      %s39 = ssub.s32 %s27, %s34
      %s40 = ssub.s32 %s26, %s38
      %s41 = sor.u32 %s39, %s40
      %p42 = scmp.eq.s32.totalorder %s41, 0
      %s44 = sadd.s32 %s43, 1
      %s45 = scalar_select %p42, %s43, %s44
      %p48 = pneg %p42
      %p49 = scmp.eq.s32.totalorder %s19, 2
      %p50 = por %p48, %p49
      %p51 = scmp.ne.s32.totalorder %s43, %s46
      %p52 = scmp.eq.s32.totalorder %s19, 0
      %p53 = por %p51, %p52
      %p54 = scmp.ne.s32.totalorder %s43, %s46
      %p55 = scmp.eq.s32.totalorder %s24, 2
      %p56 = por %p54, %p55
      %p57 = scmp.ne.s32.totalorder %s46, %s47
      %p58 = scmp.eq.s32.totalorder %s24, 0
      %p59 = por %p57, %p58
      %p60 = scmp.ne.s32.totalorder %s46, %s47
      %p61 = scmp.eq.s32.totalorder %s25, 2
      %p62 = por %p60, %p61
      %p64 = scmp.ne.s32.totalorder %s47, %s63
      %p65 = scmp.eq.s32.totalorder %s25, 0
      %p66 = por %p64, %p65
      %s68 = sadd.s32 %s67, 1
      %p71 = scmp.eq.s32.totalorder %s19, 2
      %p72 = scmp.ne.s32.totalorder %s67, %s69
      %p73 = scmp.eq.s32.totalorder %s19, 0
      %p74 = por %p72, %p73
      %p75 = scmp.ne.s32.totalorder %s67, %s69
      %p76 = scmp.eq.s32.totalorder %s24, 2
      %p77 = por %p75, %p76
      %p78 = scmp.ne.s32.totalorder %s69, %s70
      %p79 = scmp.eq.s32.totalorder %s24, 0
      %p80 = por %p78, %p79
      %p81 = scmp.ne.s32.totalorder %s69, %s70
      %p82 = scmp.eq.s32.totalorder %s25, 2
      %p83 = por %p81, %p82
      %p85 = scmp.ne.s32.totalorder %s70, %s84
      %p86 = scmp.eq.s32.totalorder %s25, 0
      %p87 = por %p85, %p86
      %s88 = ssub.s32 %s27, %s34
      %s89 = ssub.s32 %s26, %s38
      %s90 = sor.u32 %s88, %s89
      %p91 = scmp.eq.s32.totalorder %s90, 0
      %s93 = sadd.s32 %s92, 1
      %s94 = scalar_select %p91, %s92, %s93
      %p97 = pneg %p91
      %p98 = scmp.eq.s32.totalorder %s19, 2
      %p99 = por %p97, %p98
      %p100 = scmp.ne.s32.totalorder %s92, %s95
      %p101 = scmp.eq.s32.totalorder %s19, 0
      %p102 = por %p100, %p101
      %p103 = scmp.ne.s32.totalorder %s92, %s95
      %p104 = scmp.eq.s32.totalorder %s24, 2
      %p105 = por %p103, %p104
      %p106 = scmp.ne.s32.totalorder %s95, %s96
      %p107 = scmp.eq.s32.totalorder %s24, 0
      %p108 = por %p106, %p107
      %p109 = scmp.ne.s32.totalorder %s95, %s96
      %p110 = scmp.eq.s32.totalorder %s25, 2
      %p111 = por %p109, %p110
      %p113 = scmp.ne.s32.totalorder %s96, %s112
      %p114 = scmp.eq.s32.totalorder %s25, 0
      %p115 = por %p113, %p114
      %s116 = ssub.s32 %s26, %s38
      %p117 = scmp.eq.s32.totalorder %s116, 0
      %s119 = sadd.s32 %s118, 1
      %s120 = scalar_select %p117, %s118, %s119
      %p123 = pneg %p117
      %p124 = scmp.eq.s32.totalorder %s19, 2
      %p125 = por %p123, %p124
      %p126 = scmp.ne.s32.totalorder %s118, %s121
      %p127 = scmp.eq.s32.totalorder %s19, 0
      %p128 = por %p126, %p127
      %p129 = scmp.ne.s32.totalorder %s118, %s121
      %p130 = scmp.eq.s32.totalorder %s24, 2
      %p131 = por %p129, %p130
      %p132 = scmp.ne.s32.totalorder %s121, %s122
      %p133 = scmp.eq.s32.totalorder %s24, 0
      %p134 = por %p132, %p133
      %p135 = scmp.ne.s32.totalorder %s121, %s122
      %p136 = scmp.eq.s32.totalorder %s25, 2
      %p137 = por %p135, %p136
      %p139 = scmp.ne.s32.totalorder %s122, %s138
      %p140 = scmp.eq.s32.totalorder %s25, 0
      %p141 = por %p139, %p140
      %s142 = ssub.s32 %s26, %s38
      %p143 = scmp.eq.s32.totalorder %s142, 0
      %s145 = sadd.s32 %s144, 1
      %s146 = scalar_select %p143, %s144, %s145
      %p149 = pneg %p143
      %p150 = scmp.eq.s32.totalorder %s19, 2
      %p151 = por %p149, %p150
      %p152 = scmp.ne.s32.totalorder %s144, %s147
      %p153 = scmp.eq.s32.totalorder %s19, 0
      %p154 = por %p152, %p153
      %p155 = scmp.ne.s32.totalorder %s144, %s147
      %p156 = scmp.eq.s32.totalorder %s24, 2
      %p157 = por %p155, %p156
      %p158 = scmp.ne.s32.totalorder %s147, %s148
      %p159 = scmp.eq.s32.totalorder %s24, 0
      %p160 = por %p158, %p159
      %p161 = scmp.ne.s32.totalorder %s147, %s148
      %p162 = scmp.eq.s32.totalorder %s25, 2
      %p163 = por %p161, %p162
      %p165 = scmp.ne.s32.totalorder %s148, %s164
      %p166 = scmp.eq.s32.totalorder %s25, 0
      %p167 = por %p165, %p166
      %p168 = scmp.le.s32.totalorder 1, %s19
      %p169 = scmp.lt.s32.totalorder %s19, 4
      %p170 = pnand %p168, %p169
      %p171 = pneg %p170
      // Predicated region
      $region9: #{tpu_custom_call.1} parent=5 // pred_check
        _
      $region10: #{tpu_custom_call.1} parent=5 // pred_check_branch
        %173 = sbr.rel (%p170) target = $region12
      $region11: #{tpu_custom_call.1} parent=5 // pred_region
        %s174 = ssub.s32 %s19, 1
        // Predicated region
        $region13: #{tpu_custom_call.1} parent=11 // pred_check
          %p175 = pneg %p80
        $region14: #{tpu_custom_call.1} parent=11 // pred_check_branch
          %177 = sbr.rel (%p175) target = $region16
        $region15: #{tpu_custom_call.1} parent=11 // pred_region
          %s179 = ssub.s32 4096, 4096
          %180 = vsyncadd [#allocation6], %s179
          %s181 = sshll.u32 [#allocation5], 4
          %s182 = int_to_ptr.vmem [resolvable:$true] %s181
          %187 = dma.hbm_to_vmem [thread:$0]  %s1, 4096, %s182, [#allocation6], 256, 256, 16
        $region16: #{tpu_custom_call.1} parent=11 // pred_fallthru
          _
      $region12: #{tpu_custom_call.1} parent=5 // pred_fallthru
        _
      %p188 = scmp.lt.s32.totalorder %s19, 3
      // Predicated region
      $region17: #{tpu_custom_call.1} parent=5 // pred_check
        %p189 = pneg %p188
      $region18: #{tpu_custom_call.1} parent=5 // pred_check_branch
        %191 = sbr.rel (%p189) target = $region20
      $region19: #{tpu_custom_call.1} parent=5 // pred_region
        // Predicated region
        $region21: #{tpu_custom_call.1} parent=19 // pred_check
          %p192 = pneg %p53
        $region22: #{tpu_custom_call.1} parent=19 // pred_check_branch
          %194 = sbr.rel (%p192) target = $region24
        $region23: #{tpu_custom_call.1} parent=19 // pred_region
          %s195 = sand.u32 %s43, 1
          %s196 = scalar_lea.sflag [#allocation3], %s195
          %s197 = sand.u32 %s43, 1
          %s198 = smul.addr %s197, 128
          %s199 = scalar_lea.vmem [#allocation2], %s198
          %s200 = smul.u32 4, %s27
          %s202 = ssub.s32 2048, 2048
          %203 = vsyncadd %s196, %s202
          %s204 = smul.addr %s26, 4
          %s205 = smul.addr %s200, 4
          %s206 = sadd.s32 %s204, %s205
          %s207 = smul.addr %s206, 128
          %s208 = scalar_lea.hbm %s0, %s207
          %s209 = sshll.u32 %s199, 4
          %s210 = int_to_ptr.vmem [resolvable:$true] %s209
          %215 = dma.hbm_to_vmem [thread:$0]  %s208, 2048, %s210, %s196, 512, 512, 32
        $region24: #{tpu_custom_call.1} parent=19 // pred_fallthru
          _
      $region20: #{tpu_custom_call.1} parent=5 // pred_fallthru
        _
      %p216 = scmp.le.s32.totalorder 1, %s19
      %p217 = scmp.lt.s32.totalorder %s19, 4
      %p218 = pnand %p216, %p217
      %p219 = pneg %p218
      // Predicated region
      $region25: #{tpu_custom_call.1} parent=5 // pred_check
        _
      $region26: #{tpu_custom_call.1} parent=5 // pred_check_branch
        %221 = sbr.rel (%p218) target = $region28
      $region27: #{tpu_custom_call.1} parent=5 // pred_region
        %s222 = ssub.s32 %s19, 1
        %s223 = sand.u32 %s46, 1
        %s224 = scalar_lea.sflag [#allocation3], %s223
        %s225 = sand.u32 %s46, 1
        %s226 = smul.addr %s225, 128
        %s227 = scalar_lea.vmem [#allocation2], %s226
        // Predicated region
        $region29: #{tpu_custom_call.1} parent=27 // pred_check
          %p228 = pneg %p59
        $region30: #{tpu_custom_call.1} parent=27 // pred_check_branch
          %230 = sbr.rel (%p228) target = $region32
        $region31: #{tpu_custom_call.1} parent=27 // pred_region
          %231 = dma.done %s224, 2048
        $region32: #{tpu_custom_call.1} parent=27 // pred_fallthru
          _
        // Predicated region
        $region33: #{tpu_custom_call.1} parent=27 // pred_check
          %p232 = pneg %p80
        $region34: #{tpu_custom_call.1} parent=27 // pred_check_branch
          %234 = sbr.rel (%p232) target = $region36
        $region35: #{tpu_custom_call.1} parent=27 // pred_region
          %235 = dma.done [#allocation6], 4096
        $region36: #{tpu_custom_call.1} parent=27 // pred_fallthru
          _
        %s236 = sand.u32 %s46, 1
        %s237 = scalar_lea.sflag [#allocation3], %s236
        %s238 = sand.u32 %s46, 1
        %s239 = smul.addr %s238, 128
        %s240 = scalar_lea.vmem [#allocation2], %s239
        %p241 = pneg %p59
        %p242 = pneg %p56
        %p243 = pneg %p80
        %p244 = pneg %p77
        %p245 = pneg %p108
        %p246 = pneg %p105
        %s247 = sand.u32 %s95, 1
        %s248 = scalar_lea.sflag [#allocation4], %s247
        %s249 = sand.u32 %s95, 1
        %s250 = smul.addr %s249, 32
        %s251 = scalar_lea.vmem [#allocation7], %s250
        %p252 = pneg %p134
        %p253 = pneg %p131
        %p254 = pneg %p160
        %p255 = pneg %p157
        %s256 = smul.u32 4, %s29
        %s257 = smul.u32 4, %s29
        %p259 = scmp.eq.s32.totalorder %s29, 0
        // Predicated region
        $region37: #{tpu_custom_call.1} parent=27 // pred_check
          %p260 = pneg %p259
        $region38: #{tpu_custom_call.1} parent=27 // pred_check_branch
          %262 = sbr.rel (%p260) target = $region40
        $region39: #{tpu_custom_call.1} parent=27 // pred_region
          %263 = vst [vmem:[#allocation8] sm:$0xff] 0.0
          %264 = vst [vmem:[#allocation10] sm:$0xff] 0.0
        $region40: #{tpu_custom_call.1} parent=27 // pred_fallthru
          _
        %v265 = vld [vmem:[#allocation8] sm:$0xff]
        %v266 = vld [vmem:[#allocation10] sm:$0xff]
        %v267 = vld [vmem:[%s227] sm:$0xff]
        %v268 = vld [vmem:[%s227 + $0x8] sm:$0xff]
        %v269 = vld [vmem:[%s227 + $0x10] sm:$0xff]
        %v270 = vld [vmem:[%s227 + $0x18] sm:$0xff]
        %v271 = vpack.c.bf16 %v265, %v265
        %v272 = vld [vmem:[#allocation5] sm:$0xff]
        %v273 = vld [vmem:[#allocation5 + $0x8] sm:$0xff]
        %v274 = vld [vmem:[#allocation5 + $0x10] sm:$0xff]
        %v275 = vld [vmem:[#allocation5 + $0x18] sm:$0xff]
        %v276 = vld [vmem:[#allocation5 + $0x20] sm:$0xff]
        %v277 = vld [vmem:[#allocation5 + $0x28] sm:$0xff]
        %v278 = vld [vmem:[#allocation5 + $0x30] sm:$0xff]
        %v279 = vld [vmem:[#allocation5 + $0x38] sm:$0xff]
        %v280 = vld [vmem:[#allocation5 + $0x40] sm:$0xff]
        %v281 = vld [vmem:[#allocation5 + $0x48] sm:$0xff]
        %v282 = vld [vmem:[#allocation5 + $0x50] sm:$0xff]
        %v283 = vld [vmem:[#allocation5 + $0x58] sm:$0xff]
        %v284 = vld [vmem:[#allocation5 + $0x60] sm:$0xff]
        %v285 = vld [vmem:[#allocation5 + $0x68] sm:$0xff]
        %v286 = vld [vmem:[#allocation5 + $0x70] sm:$0xff]
        %v287 = vld [vmem:[#allocation5 + $0x78] sm:$0xff]
        %v288 = vld [vmem:[#allocation5 + $0x80] sm:$0xff]
        %v289 = vld [vmem:[#allocation5 + $0x88] sm:$0xff]
        %v290 = vld [vmem:[#allocation5 + $0x90] sm:$0xff]
        %v291 = vld [vmem:[#allocation5 + $0x98] sm:$0xff]
        %v292 = vld [vmem:[#allocation5 + $0xa0] sm:$0xff]
        %v293 = vld [vmem:[#allocation5 + $0xa8] sm:$0xff]
        %v294 = vld [vmem:[#allocation5 + $0xb0] sm:$0xff]
        %v295 = vld [vmem:[#allocation5 + $0xb8] sm:$0xff]
        %v296 = vld [vmem:[#allocation5 + $0xc0] sm:$0xff]
        %v297 = vld [vmem:[#allocation5 + $0xc8] sm:$0xff]
        %v298 = vld [vmem:[#allocation5 + $0xd0] sm:$0xff]
        %v299 = vld [vmem:[#allocation5 + $0xd8] sm:$0xff]
        %v300 = vld [vmem:[#allocation5 + $0xe0] sm:$0xff]
        %v301 = vld [vmem:[#allocation5 + $0xe8] sm:$0xff]
        %v302 = vld [vmem:[#allocation5 + $0xf0] sm:$0xff]
        %v303 = vld [vmem:[#allocation5 + $0xf8] sm:$0xff]
        %v336 = vunpack.c.l.b16 %v272
        %v337 = vunpack.c.h.b16 %v272
        %v338 = vunpack.c.l.b16 %v273
        %v339 = vunpack.c.h.b16 %v273
        %v340 = vunpack.c.l.b16 %v274
        %v341 = vunpack.c.h.b16 %v274
        %v342 = vunpack.c.l.b16 %v275
        %v343 = vunpack.c.h.b16 %v275
        %v344 = vunpack.c.l.b16 %v276
        %v345 = vunpack.c.h.b16 %v276
        %v346 = vunpack.c.l.b16 %v277
        %v347 = vunpack.c.h.b16 %v277
        %v348 = vunpack.c.l.b16 %v278
        %v349 = vunpack.c.h.b16 %v278
        %v350 = vunpack.c.l.b16 %v279
        %v351 = vunpack.c.h.b16 %v279
        %v352 = vunpack.c.l.b16 %v280
        %v353 = vunpack.c.h.b16 %v280
        %v354 = vunpack.c.l.b16 %v281
        %v355 = vunpack.c.h.b16 %v281
        %v356 = vunpack.c.l.b16 %v282
        %v357 = vunpack.c.h.b16 %v282
        %v358 = vunpack.c.l.b16 %v283
        %v359 = vunpack.c.h.b16 %v283
        %v360 = vunpack.c.l.b16 %v284
        %v361 = vunpack.c.h.b16 %v284
        %v362 = vunpack.c.l.b16 %v285
        %v363 = vunpack.c.h.b16 %v285
        %v364 = vunpack.c.l.b16 %v286
        %v365 = vunpack.c.h.b16 %v286
        %v366 = vunpack.c.l.b16 %v287
        %v367 = vunpack.c.h.b16 %v287
        %v368 = vunpack.c.l.b16 %v288
        %v369 = vunpack.c.h.b16 %v288
        %v370 = vunpack.c.l.b16 %v289
        %v371 = vunpack.c.h.b16 %v289
        %v372 = vunpack.c.l.b16 %v290
        %v373 = vunpack.c.h.b16 %v290
        %v374 = vunpack.c.l.b16 %v291
        %v375 = vunpack.c.h.b16 %v291
        %v376 = vunpack.c.l.b16 %v292
        %v377 = vunpack.c.h.b16 %v292
        %v378 = vunpack.c.l.b16 %v293
        %v379 = vunpack.c.h.b16 %v293
        %v380 = vunpack.c.l.b16 %v294
        %v381 = vunpack.c.h.b16 %v294
        %v382 = vunpack.c.l.b16 %v295
        %v383 = vunpack.c.h.b16 %v295
        %v384 = vunpack.c.l.b16 %v296
        %v385 = vunpack.c.h.b16 %v296
        %v386 = vunpack.c.l.b16 %v297
        %v387 = vunpack.c.h.b16 %v297
        %v388 = vunpack.c.l.b16 %v298
        %v389 = vunpack.c.h.b16 %v298
        %v390 = vunpack.c.l.b16 %v299
        %v391 = vunpack.c.h.b16 %v299
        %v392 = vunpack.c.l.b16 %v300
        %v393 = vunpack.c.h.b16 %v300
        %v394 = vunpack.c.l.b16 %v301
        %v395 = vunpack.c.h.b16 %v301
        %v396 = vunpack.c.l.b16 %v302
        %v397 = vunpack.c.h.b16 %v302
        %v398 = vunpack.c.l.b16 %v303
        %v399 = vunpack.c.h.b16 %v303
        %v400 = vpack.c.b16 %v340, %v336
        %v401 = vpack.c.b16 %v341, %v337
        %v402 = vpack.c.b16 %v342, %v338
        %v403 = vpack.c.b16 %v343, %v339
        %v404 = vpack.c.b16 %v348, %v344
        %v405 = vpack.c.b16 %v349, %v345
        %v406 = vpack.c.b16 %v350, %v346
        %v407 = vpack.c.b16 %v351, %v347
        %v408 = vpack.c.b16 %v356, %v352
        %v409 = vpack.c.b16 %v357, %v353
        %v410 = vpack.c.b16 %v358, %v354
        %v411 = vpack.c.b16 %v359, %v355
        %v412 = vpack.c.b16 %v364, %v360
        %v413 = vpack.c.b16 %v365, %v361
        %v414 = vpack.c.b16 %v366, %v362
        %v415 = vpack.c.b16 %v367, %v363
        %v416 = vpack.c.b16 %v372, %v368
        %v417 = vpack.c.b16 %v373, %v369
        %v418 = vpack.c.b16 %v374, %v370
        %v419 = vpack.c.b16 %v375, %v371
        %v420 = vpack.c.b16 %v380, %v376
        %v421 = vpack.c.b16 %v381, %v377
        %v422 = vpack.c.b16 %v382, %v378
        %v423 = vpack.c.b16 %v383, %v379
        %v424 = vpack.c.b16 %v388, %v384
        %v425 = vpack.c.b16 %v389, %v385
        %v426 = vpack.c.b16 %v390, %v386
        %v427 = vpack.c.b16 %v391, %v387
        %v428 = vpack.c.b16 %v396, %v392
        %v429 = vpack.c.b16 %v397, %v393
        %v430 = vpack.c.b16 %v398, %v394
        %v431 = vpack.c.b16 %v399, %v395
        %464 = vmatprep.subr.bf16.mxu0 %v401
        %465 = vmatpush1.bf16.msra.mxu0 %v400
        %466 = vmatprep.subr.bf16.mxu0 %v405
        %467 = vmatpush1.bf16.msra.mxu0 %v404
        %468 = vmatprep.subr.bf16.mxu0 %v409
        %469 = vmatpush1.bf16.msra.mxu0 %v408
        %470 = vmatprep.subr.bf16.mxu0 %v413
        %471 = vmatpush1.bf16.msra.mxu0 %v412
        %472 = vmatprep.subr.bf16.mxu0 %v417
        %473 = vmatpush1.bf16.msra.mxu0 %v416
        %474 = vmatprep.subr.bf16.mxu0 %v421
        %475 = vmatpush1.bf16.msra.mxu0 %v420
        %476 = vmatprep.subr.bf16.mxu0 %v425
        %477 = vmatpush1.bf16.msra.mxu0 %v424
        %478 = vmatprep.subr.bf16.mxu0 %v429
        %479 = vmatpush1.bf16.msra.mxu0 %v428
        %480 = vmatprep.subr.bf16.mxu0 0
        %481 = vmatpush1.bf16.msra.mxu0 0
        %482 = vmatprep.subr.bf16.mxu0 0
        %483 = vmatpush1.bf16.msra.mxu0 0
        %484 = vmatprep.subr.bf16.mxu0 0
        %485 = vmatpush1.bf16.msra.mxu0 0
        %486 = vmatprep.subr.bf16.mxu0 0
        %487 = vmatpush1.bf16.msra.mxu0 0
        %488 = vmatprep.subr.bf16.mxu0 0
        %489 = vmatpush1.bf16.msra.mxu0 0
        %490 = vmatprep.subr.bf16.mxu0 0
        %491 = vmatpush1.bf16.msra.mxu0 0
        %492 = vmatprep.subr.bf16.mxu0 0
        %493 = vmatpush1.bf16.msra.mxu0 0
        %494 = vmatprep.subr.bf16.mxu0 0
        %495 = vmatpush1.bf16.msra.mxu0 0
        %496 = vmatprep.mubr.bf16.mxu0 0
        %497 = vmatmul.mubr.bf16.gmra.mrb[0].mxu0 %v271
        %v498 = vpop.f32.mrb[0].mxu0
        %v499 = vadd.f32 0.0, %v498
        %v500 = vpop.f32.mrb[0].mxu0
        %v501 = vadd.f32 0.0, %v500
        %v502 = vpop.f32.mrb[0].mxu0
        %v503 = vpop.f32.mrb[0].mxu0
        %504 = vdwg.mxu0
        %505 = vmatprep.subr.bf16.mxu0 %v403
        %506 = vmatpush1.bf16.msra.mxu0 %v402
        %507 = vmatprep.subr.bf16.mxu0 %v407
        %508 = vmatpush1.bf16.msra.mxu0 %v406
        %509 = vmatprep.subr.bf16.mxu0 %v411
        %510 = vmatpush1.bf16.msra.mxu0 %v410
        %511 = vmatprep.subr.bf16.mxu0 %v415
        %512 = vmatpush1.bf16.msra.mxu0 %v414
        %513 = vmatprep.subr.bf16.mxu0 %v419
        %514 = vmatpush1.bf16.msra.mxu0 %v418
        %515 = vmatprep.subr.bf16.mxu0 %v423
        %516 = vmatpush1.bf16.msra.mxu0 %v422
        %517 = vmatprep.subr.bf16.mxu0 %v427
        %518 = vmatpush1.bf16.msra.mxu0 %v426
        %519 = vmatprep.subr.bf16.mxu0 %v431
        %520 = vmatpush1.bf16.msra.mxu0 %v430
        %521 = vmatprep.subr.bf16.mxu0 0
        %522 = vmatpush1.bf16.msra.mxu0 0
        %523 = vmatprep.subr.bf16.mxu0 0
        %524 = vmatpush1.bf16.msra.mxu0 0
        %525 = vmatprep.subr.bf16.mxu0 0
        %526 = vmatpush1.bf16.msra.mxu0 0
        %527 = vmatprep.subr.bf16.mxu0 0
        %528 = vmatpush1.bf16.msra.mxu0 0
        %529 = vmatprep.subr.bf16.mxu0 0
        %530 = vmatpush1.bf16.msra.mxu0 0
        %531 = vmatprep.subr.bf16.mxu0 0
        %532 = vmatpush1.bf16.msra.mxu0 0
        %533 = vmatprep.subr.bf16.mxu0 0
        %534 = vmatpush1.bf16.msra.mxu0 0
        %535 = vmatprep.subr.bf16.mxu0 0
        %536 = vmatpush1.bf16.msra.mxu0 0
        %537 = vmatprep.mubr.bf16.mxu0 0
        %538 = vmatmul.mubr.bf16.gmra.mrb[0].mxu0 %v271
        %v539 = vpop.f32.mrb[0].mxu0
        %v540 = vadd.f32 0.0, %v539
        %v541 = vpop.f32.mrb[0].mxu0
        %v542 = vadd.f32 0.0, %v541
        %v543 = vpop.f32.mrb[0].mxu0
        %v544 = vpop.f32.mrb[0].mxu0
        %545 = vdwg.mxu0
        %v546 = vadd.f32 %v267, %v499
        %v547 = vadd.f32 %v268, %v501
        %v548 = vadd.f32 %v269, %v540
        %v549 = vadd.f32 %v270, %v542
        %v550 = vxor.u32 %v546, 2147483648
        %v551 = vmul.f32 %v550, 1.442695
        %v552 = vpow.pop %v551
        %v553 = vadd.f32 %v552, 1.0
        %v554 = vrcp.pop %v553
        %v555 = vmul.f32 1.0, %v554
        %v556 = vxor.u32 %v547, 2147483648
        %v557 = vmul.f32 %v556, 1.442695
        %v558 = vpow.pop %v557
        %v559 = vadd.f32 %v558, 1.0
        %v560 = vrcp.pop %v559
        %v561 = vmul.f32 1.0, %v560
        %v562 = vtanh.pop %v548
        %v563 = vxor.u32 %v549, 2147483648
        %v564 = vmul.f32 %v563, 1.442695
        %v565 = vpow.pop %v564
        %v566 = vadd.f32 %v565, 1.0
        %v567 = vrcp.pop %v566
        %v568 = vmul.f32 1.0, %v567
        %v569 = vmul.f32 %v561, %v266
        %v570 = vmul.f32 %v555, %v562
        %v571 = vadd.f32 %v569, %v570
        %v572 = vtanh.pop %v571
        %v573 = vmul.f32 %v568, %v572
        %s574 = smul.u32 %s29, 4
        %p575 = scmp.lt.s32.totalorder %s574, 10
        %s576 = scalar_select %p575, 1, 0
        %v577 = vstv %s576
        %vm578 = vcmp.eq.s32.totalorder %v577, 1
        %v579 = vsel %vm578, %v571, %v266
        %v580 = vsel %vm578, %v573, %v265
        %581 = vst [vmem:[#allocation10] sm:$0xff] %v579
        %582 = vst [vmem:[#allocation8] sm:$0xff] %v580
        %583 = vst [vmem:[%s251] sm:$0xff] %v580
        %v584 = vld [vmem:[#allocation8] sm:$0xff]
        %v585 = vld [vmem:[#allocation10] sm:$0xff]
        %s586 = scalar_lea.vmem %s227, 32 [#allocation2]
        %v587 = vld [vmem:[%s586] sm:$0xff]
        %v588 = vld [vmem:[%s586 + $0x8] sm:$0xff]
        %v589 = vld [vmem:[%s586 + $0x10] sm:$0xff]
        %v590 = vld [vmem:[%s586 + $0x18] sm:$0xff]
        %v591 = vpack.c.bf16 %v584, %v584
        %v592 = vld [vmem:[#allocation5] sm:$0xff]
        %v593 = vld [vmem:[#allocation5 + $0x8] sm:$0xff]
        %v594 = vld [vmem:[#allocation5 + $0x10] sm:$0xff]
        %v595 = vld [vmem:[#allocation5 + $0x18] sm:$0xff]
        %v596 = vld [vmem:[#allocation5 + $0x20] sm:$0xff]
        %v597 = vld [vmem:[#allocation5 + $0x28] sm:$0xff]
        %v598 = vld [vmem:[#allocation5 + $0x30] sm:$0xff]
        %v599 = vld [vmem:[#allocation5 + $0x38] sm:$0xff]
        %v600 = vld [vmem:[#allocation5 + $0x40] sm:$0xff]
        %v601 = vld [vmem:[#allocation5 + $0x48] sm:$0xff]
        %v602 = vld [vmem:[#allocation5 + $0x50] sm:$0xff]
        %v603 = vld [vmem:[#allocation5 + $0x58] sm:$0xff]
        %v604 = vld [vmem:[#allocation5 + $0x60] sm:$0xff]
        %v605 = vld [vmem:[#allocation5 + $0x68] sm:$0xff]
        %v606 = vld [vmem:[#allocation5 + $0x70] sm:$0xff]
        %v607 = vld [vmem:[#allocation5 + $0x78] sm:$0xff]
        %v608 = vld [vmem:[#allocation5 + $0x80] sm:$0xff]
        %v609 = vld [vmem:[#allocation5 + $0x88] sm:$0xff]
        %v610 = vld [vmem:[#allocation5 + $0x90] sm:$0xff]
        %v611 = vld [vmem:[#allocation5 + $0x98] sm:$0xff]
        %v612 = vld [vmem:[#allocation5 + $0xa0] sm:$0xff]
        %v613 = vld [vmem:[#allocation5 + $0xa8] sm:$0xff]
        %v614 = vld [vmem:[#allocation5 + $0xb0] sm:$0xff]
        %v615 = vld [vmem:[#allocation5 + $0xb8] sm:$0xff]
        %v616 = vld [vmem:[#allocation5 + $0xc0] sm:$0xff]
        %v617 = vld [vmem:[#allocation5 + $0xc8] sm:$0xff]
        %v618 = vld [vmem:[#allocation5 + $0xd0] sm:$0xff]
        %v619 = vld [vmem:[#allocation5 + $0xd8] sm:$0xff]
        %v620 = vld [vmem:[#allocation5 + $0xe0] sm:$0xff]
        %v621 = vld [vmem:[#allocation5 + $0xe8] sm:$0xff]
        %v622 = vld [vmem:[#allocation5 + $0xf0] sm:$0xff]
        %v623 = vld [vmem:[#allocation5 + $0xf8] sm:$0xff]
        %v656 = vunpack.c.l.b16 %v592
        %v657 = vunpack.c.h.b16 %v592
        %v658 = vunpack.c.l.b16 %v593
        %v659 = vunpack.c.h.b16 %v593
        %v660 = vunpack.c.l.b16 %v594
        %v661 = vunpack.c.h.b16 %v594
        %v662 = vunpack.c.l.b16 %v595
        %v663 = vunpack.c.h.b16 %v595
        %v664 = vunpack.c.l.b16 %v596
        %v665 = vunpack.c.h.b16 %v596
        %v666 = vunpack.c.l.b16 %v597
        %v667 = vunpack.c.h.b16 %v597
        %v668 = vunpack.c.l.b16 %v598
        %v669 = vunpack.c.h.b16 %v598
        %v670 = vunpack.c.l.b16 %v599
        %v671 = vunpack.c.h.b16 %v599
        %v672 = vunpack.c.l.b16 %v600
        %v673 = vunpack.c.h.b16 %v600
        %v674 = vunpack.c.l.b16 %v601
        %v675 = vunpack.c.h.b16 %v601
        %v676 = vunpack.c.l.b16 %v602
        %v677 = vunpack.c.h.b16 %v602
        %v678 = vunpack.c.l.b16 %v603
        %v679 = vunpack.c.h.b16 %v603
        %v680 = vunpack.c.l.b16 %v604
        %v681 = vunpack.c.h.b16 %v604
        %v682 = vunpack.c.l.b16 %v605
        %v683 = vunpack.c.h.b16 %v605
        %v684 = vunpack.c.l.b16 %v606
        %v685 = vunpack.c.h.b16 %v606
        %v686 = vunpack.c.l.b16 %v607
        %v687 = vunpack.c.h.b16 %v607
        %v688 = vunpack.c.l.b16 %v608
        %v689 = vunpack.c.h.b16 %v608
        %v690 = vunpack.c.l.b16 %v609
        %v691 = vunpack.c.h.b16 %v609
        %v692 = vunpack.c.l.b16 %v610
        %v693 = vunpack.c.h.b16 %v610
        %v694 = vunpack.c.l.b16 %v611
        %v695 = vunpack.c.h.b16 %v611
        %v696 = vunpack.c.l.b16 %v612
        %v697 = vunpack.c.h.b16 %v612
        %v698 = vunpack.c.l.b16 %v613
        %v699 = vunpack.c.h.b16 %v613
        %v700 = vunpack.c.l.b16 %v614
        %v701 = vunpack.c.h.b16 %v614
        %v702 = vunpack.c.l.b16 %v615
        %v703 = vunpack.c.h.b16 %v615
        %v704 = vunpack.c.l.b16 %v616
        %v705 = vunpack.c.h.b16 %v616
        %v706 = vunpack.c.l.b16 %v617
        %v707 = vunpack.c.h.b16 %v617
        %v708 = vunpack.c.l.b16 %v618
        %v709 = vunpack.c.h.b16 %v618
        %v710 = vunpack.c.l.b16 %v619
        %v711 = vunpack.c.h.b16 %v619
        %v712 = vunpack.c.l.b16 %v620
        %v713 = vunpack.c.h.b16 %v620
        %v714 = vunpack.c.l.b16 %v621
        %v715 = vunpack.c.h.b16 %v621
        %v716 = vunpack.c.l.b16 %v622
        %v717 = vunpack.c.h.b16 %v622
        %v718 = vunpack.c.l.b16 %v623
        %v719 = vunpack.c.h.b16 %v623
        %v720 = vpack.c.b16 %v660, %v656
        %v721 = vpack.c.b16 %v661, %v657
        %v722 = vpack.c.b16 %v662, %v658
        %v723 = vpack.c.b16 %v663, %v659
        %v724 = vpack.c.b16 %v668, %v664
        %v725 = vpack.c.b16 %v669, %v665
        %v726 = vpack.c.b16 %v670, %v666
        %v727 = vpack.c.b16 %v671, %v667
        %v728 = vpack.c.b16 %v676, %v672
        %v729 = vpack.c.b16 %v677, %v673
        %v730 = vpack.c.b16 %v678, %v674
        %v731 = vpack.c.b16 %v679, %v675
        %v732 = vpack.c.b16 %v684, %v680
        %v733 = vpack.c.b16 %v685, %v681
        %v734 = vpack.c.b16 %v686, %v682
        %v735 = vpack.c.b16 %v687, %v683
        %v736 = vpack.c.b16 %v692, %v688
        %v737 = vpack.c.b16 %v693, %v689
        %v738 = vpack.c.b16 %v694, %v690
        %v739 = vpack.c.b16 %v695, %v691
        %v740 = vpack.c.b16 %v700, %v696
        %v741 = vpack.c.b16 %v701, %v697
        %v742 = vpack.c.b16 %v702, %v698
        %v743 = vpack.c.b16 %v703, %v699
        %v744 = vpack.c.b16 %v708, %v704
        %v745 = vpack.c.b16 %v709, %v705
        %v746 = vpack.c.b16 %v710, %v706
        %v747 = vpack.c.b16 %v711, %v707
        %v748 = vpack.c.b16 %v716, %v712
        %v749 = vpack.c.b16 %v717, %v713
        %v750 = vpack.c.b16 %v718, %v714
        %v751 = vpack.c.b16 %v719, %v715
        %784 = vmatprep.subr.bf16.mxu0 %v721
        %785 = vmatpush1.bf16.msra.mxu0 %v720
        %786 = vmatprep.subr.bf16.mxu0 %v725
        %787 = vmatpush1.bf16.msra.mxu0 %v724
        %788 = vmatprep.subr.bf16.mxu0 %v729
        %789 = vmatpush1.bf16.msra.mxu0 %v728
        %790 = vmatprep.subr.bf16.mxu0 %v733
        %791 = vmatpush1.bf16.msra.mxu0 %v732
        %792 = vmatprep.subr.bf16.mxu0 %v737
        %793 = vmatpush1.bf16.msra.mxu0 %v736
        %794 = vmatprep.subr.bf16.mxu0 %v741
        %795 = vmatpush1.bf16.msra.mxu0 %v740
        %796 = vmatprep.subr.bf16.mxu0 %v745
        %797 = vmatpush1.bf16.msra.mxu0 %v744
        %798 = vmatprep.subr.bf16.mxu0 %v749
        %799 = vmatpush1.bf16.msra.mxu0 %v748
        %800 = vmatprep.subr.bf16.mxu0 0
        %801 = vmatpush1.bf16.msra.mxu0 0
        %802 = vmatprep.subr.bf16.mxu0 0
        %803 = vmatpush1.bf16.msra.mxu0 0
        %804 = vmatprep.subr.bf16.mxu0 0
        %805 = vmatpush1.bf16.msra.mxu0 0
        %806 = vmatprep.subr.bf16.mxu0 0
        %807 = vmatpush1.bf16.msra.mxu0 0
        %808 = vmatprep.subr.bf16.mxu0 0
        %809 = vmatpush1.bf16.msra.mxu0 0
        %810 = vmatprep.subr.bf16.mxu0 0
        %811 = vmatpush1.bf16.msra.mxu0 0
        %812 = vmatprep.subr.bf16.mxu0 0
        %813 = vmatpush1.bf16.msra.mxu0 0
        %814 = vmatprep.subr.bf16.mxu0 0
        %815 = vmatpush1.bf16.msra.mxu0 0
        %816 = vmatprep.mubr.bf16.mxu0 0
        %817 = vmatmul.mubr.bf16.gmra.mrb[0].mxu0 %v591
        %v818 = vpop.f32.mrb[0].mxu0
        %v819 = vadd.f32 0.0, %v818
        %v820 = vpop.f32.mrb[0].mxu0
        %v821 = vadd.f32 0.0, %v820
        %v822 = vpop.f32.mrb[0].mxu0
        %v823 = vpop.f32.mrb[0].mxu0
        %824 = vdwg.mxu0
        %825 = vmatprep.subr.bf16.mxu0 %v723
        %826 = vmatpush1.bf16.msra.mxu0 %v722
        %827 = vmatprep.subr.bf16.mxu0 %v727
        %828 = vmatpush1.bf16.msra.mxu0 %v726
        %829 = vmatprep.subr.bf16.mxu0 %v731
        %830 = vmatpush1.bf16.msra.mxu0 %v730
        %831 = vmatprep.subr.bf16.mxu0 %v735
        %832 = vmatpush1.bf16.msra.mxu0 %v734
        %833 = vmatprep.subr.bf16.mxu0 %v739
        %834 = vmatpush1.bf16.msra.mxu0 %v738
        %835 = vmatprep.subr.bf16.mxu0 %v743
        %836 = vmatpush1.bf16.msra.mxu0 %v742
        %837 = vmatprep.subr.bf16.mxu0 %v747
        %838 = vmatpush1.bf16.msra.mxu0 %v746
        %839 = vmatprep.subr.bf16.mxu0 %v751
        %840 = vmatpush1.bf16.msra.mxu0 %v750
        %841 = vmatprep.subr.bf16.mxu0 0
        %842 = vmatpush1.bf16.msra.mxu0 0
        %843 = vmatprep.subr.bf16.mxu0 0
        %844 = vmatpush1.bf16.msra.mxu0 0
        %845 = vmatprep.subr.bf16.mxu0 0
        %846 = vmatpush1.bf16.msra.mxu0 0
        %847 = vmatprep.subr.bf16.mxu0 0
        %848 = vmatpush1.bf16.msra.mxu0 0
        %849 = vmatprep.subr.bf16.mxu0 0
        %850 = vmatpush1.bf16.msra.mxu0 0
        %851 = vmatprep.subr.bf16.mxu0 0
        %852 = vmatpush1.bf16.msra.mxu0 0
        %853 = vmatprep.subr.bf16.mxu0 0
        %854 = vmatpush1.bf16.msra.mxu0 0
        %855 = vmatprep.subr.bf16.mxu0 0
        %856 = vmatpush1.bf16.msra.mxu0 0
        %857 = vmatprep.mubr.bf16.mxu0 0
        %858 = vmatmul.mubr.bf16.gmra.mrb[0].mxu0 %v591
        %v859 = vpop.f32.mrb[0].mxu0
        %v860 = vadd.f32 0.0, %v859
        %v861 = vpop.f32.mrb[0].mxu0
        %v862 = vadd.f32 0.0, %v861
        %v863 = vpop.f32.mrb[0].mxu0
        %v864 = vpop.f32.mrb[0].mxu0
        %865 = vdwg.mxu0
        %v866 = vadd.f32 %v587, %v819
        %v867 = vadd.f32 %v588, %v821
        %v868 = vadd.f32 %v589, %v860
        %v869 = vadd.f32 %v590, %v862
        %v870 = vxor.u32 %v866, 2147483648
        %v871 = vmul.f32 %v870, 1.442695
        %v872 = vpow.pop %v871
        %v873 = vadd.f32 %v872, 1.0
        %v874 = vrcp.pop %v873
        %v875 = vmul.f32 1.0, %v874
        %v876 = vxor.u32 %v867, 2147483648
        %v877 = vmul.f32 %v876, 1.442695
        %v878 = vpow.pop %v877
        %v879 = vadd.f32 %v878, 1.0
        %v880 = vrcp.pop %v879
        %v881 = vmul.f32 1.0, %v880
        %v882 = vtanh.pop %v868
        %v883 = vxor.u32 %v869, 2147483648
        %v884 = vmul.f32 %v883, 1.442695
        %v885 = vpow.pop %v884
        %v886 = vadd.f32 %v885, 1.0
        %v887 = vrcp.pop %v886
        %v888 = vmul.f32 1.0, %v887
        %v889 = vmul.f32 %v881, %v585
        %v890 = vmul.f32 %v875, %v882
        %v891 = vadd.f32 %v889, %v890
        %v892 = vtanh.pop %v891
        %v893 = vmul.f32 %v888, %v892
        %s894 = sadd.s32 %s574, 1
        %p895 = scmp.lt.s32.totalorder %s894, 10
        %s896 = scalar_select %p895, 1, 0
        %v897 = vstv %s896
        %vm898 = vcmp.eq.s32.totalorder %v897, 1
        %v899 = vsel %vm898, %v891, %v585
        %v900 = vsel %vm898, %v893, %v584
        %901 = vst [vmem:[#allocation10] sm:$0xff] %v899
        %902 = vst [vmem:[#allocation8] sm:$0xff] %v900
        %s903 = scalar_lea.vmem %s251, 8 [#allocation7]
        %904 = vst [vmem:[%s903] sm:$0xff] %v900
        %v905 = vld [vmem:[#allocation8] sm:$0xff]
        %v906 = vld [vmem:[#allocation10] sm:$0xff]
        %s907 = scalar_lea.vmem %s227, 64 [#allocation2]
        %v908 = vld [vmem:[%s907] sm:$0xff]
        %v909 = vld [vmem:[%s907 + $0x8] sm:$0xff]
        %v910 = vld [vmem:[%s907 + $0x10] sm:$0xff]
        %v911 = vld [vmem:[%s907 + $0x18] sm:$0xff]
        %v912 = vpack.c.bf16 %v905, %v905
        %v913 = vld [vmem:[#allocation5] sm:$0xff]
        %v914 = vld [vmem:[#allocation5 + $0x8] sm:$0xff]
        %v915 = vld [vmem:[#allocation5 + $0x10] sm:$0xff]
        %v916 = vld [vmem:[#allocation5 + $0x18] sm:$0xff]
        %v917 = vld [vmem:[#allocation5 + $0x20] sm:$0xff]
        %v918 = vld [vmem:[#allocation5 + $0x28] sm:$0xff]
        %v919 = vld [vmem:[#allocation5 + $0x30] sm:$0xff]
        %v920 = vld [vmem:[#allocation5 + $0x38] sm:$0xff]
        %v921 = vld [vmem:[#allocation5 + $0x40] sm:$0xff]
        %v922 = vld [vmem:[#allocation5 + $0x48] sm:$0xff]
        %v923 = vld [vmem:[#allocation5 + $0x50] sm:$0xff]
        %v924 = vld [vmem:[#allocation5 + $0x58] sm:$0xff]
        %v925 = vld [vmem:[#allocation5 + $0x60] sm:$0xff]
        %v926 = vld [vmem:[#allocation5 + $0x68] sm:$0xff]
        %v927 = vld [vmem:[#allocation5 + $0x70] sm:$0xff]
        %v928 = vld [vmem:[#allocation5 + $0x78] sm:$0xff]
        %v929 = vld [vmem:[#allocation5 + $0x80] sm:$0xff]
        %v930 = vld [vmem:[#allocation5 + $0x88] sm:$0xff]
        %v931 = vld [vmem:[#allocation5 + $0x90] sm:$0xff]
        %v932 = vld [vmem:[#allocation5 + $0x98] sm:$0xff]
        %v933 = vld [vmem:[#allocation5 + $0xa0] sm:$0xff]
        %v934 = vld [vmem:[#allocation5 + $0xa8] sm:$0xff]
        %v935 = vld [vmem:[#allocation5 + $0xb0] sm:$0xff]
        %v936 = vld [vmem:[#allocation5 + $0xb8] sm:$0xff]
        %v937 = vld [vmem:[#allocation5 + $0xc0] sm:$0xff]
        %v938 = vld [vmem:[#allocation5 + $0xc8] sm:$0xff]
        %v939 = vld [vmem:[#allocation5 + $0xd0] sm:$0xff]
        %v940 = vld [vmem:[#allocation5 + $0xd8] sm:$0xff]
        %v941 = vld [vmem:[#allocation5 + $0xe0] sm:$0xff]
        %v942 = vld [vmem:[#allocation5 + $0xe8] sm:$0xff]
        %v943 = vld [vmem:[#allocation5 + $0xf0] sm:$0xff]
        %v944 = vld [vmem:[#allocation5 + $0xf8] sm:$0xff]
        %v977 = vunpack.c.l.b16 %v913
        %v978 = vunpack.c.h.b16 %v913
        %v979 = vunpack.c.l.b16 %v914
        %v980 = vunpack.c.h.b16 %v914
        %v981 = vunpack.c.l.b16 %v915
        %v982 = vunpack.c.h.b16 %v915
        %v983 = vunpack.c.l.b16 %v916
        %v984 = vunpack.c.h.b16 %v916
        %v985 = vunpack.c.l.b16 %v917
        %v986 = vunpack.c.h.b16 %v917
        %v987 = vunpack.c.l.b16 %v918
        %v988 = vunpack.c.h.b16 %v918
        %v989 = vunpack.c.l.b16 %v919
        %v990 = vunpack.c.h.b16 %v919
        %v991 = vunpack.c.l.b16 %v920
        %v992 = vunpack.c.h.b16 %v920
        %v993 = vunpack.c.l.b16 %v921
        %v994 = vunpack.c.h.b16 %v921
        %v995 = vunpack.c.l.b16 %v922
        %v996 = vunpack.c.h.b16 %v922
        %v997 = vunpack.c.l.b16 %v923
        %v998 = vunpack.c.h.b16 %v923
        %v999 = vunpack.c.l.b16 %v924
        %v1000 = vunpack.c.h.b16 %v924
        %v1001 = vunpack.c.l.b16 %v925
        %v1002 = vunpack.c.h.b16 %v925
        %v1003 = vunpack.c.l.b16 %v926
        %v1004 = vunpack.c.h.b16 %v926
        %v1005 = vunpack.c.l.b16 %v927
        %v1006 = vunpack.c.h.b16 %v927
        %v1007 = vunpack.c.l.b16 %v928
        %v1008 = vunpack.c.h.b16 %v928
        %v1009 = vunpack.c.l.b16 %v929
        %v1010 = vunpack.c.h.b16 %v929
        %v1011 = vunpack.c.l.b16 %v930
        %v1012 = vunpack.c.h.b16 %v930
        %v1013 = vunpack.c.l.b16 %v931
        %v1014 = vunpack.c.h.b16 %v931
        %v1015 = vunpack.c.l.b16 %v932
        %v1016 = vunpack.c.h.b16 %v932
        %v1017 = vunpack.c.l.b16 %v933
        %v1018 = vunpack.c.h.b16 %v933
        %v1019 = vunpack.c.l.b16 %v934
        %v1020 = vunpack.c.h.b16 %v934
        %v1021 = vunpack.c.l.b16 %v935
        %v1022 = vunpack.c.h.b16 %v935
        %v1023 = vunpack.c.l.b16 %v936
        %v1024 = vunpack.c.h.b16 %v936
        %v1025 = vunpack.c.l.b16 %v937
        %v1026 = vunpack.c.h.b16 %v937
        %v1027 = vunpack.c.l.b16 %v938
        %v1028 = vunpack.c.h.b16 %v938
        %v1029 = vunpack.c.l.b16 %v939
        %v1030 = vunpack.c.h.b16 %v939
        %v1031 = vunpack.c.l.b16 %v940
        %v1032 = vunpack.c.h.b16 %v940
        %v1033 = vunpack.c.l.b16 %v941
        %v1034 = vunpack.c.h.b16 %v941
        %v1035 = vunpack.c.l.b16 %v942
        %v1036 = vunpack.c.h.b16 %v942
        %v1037 = vunpack.c.l.b16 %v943
        %v1038 = vunpack.c.h.b16 %v943
        %v1039 = vunpack.c.l.b16 %v944
        %v1040 = vunpack.c.h.b16 %v944
        %v1041 = vpack.c.b16 %v981, %v977
        %v1042 = vpack.c.b16 %v982, %v978
        %v1043 = vpack.c.b16 %v983, %v979
        %v1044 = vpack.c.b16 %v984, %v980
        %v1045 = vpack.c.b16 %v989, %v985
        %v1046 = vpack.c.b16 %v990, %v986
        %v1047 = vpack.c.b16 %v991, %v987
        %v1048 = vpack.c.b16 %v992, %v988
        %v1049 = vpack.c.b16 %v997, %v993
        %v1050 = vpack.c.b16 %v998, %v994
        %v1051 = vpack.c.b16 %v999, %v995
        %v1052 = vpack.c.b16 %v1000, %v996
        %v1053 = vpack.c.b16 %v1005, %v1001
        %v1054 = vpack.c.b16 %v1006, %v1002
        %v1055 = vpack.c.b16 %v1007, %v1003
        %v1056 = vpack.c.b16 %v1008, %v1004
        %v1057 = vpack.c.b16 %v1013, %v1009
        %v1058 = vpack.c.b16 %v1014, %v1010
        %v1059 = vpack.c.b16 %v1015, %v1011
        %v1060 = vpack.c.b16 %v1016, %v1012
        %v1061 = vpack.c.b16 %v1021, %v1017
        %v1062 = vpack.c.b16 %v1022, %v1018
        %v1063 = vpack.c.b16 %v1023, %v1019
        %v1064 = vpack.c.b16 %v1024, %v1020
        %v1065 = vpack.c.b16 %v1029, %v1025
        %v1066 = vpack.c.b16 %v1030, %v1026
        %v1067 = vpack.c.b16 %v1031, %v1027
        %v1068 = vpack.c.b16 %v1032, %v1028
        %v1069 = vpack.c.b16 %v1037, %v1033
        %v1070 = vpack.c.b16 %v1038, %v1034
        %v1071 = vpack.c.b16 %v1039, %v1035
        %v1072 = vpack.c.b16 %v1040, %v1036
        %1105 = vmatprep.subr.bf16.mxu0 %v1042
        %1106 = vmatpush1.bf16.msra.mxu0 %v1041
        %1107 = vmatprep.subr.bf16.mxu0 %v1046
        %1108 = vmatpush1.bf16.msra.mxu0 %v1045
        %1109 = vmatprep.subr.bf16.mxu0 %v1050
        %1110 = vmatpush1.bf16.msra.mxu0 %v1049
        %1111 = vmatprep.subr.bf16.mxu0 %v1054
        %1112 = vmatpush1.bf16.msra.mxu0 %v1053
        %1113 = vmatprep.subr.bf16.mxu0 %v1058
        %1114 = vmatpush1.bf16.msra.mxu0 %v1057
        %1115 = vmatprep.subr.bf16.mxu0 %v1062
        %1116 = vmatpush1.bf16.msra.mxu0 %v1061
        %1117 = vmatprep.subr.bf16.mxu0 %v1066
        %1118 = vmatpush1.bf16.msra.mxu0 %v1065
        %1119 = vmatprep.subr.bf16.mxu0 %v1070
        %1120 = vmatpush1.bf16.msra.mxu0 %v1069
        %1121 = vmatprep.subr.bf16.mxu0 0
        %1122 = vmatpush1.bf16.msra.mxu0 0
        %1123 = vmatprep.subr.bf16.mxu0 0
        %1124 = vmatpush1.bf16.msra.mxu0 0
        %1125 = vmatprep.subr.bf16.mxu0 0
        %1126 = vmatpush1.bf16.msra.mxu0 0
        %1127 = vmatprep.subr.bf16.mxu0 0
        %1128 = vmatpush1.bf16.msra.mxu0 0
        %1129 = vmatprep.subr.bf16.mxu0 0
        %1130 = vmatpush1.bf16.msra.mxu0 0
        %1131 = vmatprep.subr.bf16.mxu0 0
        %1132 = vmatpush1.bf16.msra.mxu0 0
        %1133 = vmatprep.subr.bf16.mxu0 0
        %1134 = vmatpush1.bf16.msra.mxu0 0
        %1135 = vmatprep.subr.bf16.mxu0 0
        %1136 = vmatpush1.bf16.msra.mxu0 0
        %1137 = vmatprep.mubr.bf16.mxu0 0
        %1138 = vmatmul.mubr.bf16.gmra.mrb[0].mxu0 %v912
        %v1139 = vpop.f32.mrb[0].mxu0
        %v1140 = vadd.f32 0.0, %v1139
        %v1141 = vpop.f32.mrb[0].mxu0
        %v1142 = vadd.f32 0.0, %v1141
        %v1143 = vpop.f32.mrb[0].mxu0
        %v1144 = vpop.f32.mrb[0].mxu0
        %1145 = vdwg.mxu0
        %1146 = vmatprep.subr.bf16.mxu0 %v1044
        %1147 = vmatpush1.bf16.msra.mxu0 %v1043
        %1148 = vmatprep.subr.bf16.mxu0 %v1048
        %1149 = vmatpush1.bf16.msra.mxu0 %v1047
        %1150 = vmatprep.subr.bf16.mxu0 %v1052
        %1151 = vmatpush1.bf16.msra.mxu0 %v1051
        %1152 = vmatprep.subr.bf16.mxu0 %v1056
        %1153 = vmatpush1.bf16.msra.mxu0 %v1055
        %1154 = vmatprep.subr.bf16.mxu0 %v1060
        %1155 = vmatpush1.bf16.msra.mxu0 %v1059
        %1156 = vmatprep.subr.bf16.mxu0 %v1064
        %1157 = vmatpush1.bf16.msra.mxu0 %v1063
        %1158 = vmatprep.subr.bf16.mxu0 %v1068
        %1159 = vmatpush1.bf16.msra.mxu0 %v1067
        %1160 = vmatprep.subr.bf16.mxu0 %v1072
        %1161 = vmatpush1.bf16.msra.mxu0 %v1071
        %1162 = vmatprep.subr.bf16.mxu0 0
        %1163 = vmatpush1.bf16.msra.mxu0 0
        %1164 = vmatprep.subr.bf16.mxu0 0
        %1165 = vmatpush1.bf16.msra.mxu0 0
        %1166 = vmatprep.subr.bf16.mxu0 0
        %1167 = vmatpush1.bf16.msra.mxu0 0
        %1168 = vmatprep.subr.bf16.mxu0 0
        %1169 = vmatpush1.bf16.msra.mxu0 0
        %1170 = vmatprep.subr.bf16.mxu0 0
        %1171 = vmatpush1.bf16.msra.mxu0 0
        %1172 = vmatprep.subr.bf16.mxu0 0
        %1173 = vmatpush1.bf16.msra.mxu0 0
        %1174 = vmatprep.subr.bf16.mxu0 0
        %1175 = vmatpush1.bf16.msra.mxu0 0
        %1176 = vmatprep.subr.bf16.mxu0 0
        %1177 = vmatpush1.bf16.msra.mxu0 0
        %1178 = vmatprep.mubr.bf16.mxu0 0
        %1179 = vmatmul.mubr.bf16.gmra.mrb[0].mxu0 %v912
        %v1180 = vpop.f32.mrb[0].mxu0
        %v1181 = vadd.f32 0.0, %v1180
        %v1182 = vpop.f32.mrb[0].mxu0
        %v1183 = vadd.f32 0.0, %v1182
        %v1184 = vpop.f32.mrb[0].mxu0
        %v1185 = vpop.f32.mrb[0].mxu0
        %1186 = vdwg.mxu0
        %v1187 = vadd.f32 %v908, %v1140
        %v1188 = vadd.f32 %v909, %v1142
        %v1189 = vadd.f32 %v910, %v1181
        %v1190 = vadd.f32 %v911, %v1183
        %v1191 = vxor.u32 %v1187, 2147483648
        %v1192 = vmul.f32 %v1191, 1.442695
        %v1193 = vpow.pop %v1192
        %v1194 = vadd.f32 %v1193, 1.0
        %v1195 = vrcp.pop %v1194
        %v1196 = vmul.f32 1.0, %v1195
        %v1197 = vxor.u32 %v1188, 2147483648
        %v1198 = vmul.f32 %v1197, 1.442695
        %v1199 = vpow.pop %v1198
        %v1200 = vadd.f32 %v1199, 1.0
        %v1201 = vrcp.pop %v1200
        %v1202 = vmul.f32 1.0, %v1201
        %v1203 = vtanh.pop %v1189
        %v1204 = vxor.u32 %v1190, 2147483648
        %v1205 = vmul.f32 %v1204, 1.442695
        %v1206 = vpow.pop %v1205
        %v1207 = vadd.f32 %v1206, 1.0
        %v1208 = vrcp.pop %v1207
        %v1209 = vmul.f32 1.0, %v1208
        %v1210 = vmul.f32 %v1202, %v906
        %v1211 = vmul.f32 %v1196, %v1203
        %v1212 = vadd.f32 %v1210, %v1211
        %v1213 = vtanh.pop %v1212
        %v1214 = vmul.f32 %v1209, %v1213
        %s1215 = sadd.s32 %s574, 2
        %p1216 = scmp.lt.s32.totalorder %s1215, 10
        %s1217 = scalar_select %p1216, 1, 0
        %v1218 = vstv %s1217
        %vm1219 = vcmp.eq.s32.totalorder %v1218, 1
        %v1220 = vsel %vm1219, %v1212, %v906
        %v1221 = vsel %vm1219, %v1214, %v905
        %1222 = vst [vmem:[#allocation10] sm:$0xff] %v1220
        %1223 = vst [vmem:[#allocation8] sm:$0xff] %v1221
        %s1224 = scalar_lea.vmem %s251, 16 [#allocation7]
        %1225 = vst [vmem:[%s1224] sm:$0xff] %v1221
        %v1226 = vld [vmem:[#allocation8] sm:$0xff]
        %v1227 = vld [vmem:[#allocation10] sm:$0xff]
        %s1228 = scalar_lea.vmem %s227, 96 [#allocation2]
        %v1229 = vld [vmem:[%s1228] sm:$0xff]
        %v1230 = vld [vmem:[%s1228 + $0x8] sm:$0xff]
        %v1231 = vld [vmem:[%s1228 + $0x10] sm:$0xff]
        %v1232 = vld [vmem:[%s1228 + $0x18] sm:$0xff]
        %v1233 = vpack.c.bf16 %v1226, %v1226
        %v1234 = vld [vmem:[#allocation5] sm:$0xff]
        %v1235 = vld [vmem:[#allocation5 + $0x8] sm:$0xff]
        %v1236 = vld [vmem:[#allocation5 + $0x10] sm:$0xff]
        %v1237 = vld [vmem:[#allocation5 + $0x18] sm:$0xff]
        %v1238 = vld [vmem:[#allocation5 + $0x20] sm:$0xff]
        %v1239 = vld [vmem:[#allocation5 + $0x28] sm:$0xff]
        %v1240 = vld [vmem:[#allocation5 + $0x30] sm:$0xff]
        %v1241 = vld [vmem:[#allocation5 + $0x38] sm:$0xff]
        %v1242 = vld [vmem:[#allocation5 + $0x40] sm:$0xff]
        %v1243 = vld [vmem:[#allocation5 + $0x48] sm:$0xff]
        %v1244 = vld [vmem:[#allocation5 + $0x50] sm:$0xff]
        %v1245 = vld [vmem:[#allocation5 + $0x58] sm:$0xff]
        %v1246 = vld [vmem:[#allocation5 + $0x60] sm:$0xff]
        %v1247 = vld [vmem:[#allocation5 + $0x68] sm:$0xff]
        %v1248 = vld [vmem:[#allocation5 + $0x70] sm:$0xff]
        %v1249 = vld [vmem:[#allocation5 + $0x78] sm:$0xff]
        %v1250 = vld [vmem:[#allocation5 + $0x80] sm:$0xff]
        %v1251 = vld [vmem:[#allocation5 + $0x88] sm:$0xff]
        %v1252 = vld [vmem:[#allocation5 + $0x90] sm:$0xff]
        %v1253 = vld [vmem:[#allocation5 + $0x98] sm:$0xff]
        %v1254 = vld [vmem:[#allocation5 + $0xa0] sm:$0xff]
        %v1255 = vld [vmem:[#allocation5 + $0xa8] sm:$0xff]
        %v1256 = vld [vmem:[#allocation5 + $0xb0] sm:$0xff]
        %v1257 = vld [vmem:[#allocation5 + $0xb8] sm:$0xff]
        %v1258 = vld [vmem:[#allocation5 + $0xc0] sm:$0xff]
        %v1259 = vld [vmem:[#allocation5 + $0xc8] sm:$0xff]
        %v1260 = vld [vmem:[#allocation5 + $0xd0] sm:$0xff]
        %v1261 = vld [vmem:[#allocation5 + $0xd8] sm:$0xff]
        %v1262 = vld [vmem:[#allocation5 + $0xe0] sm:$0xff]
        %v1263 = vld [vmem:[#allocation5 + $0xe8] sm:$0xff]
        %v1264 = vld [vmem:[#allocation5 + $0xf0] sm:$0xff]
        %v1265 = vld [vmem:[#allocation5 + $0xf8] sm:$0xff]
        %v1298 = vunpack.c.l.b16 %v1234
        %v1299 = vunpack.c.h.b16 %v1234
        %v1300 = vunpack.c.l.b16 %v1235
        %v1301 = vunpack.c.h.b16 %v1235
        %v1302 = vunpack.c.l.b16 %v1236
        %v1303 = vunpack.c.h.b16 %v1236
        %v1304 = vunpack.c.l.b16 %v1237
        %v1305 = vunpack.c.h.b16 %v1237
        %v1306 = vunpack.c.l.b16 %v1238
        %v1307 = vunpack.c.h.b16 %v1238
        %v1308 = vunpack.c.l.b16 %v1239
        %v1309 = vunpack.c.h.b16 %v1239
        %v1310 = vunpack.c.l.b16 %v1240
        %v1311 = vunpack.c.h.b16 %v1240
        %v1312 = vunpack.c.l.b16 %v1241
        %v1313 = vunpack.c.h.b16 %v1241
        %v1314 = vunpack.c.l.b16 %v1242
        %v1315 = vunpack.c.h.b16 %v1242
        %v1316 = vunpack.c.l.b16 %v1243
        %v1317 = vunpack.c.h.b16 %v1243
        %v1318 = vunpack.c.l.b16 %v1244
        %v1319 = vunpack.c.h.b16 %v1244
        %v1320 = vunpack.c.l.b16 %v1245
        %v1321 = vunpack.c.h.b16 %v1245
        %v1322 = vunpack.c.l.b16 %v1246
        %v1323 = vunpack.c.h.b16 %v1246
        %v1324 = vunpack.c.l.b16 %v1247
        %v1325 = vunpack.c.h.b16 %v1247
        %v1326 = vunpack.c.l.b16 %v1248
        %v1327 = vunpack.c.h.b16 %v1248
        %v1328 = vunpack.c.l.b16 %v1249
        %v1329 = vunpack.c.h.b16 %v1249
        %v1330 = vunpack.c.l.b16 %v1250
        %v1331 = vunpack.c.h.b16 %v1250
        %v1332 = vunpack.c.l.b16 %v1251
        %v1333 = vunpack.c.h.b16 %v1251
        %v1334 = vunpack.c.l.b16 %v1252
        %v1335 = vunpack.c.h.b16 %v1252
        %v1336 = vunpack.c.l.b16 %v1253
        %v1337 = vunpack.c.h.b16 %v1253
        %v1338 = vunpack.c.l.b16 %v1254
        %v1339 = vunpack.c.h.b16 %v1254
        %v1340 = vunpack.c.l.b16 %v1255
        %v1341 = vunpack.c.h.b16 %v1255
        %v1342 = vunpack.c.l.b16 %v1256
        %v1343 = vunpack.c.h.b16 %v1256
        %v1344 = vunpack.c.l.b16 %v1257
        %v1345 = vunpack.c.h.b16 %v1257
        %v1346 = vunpack.c.l.b16 %v1258
        %v1347 = vunpack.c.h.b16 %v1258
        %v1348 = vunpack.c.l.b16 %v1259
        %v1349 = vunpack.c.h.b16 %v1259
        %v1350 = vunpack.c.l.b16 %v1260
        %v1351 = vunpack.c.h.b16 %v1260
        %v1352 = vunpack.c.l.b16 %v1261
        %v1353 = vunpack.c.h.b16 %v1261
        %v1354 = vunpack.c.l.b16 %v1262
        %v1355 = vunpack.c.h.b16 %v1262
        %v1356 = vunpack.c.l.b16 %v1263
        %v1357 = vunpack.c.h.b16 %v1263
        %v1358 = vunpack.c.l.b16 %v1264
        %v1359 = vunpack.c.h.b16 %v1264
        %v1360 = vunpack.c.l.b16 %v1265
        %v1361 = vunpack.c.h.b16 %v1265
        %v1362 = vpack.c.b16 %v1302, %v1298
        %v1363 = vpack.c.b16 %v1303, %v1299
        %v1364 = vpack.c.b16 %v1304, %v1300
        %v1365 = vpack.c.b16 %v1305, %v1301
        %v1366 = vpack.c.b16 %v1310, %v1306
        %v1367 = vpack.c.b16 %v1311, %v1307
        %v1368 = vpack.c.b16 %v1312, %v1308
        %v1369 = vpack.c.b16 %v1313, %v1309
        %v1370 = vpack.c.b16 %v1318, %v1314
        %v1371 = vpack.c.b16 %v1319, %v1315
        %v1372 = vpack.c.b16 %v1320, %v1316
        %v1373 = vpack.c.b16 %v1321, %v1317
        %v1374 = vpack.c.b16 %v1326, %v1322
        %v1375 = vpack.c.b16 %v1327, %v1323
        %v1376 = vpack.c.b16 %v1328, %v1324
        %v1377 = vpack.c.b16 %v1329, %v1325
        %v1378 = vpack.c.b16 %v1334, %v1330
        %v1379 = vpack.c.b16 %v1335, %v1331
        %v1380 = vpack.c.b16 %v1336, %v1332
        %v1381 = vpack.c.b16 %v1337, %v1333
        %v1382 = vpack.c.b16 %v1342, %v1338
        %v1383 = vpack.c.b16 %v1343, %v1339
        %v1384 = vpack.c.b16 %v1344, %v1340
        %v1385 = vpack.c.b16 %v1345, %v1341
        %v1386 = vpack.c.b16 %v1350, %v1346
        %v1387 = vpack.c.b16 %v1351, %v1347
        %v1388 = vpack.c.b16 %v1352, %v1348
        %v1389 = vpack.c.b16 %v1353, %v1349
        %v1390 = vpack.c.b16 %v1358, %v1354
        %v1391 = vpack.c.b16 %v1359, %v1355
        %v1392 = vpack.c.b16 %v1360, %v1356
        %v1393 = vpack.c.b16 %v1361, %v1357
        %1426 = vmatprep.subr.bf16.mxu0 %v1363
        %1427 = vmatpush1.bf16.msra.mxu0 %v1362
        %1428 = vmatprep.subr.bf16.mxu0 %v1367
        %1429 = vmatpush1.bf16.msra.mxu0 %v1366
        %1430 = vmatprep.subr.bf16.mxu0 %v1371
        %1431 = vmatpush1.bf16.msra.mxu0 %v1370
        %1432 = vmatprep.subr.bf16.mxu0 %v1375
        %1433 = vmatpush1.bf16.msra.mxu0 %v1374
        %1434 = vmatprep.subr.bf16.mxu0 %v1379
        %1435 = vmatpush1.bf16.msra.mxu0 %v1378
        %1436 = vmatprep.subr.bf16.mxu0 %v1383
        %1437 = vmatpush1.bf16.msra.mxu0 %v1382
        %1438 = vmatprep.subr.bf16.mxu0 %v1387
        %1439 = vmatpush1.bf16.msra.mxu0 %v1386
        %1440 = vmatprep.subr.bf16.mxu0 %v1391
        %1441 = vmatpush1.bf16.msra.mxu0 %v1390
        %1442 = vmatprep.subr.bf16.mxu0 0
        %1443 = vmatpush1.bf16.msra.mxu0 0
        %1444 = vmatprep.subr.bf16.mxu0 0
        %1445 = vmatpush1.bf16.msra.mxu0 0
        %1446 = vmatprep.subr.bf16.mxu0 0
        %1447 = vmatpush1.bf16.msra.mxu0 0
        %1448 = vmatprep.subr.bf16.mxu0 0
        %1449 = vmatpush1.bf16.msra.mxu0 0
        %1450 = vmatprep.subr.bf16.mxu0 0
        %1451 = vmatpush1.bf16.msra.mxu0 0
        %1452 = vmatprep.subr.bf16.mxu0 0
        %1453 = vmatpush1.bf16.msra.mxu0 0
        %1454 = vmatprep.subr.bf16.mxu0 0
        %1455 = vmatpush1.bf16.msra.mxu0 0
        %1456 = vmatprep.subr.bf16.mxu0 0
        %1457 = vmatpush1.bf16.msra.mxu0 0
        %1458 = vmatprep.mubr.bf16.mxu0 0
        %1459 = vmatmul.mubr.bf16.gmra.mrb[0].mxu0 %v1233
        %v1460 = vpop.f32.mrb[0].mxu0
        %v1461 = vadd.f32 0.0, %v1460
        %v1462 = vpop.f32.mrb[0].mxu0
        %v1463 = vadd.f32 0.0, %v1462
        %v1464 = vpop.f32.mrb[0].mxu0
        %v1465 = vpop.f32.mrb[0].mxu0
        %1466 = vdwg.mxu0
        %1467 = vmatprep.subr.bf16.mxu0 %v1365
        %1468 = vmatpush1.bf16.msra.mxu0 %v1364
        %1469 = vmatprep.subr.bf16.mxu0 %v1369
        %1470 = vmatpush1.bf16.msra.mxu0 %v1368
        %1471 = vmatprep.subr.bf16.mxu0 %v1373
        %1472 = vmatpush1.bf16.msra.mxu0 %v1372
        %1473 = vmatprep.subr.bf16.mxu0 %v1377
        %1474 = vmatpush1.bf16.msra.mxu0 %v1376
        %1475 = vmatprep.subr.bf16.mxu0 %v1381
        %1476 = vmatpush1.bf16.msra.mxu0 %v1380
        %1477 = vmatprep.subr.bf16.mxu0 %v1385
        %1478 = vmatpush1.bf16.msra.mxu0 %v1384
        %1479 = vmatprep.subr.bf16.mxu0 %v1389
        %1480 = vmatpush1.bf16.msra.mxu0 %v1388
        %1481 = vmatprep.subr.bf16.mxu0 %v1393
        %1482 = vmatpush1.bf16.msra.mxu0 %v1392
        %1483 = vmatprep.subr.bf16.mxu0 0
        %1484 = vmatpush1.bf16.msra.mxu0 0
        %1485 = vmatprep.subr.bf16.mxu0 0
        %1486 = vmatpush1.bf16.msra.mxu0 0
        %1487 = vmatprep.subr.bf16.mxu0 0
        %1488 = vmatpush1.bf16.msra.mxu0 0
        %1489 = vmatprep.subr.bf16.mxu0 0
        %1490 = vmatpush1.bf16.msra.mxu0 0
        %1491 = vmatprep.subr.bf16.mxu0 0
        %1492 = vmatpush1.bf16.msra.mxu0 0
        %1493 = vmatprep.subr.bf16.mxu0 0
        %1494 = vmatpush1.bf16.msra.mxu0 0
        %1495 = vmatprep.subr.bf16.mxu0 0
        %1496 = vmatpush1.bf16.msra.mxu0 0
        %1497 = vmatprep.subr.bf16.mxu0 0
        %1498 = vmatpush1.bf16.msra.mxu0 0
        %1499 = vmatprep.mubr.bf16.mxu0 0
        %1500 = vmatmul.mubr.bf16.gmra.mrb[0].mxu0 %v1233
        %v1501 = vpop.f32.mrb[0].mxu0
        %v1502 = vadd.f32 0.0, %v1501
        %v1503 = vpop.f32.mrb[0].mxu0
        %v1504 = vadd.f32 0.0, %v1503
        %v1505 = vpop.f32.mrb[0].mxu0
        %v1506 = vpop.f32.mrb[0].mxu0
        %1507 = vdwg.mxu0
        %v1508 = vadd.f32 %v1229, %v1461
        %v1509 = vadd.f32 %v1230, %v1463
        %v1510 = vadd.f32 %v1231, %v1502
        %v1511 = vadd.f32 %v1232, %v1504
        %v1512 = vxor.u32 %v1508, 2147483648
        %v1513 = vmul.f32 %v1512, 1.442695
        %v1514 = vpow.pop %v1513
        %v1515 = vadd.f32 %v1514, 1.0
        %v1516 = vrcp.pop %v1515
        %v1517 = vmul.f32 1.0, %v1516
        %v1518 = vxor.u32 %v1509, 2147483648
        %v1519 = vmul.f32 %v1518, 1.442695
        %v1520 = vpow.pop %v1519
        %v1521 = vadd.f32 %v1520, 1.0
        %v1522 = vrcp.pop %v1521
        %v1523 = vmul.f32 1.0, %v1522
        %v1524 = vtanh.pop %v1510
        %v1525 = vxor.u32 %v1511, 2147483648
        %v1526 = vmul.f32 %v1525, 1.442695
        %v1527 = vpow.pop %v1526
        %v1528 = vadd.f32 %v1527, 1.0
        %v1529 = vrcp.pop %v1528
        %v1530 = vmul.f32 1.0, %v1529
        %v1531 = vmul.f32 %v1523, %v1227
        %v1532 = vmul.f32 %v1517, %v1524
        %v1533 = vadd.f32 %v1531, %v1532
        %v1534 = vtanh.pop %v1533
        %v1535 = vmul.f32 %v1530, %v1534
        %s1536 = sadd.s32 %s574, 3
        %p1537 = scmp.lt.s32.totalorder %s1536, 10
        %s1538 = scalar_select %p1537, 1, 0
        %v1539 = vstv %s1538
        %vm1540 = vcmp.eq.s32.totalorder %v1539, 1
        %v1541 = vsel %vm1540, %v1533, %v1227
        %v1542 = vsel %vm1540, %v1535, %v1226
        %1543 = vst [vmem:[#allocation10] sm:$0xff] %v1541
        %1544 = vst [vmem:[#allocation8] sm:$0xff] %v1542
        %s1545 = scalar_lea.vmem %s251, 24 [#allocation7]
        %1546 = vst [vmem:[%s1545] sm:$0xff] %v1542
        %s1547 = sand.u32 %s95, 1
        %s1548 = scalar_lea.sflag [#allocation4], %s1547
        %s1549 = sand.u32 %s95, 1
        %s1550 = smul.addr %s1549, 32
        %s1551 = scalar_lea.vmem [#allocation7], %s1550
        // Predicated region
        $region41: #{tpu_custom_call.1} parent=27 // pred_check
          %p1552 = pneg %p105
        $region42: #{tpu_custom_call.1} parent=27 // pred_check_branch
          %1554 = sbr.rel (%p1552) target = $region44
        $region43: #{tpu_custom_call.1} parent=27 // pred_region
          %s1555 = smul.u32 4, %s29
          %s1557 = ssub.s32 512, 512
          %1558 = vsyncadd %s1548, %s1557
          %s1559 = sadd.s32 %s28, %s1555
          %s1560 = smul.addr %s1559, 128
          %s1561 = scalar_lea.hbm %s2, %s1560
          %s1562 = sshll.u32 %s1551, 4
          %s1563 = int_to_ptr.vmem [resolvable:$true] %s1562
          %1568 = dma.vmem_to_hbm [thread:$0]  %s1563, 512, %s1561, %s1548, 128, 128, 8
        $region44: #{tpu_custom_call.1} parent=27 // pred_fallthru
          _
        // Predicated region
        $region45: #{tpu_custom_call.1} parent=27 // pred_check
          %p1569 = pneg %p131
        $region46: #{tpu_custom_call.1} parent=27 // pred_check_branch
          %1571 = sbr.rel (%p1569) target = $region48
        $region47: #{tpu_custom_call.1} parent=27 // pred_region
          %s1573 = ssub.s32 128, 128
          %1574 = vsyncadd [#allocation9], %s1573
          %s1575 = smul.addr %s28, 128
          %s1576 = scalar_lea.hbm %s3, %s1575
          %s1578 = sshll.u32 [#allocation8], 4
          %s1579 = int_to_ptr.vmem [resolvable:$true] %s1578
          %1581 = dma.vmem_to_hbm [thread:$0]  %s1579, 128, %s1576, [#allocation9]
        $region48: #{tpu_custom_call.1} parent=27 // pred_fallthru
          _
        // Predicated region
        $region49: #{tpu_custom_call.1} parent=27 // pred_check
          %p1582 = pneg %p157
        $region50: #{tpu_custom_call.1} parent=27 // pred_check_branch
          %1584 = sbr.rel (%p1582) target = $region52
        $region51: #{tpu_custom_call.1} parent=27 // pred_region
          %s1586 = ssub.s32 128, 128
          %1587 = vsyncadd [#allocation9], %s1586
          %s1588 = smul.addr %s28, 128
          %s1589 = scalar_lea.hbm %s4, %s1588
          %s1591 = sshll.u32 [#allocation10], 4
          %s1592 = int_to_ptr.vmem [resolvable:$true] %s1591
          %1594 = dma.vmem_to_hbm [thread:$0]  %s1592, 128, %s1589, [#allocation9]
        $region52: #{tpu_custom_call.1} parent=27 // pred_fallthru
          _
        // Predicated region
        $region53: #{tpu_custom_call.1} parent=27 // pred_check
          %p1595 = pneg %p131
        $region54: #{tpu_custom_call.1} parent=27 // pred_check_branch
          %1597 = sbr.rel (%p1595) target = $region56
        $region55: #{tpu_custom_call.1} parent=27 // pred_region
          %1598 = dma.done [#allocation9], 128
        $region56: #{tpu_custom_call.1} parent=27 // pred_fallthru
          _
        // Predicated region
        $region57: #{tpu_custom_call.1} parent=27 // pred_check
          %p1599 = pneg %p157
        $region58: #{tpu_custom_call.1} parent=27 // pred_check_branch
          %1601 = sbr.rel (%p1599) target = $region60
        $region59: #{tpu_custom_call.1} parent=27 // pred_region
          %1602 = dma.done [#allocation9], 128
        $region60: #{tpu_custom_call.1} parent=27 // pred_fallthru
          _
      $region28: #{tpu_custom_call.1} parent=5 // pred_fallthru
        _
      %p1603 = scmp.le.s32.totalorder 2, %s19
      // Predicated region
      $region61: #{tpu_custom_call.1} parent=5 // pred_check
        %p1604 = pneg %p1603
      $region62: #{tpu_custom_call.1} parent=5 // pred_check_branch
        %1606 = sbr.rel (%p1604) target = $region64
      $region63: #{tpu_custom_call.1} parent=5 // pred_region
        %s1607 = ssub.s32 %s19, 2
        // Predicated region
        $region65: #{tpu_custom_call.1} parent=63 // pred_check
          %p1608 = pneg %p111
        $region66: #{tpu_custom_call.1} parent=63 // pred_check_branch
          %1610 = sbr.rel (%p1608) target = $region68
        $region67: #{tpu_custom_call.1} parent=63 // pred_region
          %s1611 = sand.u32 %s96, 1
          %s1612 = scalar_lea.sflag [#allocation4], %s1611
          %s1613 = sand.u32 %s96, 1
          %s1614 = smul.addr %s1613, 32
          %s1615 = scalar_lea.vmem [#allocation7], %s1614
          %1616 = dma.done %s1612, 512
        $region68: #{tpu_custom_call.1} parent=63 // pred_fallthru
          _
      $region64: #{tpu_custom_call.1} parent=5 // pred_fallthru
        _
    $region6: #{tpu_custom_call.1} parent=1 // loop_footer
      %s23 = sadd.s32 1, %s19
    $region7: #{tpu_custom_call.1} parent=1 // loop_footer_branch
      %18 = sbr.rel target = $region3
    $region8: #{tpu_custom_call.1} parent=1 // loop_exit
      _
    %1617 = vsyncpa [#allocation3], 1
    %s1618 = scalar_lea.sflag [#allocation3], 1
    %1619 = vsyncpa %s1618, 1
    %1620 = vsyncpa [#allocation6], 1
    %1621 = vsyncpa [#allocation4], 1
    %s1622 = scalar_lea.sflag [#allocation4], 1
    %1623 = vsyncpa %s1622, 1
    %1624 = vsyncpa [#allocation9], 1

</llo_original>
